<compile_context>
chip_gen: v6e
topology: v6e:2x2x1
jax: 0.10.0
libtpu: 0.0.40
codegen_flags: <defaults>
</compile_context>

<pallas_src>
import functools

import jax
import jax.numpy as jnp
from jax.experimental import pallas as pl
from jax.experimental.pallas import tpu as pltpu

LANES = 128


# ----------------------------- Pallas kernel ------------------------------- #

def _svd_block_kernel(x_ref, w1_ref, b1_ref, w2_ref, b2_ref, o_ref, y_ref, *, C, T, NG):
    """Fused conv1+bn1+relu -> conv2+bn2+residual+relu for G images.

    x_ref : (G, H+2, Wp, Cp)   zero-haloed, sublane/lane padded input tile (VMEM)
    w1/w2 : (NG*128, Cp)       packed-K weight slabs, BN scale folded into columns
    b1/b2 : (1, Cp)            folded BN biases (f32)
    o_ref : (G, H, W, Cp)      output tile
    y_ref : (G, H+2, Wp, Cp)   VMEM scratch for the intermediate activation (haloed)
    """
    G, H, W, Cp = o_ref.shape
    Wp = x_ref.shape[2]
    M = G * H * W
    cdt = y_ref.dtype

    # Zero only the y halo strips (~4 KB of stores); the interior is fully rewritten
    # below, so no cross-step scratch state is required (megacore-safe).
    y_ref[:, 0:1, :, :] = jnp.zeros((G, 1, Wp, Cp), cdt)
    y_ref[:, H + 1:H + 2, :, :] = jnp.zeros((G, 1, Wp, Cp), cdt)
    y_ref[:, 1:H + 1, 0:1, :] = jnp.zeros((G, H, 1, Cp), cdt)
    y_ref[:, 1:H + 1, W + 1:Wp, :] = jnp.zeros((G, H, Wp - W - 1, Cp), cdt)

    def conv(src_ref, w_ref):
        # Materialize the 3 kw-shifted views once each; the kh shift is a free
        # leading-dim slice, so all 9 taps come from these 3 views.
        shifted = [src_ref[:, :, kw:kw + W, :] for kw in range(3)]
        groups = []
        for gi in range(NG):
            lo, hi = gi * T, min(gi * T + T, 9)
            grp = None
            for t in range(lo, hi):
                kh, kw = divmod(t, 3)
                tap = shifted[kw][:, kh:kh + H].reshape(M, Cp)
                p = t - lo
                if p:
                    # Pack tap t at lane offset p*C of this 128-lane K group (XLU roll;
                    # nonzero lanes are disjoint so the adds below are exact).
                    tap = pltpu.roll(tap, shift=p * C, axis=1)
                grp = tap if grp is None else grp + tap
            groups.append(grp)
        lhs = groups[0] if NG == 1 else jnp.concatenate(groups, axis=1)
        # ONE MXU matmul per conv, K = NG*128; accumulation over K stays in the MXU.
        return jnp.dot(lhs, w_ref[...], preferred_element_type=jnp.float32)

    # ---- conv1 + bn1 + relu (BN scale folded into w1; bias-only epilogue) ----
    y = jnp.maximum(conv(x_ref, w1_ref) + b1_ref[...], 0.0)
    y_ref[:, 1:H + 1, 1:W + 1, :] = y.reshape(G, H, W, Cp).astype(cdt)

    # ---- conv2 + bn2 + residual + relu (residual reuses the resident x tile) ----
    res = x_ref[:, 1:H + 1, 1:W + 1, :].reshape(M, Cp).astype(jnp.float32)
    out = jnp.maximum(conv(y_ref, w2_ref) + b2_ref[...] + res, 0.0)
    o_ref[...] = out.reshape(G, H, W, Cp).astype(o_ref.dtype)


# ------------------------------- JAX glue ---------------------------------- #

def _fold_bn(gamma, beta, mean, var, eps):
    s = gamma / jnp.sqrt(var + eps)
    return s, beta - mean * s


def _pack_weight(w_oihw, scale, C, P, Cp, T, NG, dtype):
    # OIHW -> (kh, kw, ci, co) -> (9, C, P); fold the BN scale into the output columns;
    # scatter tap t = kh*3+kw into K rows [(t//T)*128 + (t%T)*C, ... + C).
    taps = jnp.transpose(w_oihw, (2, 3, 1, 0)).reshape(9, C, P)
    taps = taps.astype(jnp.float32) * scale.reshape(1, 1, P)
    slab = jnp.zeros((NG, LANES, Cp), jnp.float32)
    for t in range(9):
        gi, p = divmod(t, T)
        slab = slab.at[gi, p * C:(p + 1) * C, :P].set(taps[t])
    return slab.reshape(NG * LANES, Cp).astype(dtype)


def _pick_images_per_step(N, H, W, Wp, Cp, itemsize, budget=8 * 1024 * 1024):
    # Rough per-image VMEM footprint: double-buffered x/out blocks, the persistent y
    # scratch and headroom for the streamed matmul temporaries.
    per_img = ((H + 2) * Wp * Cp * itemsize * 3
               + H * W * Cp * 4 * 2
               + H * W * Cp * (4 * 4 + itemsize * 4))
    best = 1
    for g in range(1, N + 1):
        if N % g == 0 and per_img * g <= budget:
            best = g
    return best


def svd_basic_block_forward(x_nchw, w1_oihw, w2_oihw, bn1, bn2, eps=1e-5,
                            compute_dtype=jnp.bfloat16, images_per_step=None,
                            return_nhwc_padded=False):
    """bn = (gamma, beta, running_mean, running_var); eval-mode BatchNorm.

    compute_dtype=bfloat16 (default) halves HBM/DMA bytes and is MXU-native on v6e/v7x;
    pass jnp.float32 for maximum parity with the PyTorch reference (f32 accumulation is
    used in both cases).  Note: in the bf16 path the skip connection is added from the
    bf16-resident x tile (small known divergence vs. PyTorch's f32 add).
    """
    N, C, H, W = x_nchw.shape
    P = w1_oihw.shape[0]
    assert P == C, "stride=1 / downsample=None requires inplanes == planes"
    assert w2_oihw.shape == (P, P, 3, 3)
    assert C <= LANES, "channel counts > 128 not supported by this kernel"
    # TODO(synk): planes > 128 would need a K-tiled (multi-step) contraction.

    Cp = LANES
    T = LANES // C if LANES % C == 0 else 1      # taps packed per 128-lane K group
    NG = -(-9 // T)                              # number of 128-lane K groups
    K9p = NG * LANES                             # packed im2col K
    Wp = ((W + 2 + 7) // 8) * 8                  # sublane-pad the haloed width

    s1, b1 = _fold_bn(*bn1, eps)
    s2, b2 = _fold_bn(*bn2, eps)
    w1_slab = _pack_weight(w1_oihw, s1, C, P, Cp, T, NG, compute_dtype)
    w2_slab = _pack_weight(w2_oihw, s2, P, P, Cp, T, NG, compute_dtype)
    b1_pad = jnp.pad(b1, (0, Cp - P)).reshape(1, Cp).astype(jnp.float32)
    b2_pad = jnp.pad(b2, (0, Cp - P)).reshape(1, Cp).astype(jnp.float32)

    # NCHW -> NHWC, add the 3x3/pad=1 halo, sublane-pad W+2 -> Wp, lane-pad C -> 128.
    x_nhwc = jnp.transpose(x_nchw, (0, 2, 3, 1))
    x_pad = jnp.pad(x_nhwc, ((0, 0), (1, 1), (1, Wp - W - 1), (0, Cp - C)))
    x_pad = x_pad.astype(compute_dtype)

    itemsize = jnp.dtype(compute_dtype).itemsize
    G = images_per_step or _pick_images_per_step(N, H, W, Wp, Cp, itemsize)
    assert N % G == 0, "images_per_step must divide the batch size"

    flops = 4 * N * H * W * 9 * C * P                      # 2 convs x 2 flops/MAC
    bytes_accessed = (x_pad.size * itemsize + N * H * W * Cp * 4
                      + 2 * K9p * Cp * itemsize + 2 * Cp * 4)

    kernel = functools.partial(_svd_block_kernel, C=C, T=T, NG=NG)

    out = pl.pallas_call(
        kernel,
        out_shape=jax.ShapeDtypeStruct((N, H, W, Cp), x_nchw.dtype),
        grid_spec=pltpu.PrefetchScalarGridSpec(
            num_scalar_prefetch=0,
            grid=(N // G,),                      # G images folded into M per step
            in_specs=[
                pl.BlockSpec((G, H + 2, Wp, Cp), lambda i: (i, 0, 0, 0)),
                pl.BlockSpec((K9p, Cp), lambda i: (0, 0)),
                pl.BlockSpec((1, Cp), lambda i: (0, 0)),
                pl.BlockSpec((K9p, Cp), lambda i: (0, 0)),
                pl.BlockSpec((1, Cp), lambda i: (0, 0)),
            ],
            out_specs=pl.BlockSpec((G, H, W, Cp), lambda i: (i, 0, 0, 0)),
            scratch_shapes=[pltpu.VMEM((G, H + 2, Wp, Cp), compute_dtype)],
        ),
        compiler_params=pltpu.CompilerParams(
            dimension_semantics=("parallel",)),
        cost_estimate=pl.CostEstimate(flops=flops, transcendentals=0,
                                      bytes_accessed=bytes_accessed),
    )(x_pad, w1_slab, b1_pad, w2_slab, b2_pad)

    if return_nhwc_padded:
        return out                                # NHWC, 128-lane padded (for chaining)
    return jnp.transpose(out[..., :P], (0, 3, 1, 2))   # back to NCHW for the reference


# ------------------------------ Reference ---------------------------------- #

def _reference_forward(x, w1, w2, bn1, bn2, eps=1e-5):
    def conv(a, w):
        return jax.lax.conv_general_dilated(
            a, w, (1, 1), ((1, 1), (1, 1)),
            dimension_numbers=("NCHW", "OIHW", "NCHW"),
            precision=jax.lax.Precision.HIGHEST)

    def bn(a, g, b, m, v):
        sh = (1, -1, 1, 1)
        return (a - m.reshape(sh)) / jnp.sqrt(v.reshape(sh) + eps) * g.reshape(sh) + b.reshape(sh)

    out = jax.nn.relu(bn(conv(x, w1), *bn1))
    out = bn(conv(out, w2), *bn2)
    return jax.nn.relu(out + x)


# --------------------------------- Main ------------------------------------ #

if __name__ == "__main__":
    key = jax.random.PRNGKey(0)

    def make_svd_conv_weight(k, cout, cin, scale):
        # SVDConv2d: dense weight reconstructed from U @ diag(S) @ V^T.
        ku, ks, kv = jax.random.split(k, 3)
        r = min(cout, cin * 9)
        U = jax.random.normal(ku, (cout, r), jnp.float32) * scale
        S = jax.random.uniform(ks, (r,), jnp.float32, minval=0.5, maxval=1.5)
        Vt = jax.random.normal(kv, (r, cin * 9), jnp.float32) * scale
        return (U @ jnp.diag(S) @ Vt).reshape(cout, cin, 3, 3)

    def make_bn(k, planes):
        kg, kb, km, kv = jax.random.split(k, 4)
        g = jax.random.uniform(kg, (planes,), jnp.float32, minval=0.5, maxval=1.5)
        b = jax.random.normal(kb, (planes,), jnp.float32) * 0.1
        m = jax.random.normal(km, (planes,), jnp.float32) * 0.1
        v = jax.random.uniform(kv, (planes,), jnp.float32, minval=0.5, maxval=1.5)
        return (g, b, m, v)

    def make_case(k, N, C, H, W, wscale):
        ks = jax.random.split(k, 5)
        w1 = make_svd_conv_weight(ks[0], C, C, wscale)
        w2 = make_svd_conv_weight(ks[1], C, C, wscale)
        bn1 = make_bn(ks[2], C)
        bn2 = make_bn(ks[3], C)
        x = jax.random.normal(ks[4], (N, C, H, W), jnp.float32)
        return x, w1, w2, bn1, bn2, _reference_forward(x, w1, w2, bn1, bn2)

    keys = jax.random.split(key, 2)

    # Case 1: small nominal shape (N=2, C=4, 16x16) — exact-ish f32 path + bf16 path.
    x, w1, w2, bn1, bn2, ref = make_case(keys[0], 2, 4, 16, 16, 0.3)
    out_f32 = jax.block_until_ready(
        svd_basic_block_forward(x, w1, w2, bn1, bn2, compute_dtype=jnp.float32))
    assert out_f32.shape == ref.shape == (2, 4, 16, 16)
    err = float(jnp.max(jnp.abs(out_f32 - ref)))
    assert jnp.allclose(out_f32, ref, atol=1e-2, rtol=1e-2), "f32 max abs err %g" % err

    out_bf16 = jax.block_until_ready(
        svd_basic_block_forward(x, w1, w2, bn1, bn2))        # default bf16 operands
    err = float(jnp.max(jnp.abs(out_bf16 - ref)))
    assert jnp.allclose(out_bf16, ref, atol=3e-1, rtol=1e-1), "bf16 max abs err %g" % err

    # Case 2: realistic CIFAR width (C=64, 8x8) — exercises the multi-group (NG>1)
    # packed-K path and the lane-roll packing with C=64 offsets.
    x, w1, w2, bn1, bn2, ref = make_case(keys[1], 2, 64, 8, 8, 0.08)
    out2 = jax.block_until_ready(
        svd_basic_block_forward(x, w1, w2, bn1, bn2, compute_dtype=jnp.float32))
    assert out2.shape == ref.shape == (2, 64, 8, 8)
    err = float(jnp.max(jnp.abs(out2 - ref)))
    assert jnp.allclose(out2, ref, atol=5e-2, rtol=2e-2), "C=64 max abs err %g" % err

    print("KERNEL_OK")
</pallas_src>

<mosaic_0001>
module attributes {stable_mosaic.version = 11 : i64} {
  func.func @_svd_block_kernel(%arg0: i32, %arg1: memref<2x18x24x128xf32, #tpu.memory_space<vmem>>, %arg2: memref<128x128xf32, #tpu.memory_space<vmem>>, %arg3: memref<1x128xf32, #tpu.memory_space<vmem>>, %arg4: memref<128x128xf32, #tpu.memory_space<vmem>>, %arg5: memref<1x128xf32, #tpu.memory_space<vmem>>, %arg6: memref<2x16x16x128xf32, #tpu.memory_space<vmem>>, %arg7: memref<2x18x24x128xf32, #tpu.memory_space<vmem>>) attributes {dimension_semantics = [#tpu.dimension_semantics<parallel>], iteration_bounds = array<i64: 1>, scalar_prefetch = 0 : i64, scratch_operands = 1 : i64, tpu.core_type = #tpu.core_type<tc>, window_params = [{transform_indices = @transform_0, window_bounds = array<i64: 2, 18, 24, 128>}, {pipeline_mode = #tpu.pipeline_mode<synchronous>, transform_indices = @transform_1, window_bounds = array<i64: 128, 128>}, {pipeline_mode = #tpu.pipeline_mode<synchronous>, transform_indices = @transform_2, window_bounds = array<i64: 1, 128>}, {pipeline_mode = #tpu.pipeline_mode<synchronous>, transform_indices = @transform_3, window_bounds = array<i64: 128, 128>}, {pipeline_mode = #tpu.pipeline_mode<synchronous>, transform_indices = @transform_4, window_bounds = array<i64: 1, 128>}, {transform_indices = @transform_5, window_bounds = array<i64: 2, 16, 16, 128>}]} {
    %cst = arith.constant 0.000000e+00 : f32
    %0 = vector.broadcast %cst : f32 to vector<2x1x24x128xf32>
    %c0 = arith.constant 0 : index
    %c0_0 = arith.constant 0 : index
    %c0_1 = arith.constant 0 : index
    %c0_2 = arith.constant 0 : index
    %1 = vector.load %arg7[%c0, %c0_0, %c0_1, %c0_2] : memref<2x18x24x128xf32, #tpu.memory_space<vmem>>, vector<2x1x24x128xf32>
    tpu.vector_store %arg7[%c0, %c0_0, %c0_1, %c0_2], %0 {strides = array<i32>} : memref<2x18x24x128xf32, #tpu.memory_space<vmem>>, vector<2x1x24x128xf32>,
    %cst_3 = arith.constant 0.000000e+00 : f32
    %2 = vector.broadcast %cst_3 : f32 to vector<2x1x24x128xf32>
    %c0_4 = arith.constant 0 : index
    %c17 = arith.constant 17 : index
    %c0_5 = arith.constant 0 : index
    %c0_6 = arith.constant 0 : index
    %3 = vector.load %arg7[%c0_4, %c17, %c0_5, %c0_6] : memref<2x18x24x128xf32, #tpu.memory_space<vmem>>, vector<2x1x24x128xf32>
    tpu.vector_store %arg7[%c0_4, %c17, %c0_5, %c0_6], %2 {strides = array<i32>} : memref<2x18x24x128xf32, #tpu.memory_space<vmem>>, vector<2x1x24x128xf32>,
    %cst_7 = arith.constant 0.000000e+00 : f32
    %4 = vector.broadcast %cst_7 : f32 to vector<2x16x1x128xf32>
    %c0_8 = arith.constant 0 : index
    %c1 = arith.constant 1 : index
    %c0_9 = arith.constant 0 : index
    %c0_10 = arith.constant 0 : index
    %5 = vector.load %arg7[%c0_8, %c1, %c0_9, %c0_10] : memref<2x18x24x128xf32, #tpu.memory_space<vmem>>, vector<2x16x1x128xf32>
    tpu.vector_store %arg7[%c0_8, %c1, %c0_9, %c0_10], %4 {strides = array<i32>} : memref<2x18x24x128xf32, #tpu.memory_space<vmem>>, vector<2x16x1x128xf32>,
    %cst_11 = arith.constant 0.000000e+00 : f32
    %6 = vector.broadcast %cst_11 : f32 to vector<2x16x7x128xf32>
    %c0_12 = arith.constant 0 : index
    %c1_13 = arith.constant 1 : index
    %c17_14 = arith.constant 17 : index
    %c0_15 = arith.constant 0 : index
    %7 = vector.load %arg7[%c0_12, %c1_13, %c17_14, %c0_15] : memref<2x18x24x128xf32, #tpu.memory_space<vmem>>, vector<2x16x7x128xf32>
    tpu.vector_store %arg7[%c0_12, %c1_13, %c17_14, %c0_15], %6 {strides = array<i32>} : memref<2x18x24x128xf32, #tpu.memory_space<vmem>>, vector<2x16x7x128xf32>,
    %c0_16 = arith.constant 0 : index
    %c0_17 = arith.constant 0 : index
    %c0_18 = arith.constant 0 : index
    %c0_19 = arith.constant 0 : index
    %8 = vector.load %arg1[%c0_16, %c0_17, %c0_18, %c0_19] : memref<2x18x24x128xf32, #tpu.memory_space<vmem>>, vector<2x18x16x128xf32>
    %c0_20 = arith.constant 0 : index
    %c0_21 = arith.constant 0 : index
    %c1_22 = arith.constant 1 : index
    %c0_23 = arith.constant 0 : index
    %9 = vector.load %arg1[%c0_20, %c0_21, %c1_22, %c0_23] : memref<2x18x24x128xf32, #tpu.memory_space<vmem>>, vector<2x18x16x128xf32>
    %c0_24 = arith.constant 0 : index
    %c0_25 = arith.constant 0 : index
    %c2 = arith.constant 2 : index
    %c0_26 = arith.constant 0 : index
    %10 = vector.load %arg1[%c0_24, %c0_25, %c2, %c0_26] : memref<2x18x24x128xf32, #tpu.memory_space<vmem>>, vector<2x18x16x128xf32>
    %11 = vector.extract_strided_slice %8 {offsets = [0, 0, 0, 0], sizes = [2, 16, 16, 128], strides = [1, 1, 1, 1]} : vector<2x18x16x128xf32> to vector<2x16x16x128xf32>
    %12 = vector.shape_cast %11 : vector<2x16x16x128xf32> to vector<512x128xf32>
    %13 = vector.extract_strided_slice %9 {offsets = [0, 0, 0, 0], sizes = [2, 16, 16, 128], strides = [1, 1, 1, 1]} : vector<2x18x16x128xf32> to vector<2x16x16x128xf32>
    %14 = vector.shape_cast %13 : vector<2x16x16x128xf32> to vector<512x128xf32>
    %c4_i32 = arith.constant 4 : i32
    %15 = tpu.dynamic_rotate %14 by %c4_i32 dim 1 : vector<512x128xf32>, i32 -> vector<512x128xf32>
    %16 = arith.addf %12, %15 : vector<512x128xf32>
    %17 = vector.extract_strided_slice %10 {offsets = [0, 0, 0, 0], sizes = [2, 16, 16, 128], strides = [1, 1, 1, 1]} : vector<2x18x16x128xf32> to vector<2x16x16x128xf32>
    %18 = vector.shape_cast %17 : vector<2x16x16x128xf32> to vector<512x128xf32>
    %c8_i32 = arith.constant 8 : i32
    %19 = tpu.dynamic_rotate %18 by %c8_i32 dim 1 : vector<512x128xf32>, i32 -> vector<512x128xf32>
    %20 = arith.addf %16, %19 : vector<512x128xf32>
    %21 = vector.extract_strided_slice %8 {offsets = [0, 1, 0, 0], sizes = [2, 16, 16, 128], strides = [1, 1, 1, 1]} : vector<2x18x16x128xf32> to vector<2x16x16x128xf32>
    %22 = vector.shape_cast %21 : vector<2x16x16x128xf32> to vector<512x128xf32>
    %c12_i32 = arith.constant 12 : i32
    %23 = tpu.dynamic_rotate %22 by %c12_i32 dim 1 : vector<512x128xf32>, i32 -> vector<512x128xf32>
    %24 = arith.addf %20, %23 : vector<512x128xf32>
    %25 = vector.extract_strided_slice %9 {offsets = [0, 1, 0, 0], sizes = [2, 16, 16, 128], strides = [1, 1, 1, 1]} : vector<2x18x16x128xf32> to vector<2x16x16x128xf32>
    %26 = vector.shape_cast %25 : vector<2x16x16x128xf32> to vector<512x128xf32>
    %c16_i32 = arith.constant 16 : i32
    %27 = tpu.dynamic_rotate %26 by %c16_i32 dim 1 : vector<512x128xf32>, i32 -> vector<512x128xf32>
    %28 = arith.addf %24, %27 : vector<512x128xf32>
    %29 = vector.extract_strided_slice %10 {offsets = [0, 1, 0, 0], sizes = [2, 16, 16, 128], strides = [1, 1, 1, 1]} : vector<2x18x16x128xf32> to vector<2x16x16x128xf32>
    %30 = vector.shape_cast %29 : vector<2x16x16x128xf32> to vector<512x128xf32>
    %c20_i32 = arith.constant 20 : i32
    %31 = tpu.dynamic_rotate %30 by %c20_i32 dim 1 : vector<512x128xf32>, i32 -> vector<512x128xf32>
    %32 = arith.addf %28, %31 : vector<512x128xf32>
    %33 = vector.extract_strided_slice %8 {offsets = [0, 2, 0, 0], sizes = [2, 16, 16, 128], strides = [1, 1, 1, 1]} : vector<2x18x16x128xf32> to vector<2x16x16x128xf32>
    %34 = vector.shape_cast %33 : vector<2x16x16x128xf32> to vector<512x128xf32>
    %c24_i32 = arith.constant 24 : i32
    %35 = tpu.dynamic_rotate %34 by %c24_i32 dim 1 : vector<512x128xf32>, i32 -> vector<512x128xf32>
    %36 = arith.addf %32, %35 : vector<512x128xf32>
    %37 = vector.extract_strided_slice %9 {offsets = [0, 2, 0, 0], sizes = [2, 16, 16, 128], strides = [1, 1, 1, 1]} : vector<2x18x16x128xf32> to vector<2x16x16x128xf32>
    %38 = vector.shape_cast %37 : vector<2x16x16x128xf32> to vector<512x128xf32>
    %c28_i32 = arith.constant 28 : i32
    %39 = tpu.dynamic_rotate %38 by %c28_i32 dim 1 : vector<512x128xf32>, i32 -> vector<512x128xf32>
    %40 = arith.addf %36, %39 : vector<512x128xf32>
    %41 = vector.extract_strided_slice %10 {offsets = [0, 2, 0, 0], sizes = [2, 16, 16, 128], strides = [1, 1, 1, 1]} : vector<2x18x16x128xf32> to vector<2x16x16x128xf32>
    %42 = vector.shape_cast %41 : vector<2x16x16x128xf32> to vector<512x128xf32>
    %c32_i32 = arith.constant 32 : i32
    %43 = tpu.dynamic_rotate %42 by %c32_i32 dim 1 : vector<512x128xf32>, i32 -> vector<512x128xf32>
    %44 = arith.addf %40, %43 : vector<512x128xf32>
    %c0_27 = arith.constant 0 : index
    %c0_28 = arith.constant 0 : index
    %45 = vector.load %arg2[%c0_27, %c0_28] : memref<128x128xf32, #tpu.memory_space<vmem>>, vector<128x128xf32>
    %cst_29 = arith.constant dense<0.000000e+00> : vector<512x128xf32>
    %46 = tpu.matmul %44, %45, %cst_29 {dimension_numbers = #tpu.dot_dimension_numbers<[1], [0], [0], [1], [0, 0, 1, 1], [], []>} : vector<512x128xf32>, vector<128x128xf32>, vector<512x128xf32> -> vector<512x128xf32>
    %c0_30 = arith.constant 0 : index
    %c0_31 = arith.constant 0 : index
    %47 = vector.load %arg3[%c0_30, %c0_31] : memref<1x128xf32, #tpu.memory_space<vmem>>, vector<1x128xf32>
    %48 = vector.broadcast %47 : vector<1x128xf32> to vector<512x128xf32>
    %49 = arith.addf %46, %48 : vector<512x128xf32>
    %cst_32 = arith.constant 0.000000e+00 : f32
    %50 = vector.broadcast %cst_32 : f32 to vector<512x128xf32>
    %51 = arith.maximumf %49, %50 : vector<512x128xf32>
    %52 = vector.shape_cast %51 : vector<512x128xf32> to vector<2x16x16x128xf32>
    %c0_33 = arith.constant 0 : index
    %c1_34 = arith.constant 1 : index
    %c1_35 = arith.constant 1 : index
    %c0_36 = arith.constant 0 : index
    %53 = vector.load %arg7[%c0_33, %c1_34, %c1_35, %c0_36] : memref<2x18x24x128xf32, #tpu.memory_space<vmem>>, vector<2x16x16x128xf32>
    tpu.vector_store %arg7[%c0_33, %c1_34, %c1_35, %c0_36], %52 {strides = array<i32>} : memref<2x18x24x128xf32, #tpu.memory_space<vmem>>, vector<2x16x16x128xf32>,
    %c0_37 = arith.constant 0 : index
    %c1_38 = arith.constant 1 : index
    %c1_39 = arith.constant 1 : index
    %c0_40 = arith.constant 0 : index
    %54 = vector.load %arg1[%c0_37, %c1_38, %c1_39, %c0_40] : memref<2x18x24x128xf32, #tpu.memory_space<vmem>>, vector<2x16x16x128xf32>
    %55 = vector.shape_cast %54 : vector<2x16x16x128xf32> to vector<512x128xf32>
    %c0_41 = arith.constant 0 : index
    %c0_42 = arith.constant 0 : index
    %c0_43 = arith.constant 0 : index
    %c0_44 = arith.constant 0 : index
    %56 = vector.load %arg7[%c0_41, %c0_42, %c0_43, %c0_44] : memref<2x18x24x128xf32, #tpu.memory_space<vmem>>, vector<2x18x16x128xf32>
    %c0_45 = arith.constant 0 : index
    %c0_46 = arith.constant 0 : index
    %c1_47 = arith.constant 1 : index
    %c0_48 = arith.constant 0 : index
    %57 = vector.load %arg7[%c0_45, %c0_46, %c1_47, %c0_48] : memref<2x18x24x128xf32, #tpu.memory_space<vmem>>, vector<2x18x16x128xf32>
    %c0_49 = arith.constant 0 : index
    %c0_50 = arith.constant 0 : index
    %c2_51 = arith.constant 2 : index
    %c0_52 = arith.constant 0 : index
    %58 = vector.load %arg7[%c0_49, %c0_50, %c2_51, %c0_52] : memref<2x18x24x128xf32, #tpu.memory_space<vmem>>, vector<2x18x16x128xf32>
    %59 = vector.extract_strided_slice %56 {offsets = [0, 0, 0, 0], sizes = [2, 16, 16, 128], strides = [1, 1, 1, 1]} : vector<2x18x16x128xf32> to vector<2x16x16x128xf32>
    %60 = vector.shape_cast %59 : vector<2x16x16x128xf32> to vector<512x128xf32>
    %61 = vector.extract_strided_slice %57 {offsets = [0, 0, 0, 0], sizes = [2, 16, 16, 128], strides = [1, 1, 1, 1]} : vector<2x18x16x128xf32> to vector<2x16x16x128xf32>
    %62 = vector.shape_cast %61 : vector<2x16x16x128xf32> to vector<512x128xf32>
    %c4_i32_53 = arith.constant 4 : i32
    %63 = tpu.dynamic_rotate %62 by %c4_i32_53 dim 1 : vector<512x128xf32>, i32 -> vector<512x128xf32>
    %64 = arith.addf %60, %63 : vector<512x128xf32>
    %65 = vector.extract_strided_slice %58 {offsets = [0, 0, 0, 0], sizes = [2, 16, 16, 128], strides = [1, 1, 1, 1]} : vector<2x18x16x128xf32> to vector<2x16x16x128xf32>
    %66 = vector.shape_cast %65 : vector<2x16x16x128xf32> to vector<512x128xf32>
    %c8_i32_54 = arith.constant 8 : i32
    %67 = tpu.dynamic_rotate %66 by %c8_i32_54 dim 1 : vector<512x128xf32>, i32 -> vector<512x128xf32>
    %68 = arith.addf %64, %67 : vector<512x128xf32>
    %69 = vector.extract_strided_slice %56 {offsets = [0, 1, 0, 0], sizes = [2, 16, 16, 128], strides = [1, 1, 1, 1]} : vector<2x18x16x128xf32> to vector<2x16x16x128xf32>
    %70 = vector.shape_cast %69 : vector<2x16x16x128xf32> to vector<512x128xf32>
    %c12_i32_55 = arith.constant 12 : i32
    %71 = tpu.dynamic_rotate %70 by %c12_i32_55 dim 1 : vector<512x128xf32>, i32 -> vector<512x128xf32>
    %72 = arith.addf %68, %71 : vector<512x128xf32>
    %73 = vector.extract_strided_slice %57 {offsets = [0, 1, 0, 0], sizes = [2, 16, 16, 128], strides = [1, 1, 1, 1]} : vector<2x18x16x128xf32> to vector<2x16x16x128xf32>
    %74 = vector.shape_cast %73 : vector<2x16x16x128xf32> to vector<512x128xf32>
    %c16_i32_56 = arith.constant 16 : i32
    %75 = tpu.dynamic_rotate %74 by %c16_i32_56 dim 1 : vector<512x128xf32>, i32 -> vector<512x128xf32>
    %76 = arith.addf %72, %75 : vector<512x128xf32>
    %77 = vector.extract_strided_slice %58 {offsets = [0, 1, 0, 0], sizes = [2, 16, 16, 128], strides = [1, 1, 1, 1]} : vector<2x18x16x128xf32> to vector<2x16x16x128xf32>
    %78 = vector.shape_cast %77 : vector<2x16x16x128xf32> to vector<512x128xf32>
    %c20_i32_57 = arith.constant 20 : i32
    %79 = tpu.dynamic_rotate %78 by %c20_i32_57 dim 1 : vector<512x128xf32>, i32 -> vector<512x128xf32>
    %80 = arith.addf %76, %79 : vector<512x128xf32>
    %81 = vector.extract_strided_slice %56 {offsets = [0, 2, 0, 0], sizes = [2, 16, 16, 128], strides = [1, 1, 1, 1]} : vector<2x18x16x128xf32> to vector<2x16x16x128xf32>
    %82 = vector.shape_cast %81 : vector<2x16x16x128xf32> to vector<512x128xf32>
    %c24_i32_58 = arith.constant 24 : i32
    %83 = tpu.dynamic_rotate %82 by %c24_i32_58 dim 1 : vector<512x128xf32>, i32 -> vector<512x128xf32>
    %84 = arith.addf %80, %83 : vector<512x128xf32>
    %85 = vector.extract_strided_slice %57 {offsets = [0, 2, 0, 0], sizes = [2, 16, 16, 128], strides = [1, 1, 1, 1]} : vector<2x18x16x128xf32> to vector<2x16x16x128xf32>
    %86 = vector.shape_cast %85 : vector<2x16x16x128xf32> to vector<512x128xf32>
    %c28_i32_59 = arith.constant 28 : i32
    %87 = tpu.dynamic_rotate %86 by %c28_i32_59 dim 1 : vector<512x128xf32>, i32 -> vector<512x128xf32>
    %88 = arith.addf %84, %87 : vector<512x128xf32>
    %89 = vector.extract_strided_slice %58 {offsets = [0, 2, 0, 0], sizes = [2, 16, 16, 128], strides = [1, 1, 1, 1]} : vector<2x18x16x128xf32> to vector<2x16x16x128xf32>
    %90 = vector.shape_cast %89 : vector<2x16x16x128xf32> to vector<512x128xf32>
    %c32_i32_60 = arith.constant 32 : i32
    %91 = tpu.dynamic_rotate %90 by %c32_i32_60 dim 1 : vector<512x128xf32>, i32 -> vector<512x128xf32>
    %92 = arith.addf %88, %91 : vector<512x128xf32>
    %c0_61 = arith.constant 0 : index
    %c0_62 = arith.constant 0 : index
    %93 = vector.load %arg4[%c0_61, %c0_62] : memref<128x128xf32, #tpu.memory_space<vmem>>, vector<128x128xf32>
    %cst_63 = arith.constant dense<0.000000e+00> : vector<512x128xf32>
    %94 = tpu.matmul %92, %93, %cst_63 {dimension_numbers = #tpu.dot_dimension_numbers<[1], [0], [0], [1], [0, 0, 1, 1], [], []>} : vector<512x128xf32>, vector<128x128xf32>, vector<512x128xf32> -> vector<512x128xf32>
    %c0_64 = arith.constant 0 : index
    %c0_65 = arith.constant 0 : index
    %95 = vector.load %arg5[%c0_64, %c0_65] : memref<1x128xf32, #tpu.memory_space<vmem>>, vector<1x128xf32>
    %96 = vector.broadcast %95 : vector<1x128xf32> to vector<512x128xf32>
    %97 = arith.addf %94, %96 : vector<512x128xf32>
    %98 = arith.addf %97, %55 : vector<512x128xf32>
    %cst_66 = arith.constant 0.000000e+00 : f32
    %99 = vector.broadcast %cst_66 : f32 to vector<512x128xf32>
    %100 = arith.maximumf %98, %99 : vector<512x128xf32>
    %101 = vector.shape_cast %100 : vector<512x128xf32> to vector<2x16x16x128xf32>
    %c0_67 = arith.constant 0 : index
    %c0_68 = arith.constant 0 : index
    %c0_69 = arith.constant 0 : index
    %c0_70 = arith.constant 0 : index
    %102 = vector.load %arg6[%c0_67, %c0_68, %c0_69, %c0_70] : memref<2x16x16x128xf32, #tpu.memory_space<vmem>>, vector<2x16x16x128xf32>
    tpu.vector_store %arg6[%c0_67, %c0_68, %c0_69, %c0_70], %101 {strides = array<i32>} : memref<2x16x16x128xf32, #tpu.memory_space<vmem>>, vector<2x16x16x128xf32>,
    return
  }
  func.func @transform_0(%arg0: i32) -> (i32, i32, i32, i32) {
    %c0_i32 = arith.constant 0 : i32
    %c0_i32_0 = arith.constant 0 : i32
    %c0_i32_1 = arith.constant 0 : i32
    %c0_i32_2 = arith.constant 0 : i32
    return %arg0, %c0_i32, %c0_i32_0, %c0_i32_1 : i32, i32, i32, i32
  }
  func.func @transform_1(%arg0: i32) -> (i32, i32) {
    %c0_i32 = arith.constant 0 : i32
    %c0_i32_0 = arith.constant 0 : i32
    %c0_i32_1 = arith.constant 0 : i32
    return %c0_i32, %c0_i32_0 : i32, i32
  }
  func.func @transform_2(%arg0: i32) -> (i32, i32) {
    %c0_i32 = arith.constant 0 : i32
    %c0_i32_0 = arith.constant 0 : i32
    %c0_i32_1 = arith.constant 0 : i32
    return %c0_i32, %c0_i32_0 : i32, i32
  }
  func.func @transform_3(%arg0: i32) -> (i32, i32) {
    %c0_i32 = arith.constant 0 : i32
    %c0_i32_0 = arith.constant 0 : i32
    %c0_i32_1 = arith.constant 0 : i32
    return %c0_i32, %c0_i32_0 : i32, i32
  }
  func.func @transform_4(%arg0: i32) -> (i32, i32) {
    %c0_i32 = arith.constant 0 : i32
    %c0_i32_0 = arith.constant 0 : i32
    %c0_i32_1 = arith.constant 0 : i32
    return %c0_i32, %c0_i32_0 : i32, i32
  }
  func.func @transform_5(%arg0: i32) -> (i32, i32, i32, i32) {
    %c0_i32 = arith.constant 0 : i32
    %c0_i32_0 = arith.constant 0 : i32
    %c0_i32_1 = arith.constant 0 : i32
    %c0_i32_2 = arith.constant 0 : i32
    return %arg0, %c0_i32, %c0_i32_0, %c0_i32_1 : i32, i32, i32, i32
  }
}

</mosaic_0001>

<llo_original>
// kernel: tpu_custom_call.1
$region0: #{tpu_custom_call.1}
  #allocation0 [shape = 'u32[]', space=smem, size = 0x4, offset = 0x4, fixed_abs, tag = 'smem constant byte address 0x4 - core index']
  #allocation1 [shape = 'u32[144,128]{1,0:T(1,128)}', space=vmem, size = 0x12000, scoped, tag = 'internal scratch']
  #allocation2 [shape = 'f32[2,18,24,128]{3,2,1,0:T(8,128)}', space=vmem, size = 0x6c000, scoped, tag = 'scratch operand']
  %s0 = inlined_call_operand.hbm [shape: f32[2,18,24,128], index: 0, kind: input, shape index: {}]
  %s1 = inlined_call_operand.hbm [shape: f32[128,128], index: 1, kind: input, shape index: {}]
  %s2 = inlined_call_operand.vmem [shape: f32[1,128], index: 2, kind: input, shape index: {}]
  %s3 = inlined_call_operand.hbm [shape: f32[128,128], index: 3, kind: input, shape index: {}]
  %s4 = inlined_call_operand.vmem [shape: f32[1,128], index: 4, kind: input, shape index: {}]
  %s5 = inlined_call_operand.hbm [shape: f32[2,16,16,128], index: 5, kind: output, shape index: {}]
  %s6 = sld [smem:[#allocation0]]
  $region42: #{tpu_custom_call.1} parent=0
    _
  %s8 = ssub.s32 1, %s6
  %s9 = scalar_select 0, %s8, %s6
  $region1: #{tpu_custom_call.1} parent=0
    #allocation3 [shape = 'u8[442368]{0}', space=vmem, size = 0x6c000, scoped, tag = 'input window, operand 0, single buffered']
    #allocation4 [shape = 's32[1]{0}', space=sflag, size = 0x4, scoped, tag = 'scoped memory for tpu_custom_call.1']
    #allocation5 [shape = 's32[1]{0}', space=sflag, size = 0x4, scoped, tag = 'scoped memory for tpu_custom_call.1']
    #allocation6 [shape = 'u8[65536]{0}', space=vmem, size = 0x10000, scoped, tag = 'input window, operand 1, single buffered']
    #allocation7 [shape = 's32[1]{0}', space=sflag, size = 0x4, scoped, tag = 'scoped memory for tpu_custom_call.1']
    #allocation8 [shape = 'u8[65536]{0}', space=vmem, size = 0x10000, scoped, tag = 'input window, operand 3, single buffered']
    #allocation9 [shape = 'u8[262144]{0}', space=vmem, size = 0x40000, scoped, tag = 'output window, operand 0, single buffered']
    %10 = vsyncpa [#allocation4], 0
    %11 = vsyncpa [#allocation7], 0
    %12 = vsyncpa [#allocation5], 0
    // Predicated region
    $region2: #{tpu_custom_call.1} parent=1 // pred_check
      _
    $region3: #{tpu_custom_call.1} parent=1 // pred_check_branch
      %14 = sbr.rel (0) target = $region5
    $region4: #{tpu_custom_call.1} parent=1 // pred_region
      %s16 = ssub.s32 13824, 13824
      %17 = vsyncadd [#allocation4], %s16
      %s18 = sshll.u32 [#allocation3], 4
      %s19 = int_to_ptr.vmem [resolvable:$true] %s18
      %24 = dma.hbm_to_vmem [thread:$0]  %s0, 13824, %s19, [#allocation4], 128, 128, 8
    $region5: #{tpu_custom_call.1} parent=1 // pred_fallthru
      _
    // Predicated region
    $region6: #{tpu_custom_call.1} parent=1 // pred_check
      _
    $region7: #{tpu_custom_call.1} parent=1 // pred_check_branch
      %26 = sbr.rel (0) target = $region9
    $region8: #{tpu_custom_call.1} parent=1 // pred_region
      %s28 = ssub.s32 2048, 2048
      %29 = vsyncadd [#allocation7], %s28
      %s30 = sshll.u32 [#allocation6], 4
      %s31 = int_to_ptr.vmem [resolvable:$true] %s30
      %36 = dma.hbm_to_vmem [thread:$0]  %s1, 2048, %s31, [#allocation7], 128, 128, 8
    $region9: #{tpu_custom_call.1} parent=1 // pred_fallthru
      _
    // Predicated region
    $region10: #{tpu_custom_call.1} parent=1 // pred_check
      _
    $region11: #{tpu_custom_call.1} parent=1 // pred_check_branch
      %38 = sbr.rel (0) target = $region13
    $region12: #{tpu_custom_call.1} parent=1 // pred_region
      _
    $region13: #{tpu_custom_call.1} parent=1 // pred_fallthru
      _
    // Predicated region
    $region14: #{tpu_custom_call.1} parent=1 // pred_check
      _
    $region15: #{tpu_custom_call.1} parent=1 // pred_check_branch
      %40 = sbr.rel (0) target = $region17
    $region16: #{tpu_custom_call.1} parent=1 // pred_region
      %s42 = ssub.s32 2048, 2048
      %43 = vsyncadd [#allocation7], %s42
      %s44 = sshll.u32 [#allocation8], 4
      %s45 = int_to_ptr.vmem [resolvable:$true] %s44
      %50 = dma.hbm_to_vmem [thread:$0]  %s3, 2048, %s45, [#allocation7], 128, 128, 8
    $region17: #{tpu_custom_call.1} parent=1 // pred_fallthru
      _
    // Predicated region
    $region18: #{tpu_custom_call.1} parent=1 // pred_check
      _
    $region19: #{tpu_custom_call.1} parent=1 // pred_check_branch
      %52 = sbr.rel (0) target = $region21
    $region20: #{tpu_custom_call.1} parent=1 // pred_region
      _
    $region21: #{tpu_custom_call.1} parent=1 // pred_fallthru
      _
    // Predicated region
    $region22: #{tpu_custom_call.1} parent=1 // pred_check
      _
    $region23: #{tpu_custom_call.1} parent=1 // pred_check_branch
      %54 = sbr.rel (0) target = $region25
    $region24: #{tpu_custom_call.1} parent=1 // pred_region
      %55 = dma.done [#allocation4], 13824
    $region25: #{tpu_custom_call.1} parent=1 // pred_fallthru
      _
    // Predicated region
    $region26: #{tpu_custom_call.1} parent=1 // pred_check
      _
    $region27: #{tpu_custom_call.1} parent=1 // pred_check_branch
      %57 = sbr.rel (0) target = $region29
    $region28: #{tpu_custom_call.1} parent=1 // pred_region
      %58 = dma.done [#allocation7], 2048
    $region29: #{tpu_custom_call.1} parent=1 // pred_fallthru
      _
    // Predicated region
    $region30: #{tpu_custom_call.1} parent=1 // pred_check
      _
    $region31: #{tpu_custom_call.1} parent=1 // pred_check_branch
      %60 = sbr.rel (0) target = $region33
    $region32: #{tpu_custom_call.1} parent=1 // pred_region
      %61 = dma.done [#allocation7], 2048
    $region33: #{tpu_custom_call.1} parent=1 // pred_fallthru
      _
    %62 = vst [vmem:[#allocation2] sm:$0xff] 0.0
    %63 = vst [vmem:[#allocation2 + $0x8] sm:$0xff] 0.0
    %64 = vst [vmem:[#allocation2 + $0x10] sm:$0xff] 0.0
    %65 = vst [vmem:[#allocation2 + $0x1b0] sm:$0xff] 0.0
    %66 = vst [vmem:[#allocation2 + $0x1b8] sm:$0xff] 0.0
    %67 = vst [vmem:[#allocation2 + $0x1c0] sm:$0xff] 0.0
    %s68 = scalar_lea.vmem [#allocation2], 408
    %69 = vst [vmem:[%s68] sm:$0xff] 0.0
    %70 = vst [vmem:[%s68 + $0x8] sm:$0xff] 0.0
    %71 = vst [vmem:[%s68 + $0x10] sm:$0xff] 0.0
    %72 = vst [vmem:[%s68 + $0x1b0] sm:$0xff] 0.0
    %73 = vst [vmem:[%s68 + $0x1b8] sm:$0xff] 0.0
    %74 = vst [vmem:[%s68 + $0x1c0] sm:$0xff] 0.0
    %s75 = scalar_lea.vmem [#allocation2], 24
    %76 = vst [vmem:[%s75] sm:$0x1] 0.0
    %77 = vst [vmem:[%s75 + $0x18] sm:$0x1] 0.0
    %78 = vst [vmem:[%s75 + $0x30] sm:$0x1] 0.0
    %79 = vst [vmem:[%s75 + $0x48] sm:$0x1] 0.0
    %80 = vst [vmem:[%s75 + $0x60] sm:$0x1] 0.0
    %81 = vst [vmem:[%s75 + $0x78] sm:$0x1] 0.0
    %82 = vst [vmem:[%s75 + $0x90] sm:$0x1] 0.0
    %83 = vst [vmem:[%s75 + $0xa8] sm:$0x1] 0.0
    %84 = vst [vmem:[%s75 + $0xc0] sm:$0x1] 0.0
    %85 = vst [vmem:[%s75 + $0xd8] sm:$0x1] 0.0
    %86 = vst [vmem:[%s75 + $0xf0] sm:$0x1] 0.0
    %87 = vst [vmem:[%s75 + $0x108] sm:$0x1] 0.0
    %88 = vst [vmem:[%s75 + $0x120] sm:$0x1] 0.0
    %89 = vst [vmem:[%s75 + $0x138] sm:$0x1] 0.0
    %90 = vst [vmem:[%s75 + $0x150] sm:$0x1] 0.0
    %91 = vst [vmem:[%s75 + $0x168] sm:$0x1] 0.0
    %92 = vst [vmem:[%s75 + $0x1b0] sm:$0x1] 0.0
    %93 = vst [vmem:[%s75 + $0x1c8] sm:$0x1] 0.0
    %94 = vst [vmem:[%s75 + $0x1e0] sm:$0x1] 0.0
    %95 = vst [vmem:[%s75 + $0x1f8] sm:$0x1] 0.0
    %96 = vst [vmem:[%s75 + $0x210] sm:$0x1] 0.0
    %97 = vst [vmem:[%s75 + $0x228] sm:$0x1] 0.0
    %98 = vst [vmem:[%s75 + $0x240] sm:$0x1] 0.0
    %99 = vst [vmem:[%s75 + $0x258] sm:$0x1] 0.0
    %100 = vst [vmem:[%s75 + $0x270] sm:$0x1] 0.0
    %101 = vst [vmem:[%s75 + $0x288] sm:$0x1] 0.0
    %102 = vst [vmem:[%s75 + $0x2a0] sm:$0x1] 0.0
    %103 = vst [vmem:[%s75 + $0x2b8] sm:$0x1] 0.0
    %104 = vst [vmem:[%s75 + $0x2d0] sm:$0x1] 0.0
    %105 = vst [vmem:[%s75 + $0x2e8] sm:$0x1] 0.0
    %106 = vst [vmem:[%s75 + $0x300] sm:$0x1] 0.0
    %107 = vst [vmem:[%s75 + $0x318] sm:$0x1] 0.0
    %108 = vst [vmem:[%s75 + $0x11] sm:$0x7f] 0.0
    %109 = vst [vmem:[%s75 + $0x29] sm:$0x7f] 0.0
    %110 = vst [vmem:[%s75 + $0x41] sm:$0x7f] 0.0
    %111 = vst [vmem:[%s75 + $0x59] sm:$0x7f] 0.0
    %112 = vst [vmem:[%s75 + $0x71] sm:$0x7f] 0.0
    %113 = vst [vmem:[%s75 + $0x89] sm:$0x7f] 0.0
    %114 = vst [vmem:[%s75 + $0xa1] sm:$0x7f] 0.0
    %115 = vst [vmem:[%s75 + $0xb9] sm:$0x7f] 0.0
    %116 = vst [vmem:[%s75 + $0xd1] sm:$0x7f] 0.0
    %117 = vst [vmem:[%s75 + $0xe9] sm:$0x7f] 0.0
    %118 = vst [vmem:[%s75 + $0x101] sm:$0x7f] 0.0
    %119 = vst [vmem:[%s75 + $0x119] sm:$0x7f] 0.0
    %120 = vst [vmem:[%s75 + $0x131] sm:$0x7f] 0.0
    %121 = vst [vmem:[%s75 + $0x149] sm:$0x7f] 0.0
    %122 = vst [vmem:[%s75 + $0x161] sm:$0x7f] 0.0
    %123 = vst [vmem:[%s75 + $0x179] sm:$0x7f] 0.0
    %124 = vst [vmem:[%s75 + $0x1c1] sm:$0x7f] 0.0
    %125 = vst [vmem:[%s75 + $0x1d9] sm:$0x7f] 0.0
    %126 = vst [vmem:[%s75 + $0x1f1] sm:$0x7f] 0.0
    %127 = vst [vmem:[%s75 + $0x209] sm:$0x7f] 0.0
    %128 = vst [vmem:[%s75 + $0x221] sm:$0x7f] 0.0
    %129 = vst [vmem:[%s75 + $0x239] sm:$0x7f] 0.0
    %130 = vst [vmem:[%s75 + $0x251] sm:$0x7f] 0.0
    %131 = vst [vmem:[%s75 + $0x269] sm:$0x7f] 0.0
    %132 = vst [vmem:[%s75 + $0x281] sm:$0x7f] 0.0
    %133 = vst [vmem:[%s75 + $0x299] sm:$0x7f] 0.0
    %134 = vst [vmem:[%s75 + $0x2b1] sm:$0x7f] 0.0
    %135 = vst [vmem:[%s75 + $0x2c9] sm:$0x7f] 0.0
    %136 = vst [vmem:[%s75 + $0x2e1] sm:$0x7f] 0.0
    %137 = vst [vmem:[%s75 + $0x2f9] sm:$0x7f] 0.0
    %138 = vst [vmem:[%s75 + $0x311] sm:$0x7f] 0.0
    %139 = vst [vmem:[%s75 + $0x329] sm:$0x7f] 0.0
    %v140 = vld [vmem:[#allocation3] sm:$0xff]
    %v141 = vld [vmem:[#allocation3 + $0x8] sm:$0xff]
    %v142 = vld [vmem:[#allocation3 + $0x18] sm:$0xff]
    %v143 = vld [vmem:[#allocation3 + $0x20] sm:$0xff]
    %v144 = vld [vmem:[#allocation3 + $0x30] sm:$0xff]
    %v145 = vld [vmem:[#allocation3 + $0x38] sm:$0xff]
    %v146 = vld [vmem:[#allocation3 + $0x48] sm:$0xff]
    %v147 = vld [vmem:[#allocation3 + $0x50] sm:$0xff]
    %v148 = vld [vmem:[#allocation3 + $0x60] sm:$0xff]
    %v149 = vld [vmem:[#allocation3 + $0x68] sm:$0xff]
    %v150 = vld [vmem:[#allocation3 + $0x78] sm:$0xff]
    %v151 = vld [vmem:[#allocation3 + $0x80] sm:$0xff]
    %v152 = vld [vmem:[#allocation3 + $0x90] sm:$0xff]
    %v153 = vld [vmem:[#allocation3 + $0x98] sm:$0xff]
    %v154 = vld [vmem:[#allocation3 + $0xa8] sm:$0xff]
    %v155 = vld [vmem:[#allocation3 + $0xb0] sm:$0xff]
    %v156 = vld [vmem:[#allocation3 + $0xc0] sm:$0xff]
    %v157 = vld [vmem:[#allocation3 + $0xc8] sm:$0xff]
    %v158 = vld [vmem:[#allocation3 + $0xd8] sm:$0xff]
    %v159 = vld [vmem:[#allocation3 + $0xe0] sm:$0xff]
    %v160 = vld [vmem:[#allocation3 + $0xf0] sm:$0xff]
    %v161 = vld [vmem:[#allocation3 + $0xf8] sm:$0xff]
    %v162 = vld [vmem:[#allocation3 + $0x108] sm:$0xff]
    %v163 = vld [vmem:[#allocation3 + $0x110] sm:$0xff]
    %v164 = vld [vmem:[#allocation3 + $0x120] sm:$0xff]
    %v165 = vld [vmem:[#allocation3 + $0x128] sm:$0xff]
    %v166 = vld [vmem:[#allocation3 + $0x138] sm:$0xff]
    %v167 = vld [vmem:[#allocation3 + $0x140] sm:$0xff]
    %v168 = vld [vmem:[#allocation3 + $0x150] sm:$0xff]
    %v169 = vld [vmem:[#allocation3 + $0x158] sm:$0xff]
    %v170 = vld [vmem:[#allocation3 + $0x168] sm:$0xff]
    %v171 = vld [vmem:[#allocation3 + $0x170] sm:$0xff]
    %v172 = vld [vmem:[#allocation3 + $0x180] sm:$0xff]
    %v173 = vld [vmem:[#allocation3 + $0x188] sm:$0xff]
    %v174 = vld [vmem:[#allocation3 + $0x198] sm:$0xff]
    %v175 = vld [vmem:[#allocation3 + $0x1a0] sm:$0xff]
    %v176 = vld [vmem:[#allocation3 + $0x1b0] sm:$0xff]
    %v177 = vld [vmem:[#allocation3 + $0x1b8] sm:$0xff]
    %v178 = vld [vmem:[#allocation3 + $0x1c8] sm:$0xff]
    %v179 = vld [vmem:[#allocation3 + $0x1d0] sm:$0xff]
    %v180 = vld [vmem:[#allocation3 + $0x1e0] sm:$0xff]
    %v181 = vld [vmem:[#allocation3 + $0x1e8] sm:$0xff]
    %v182 = vld [vmem:[#allocation3 + $0x1f8] sm:$0xff]
    %v183 = vld [vmem:[#allocation3 + $0x200] sm:$0xff]
    %v184 = vld [vmem:[#allocation3 + $0x210] sm:$0xff]
    %v185 = vld [vmem:[#allocation3 + $0x218] sm:$0xff]
    %v186 = vld [vmem:[#allocation3 + $0x228] sm:$0xff]
    %v187 = vld [vmem:[#allocation3 + $0x230] sm:$0xff]
    %v188 = vld [vmem:[#allocation3 + $0x240] sm:$0xff]
    %v189 = vld [vmem:[#allocation3 + $0x248] sm:$0xff]
    %v190 = vld [vmem:[#allocation3 + $0x258] sm:$0xff]
    %v191 = vld [vmem:[#allocation3 + $0x260] sm:$0xff]
    %v192 = vld [vmem:[#allocation3 + $0x270] sm:$0xff]
    %v193 = vld [vmem:[#allocation3 + $0x278] sm:$0xff]
    %v194 = vld [vmem:[#allocation3 + $0x288] sm:$0xff]
    %v195 = vld [vmem:[#allocation3 + $0x290] sm:$0xff]
    %v196 = vld [vmem:[#allocation3 + $0x2a0] sm:$0xff]
    %v197 = vld [vmem:[#allocation3 + $0x2a8] sm:$0xff]
    %v198 = vld [vmem:[#allocation3 + $0x2b8] sm:$0xff]
    %v199 = vld [vmem:[#allocation3 + $0x2c0] sm:$0xff]
    %v200 = vld [vmem:[#allocation3 + $0x2d0] sm:$0xff]
    %v201 = vld [vmem:[#allocation3 + $0x2d8] sm:$0xff]
    %v202 = vld [vmem:[#allocation3 + $0x2e8] sm:$0xff]
    %v203 = vld [vmem:[#allocation3 + $0x2f0] sm:$0xff]
    %v204 = vld [vmem:[#allocation3 + $0x300] sm:$0xff]
    %v205 = vld [vmem:[#allocation3 + $0x308] sm:$0xff]
    %v206 = vld [vmem:[#allocation3 + $0x318] sm:$0xff]
    %v207 = vld [vmem:[#allocation3 + $0x320] sm:$0xff]
    %v208 = vld [vmem:[#allocation3 + $0x330] sm:$0xff]
    %v209 = vld [vmem:[#allocation3 + $0x338] sm:$0xff]
    %v210 = vld [vmem:[#allocation3 + $0x348] sm:$0xff]
    %v211 = vld [vmem:[#allocation3 + $0x350] sm:$0xff]
    %v212 = vld [vmem:[#allocation3 + $0x1] sm:$0xff]
    %v213 = vld [vmem:[#allocation3 + $0x9] sm:$0xff]
    %v214 = vld [vmem:[#allocation3 + $0x19] sm:$0xff]
    %v215 = vld [vmem:[#allocation3 + $0x21] sm:$0xff]
    %v216 = vld [vmem:[#allocation3 + $0x31] sm:$0xff]
    %v217 = vld [vmem:[#allocation3 + $0x39] sm:$0xff]
    %v218 = vld [vmem:[#allocation3 + $0x49] sm:$0xff]
    %v219 = vld [vmem:[#allocation3 + $0x51] sm:$0xff]
    %v220 = vld [vmem:[#allocation3 + $0x61] sm:$0xff]
    %v221 = vld [vmem:[#allocation3 + $0x69] sm:$0xff]
    %v222 = vld [vmem:[#allocation3 + $0x79] sm:$0xff]
    %v223 = vld [vmem:[#allocation3 + $0x81] sm:$0xff]
    %v224 = vld [vmem:[#allocation3 + $0x91] sm:$0xff]
    %v225 = vld [vmem:[#allocation3 + $0x99] sm:$0xff]
    %v226 = vld [vmem:[#allocation3 + $0xa9] sm:$0xff]
    %v227 = vld [vmem:[#allocation3 + $0xb1] sm:$0xff]
    %v228 = vld [vmem:[#allocation3 + $0xc1] sm:$0xff]
    %v229 = vld [vmem:[#allocation3 + $0xc9] sm:$0xff]
    %v230 = vld [vmem:[#allocation3 + $0xd9] sm:$0xff]
    %v231 = vld [vmem:[#allocation3 + $0xe1] sm:$0xff]
    %v232 = vld [vmem:[#allocation3 + $0xf1] sm:$0xff]
    %v233 = vld [vmem:[#allocation3 + $0xf9] sm:$0xff]
    %v234 = vld [vmem:[#allocation3 + $0x109] sm:$0xff]
    %v235 = vld [vmem:[#allocation3 + $0x111] sm:$0xff]
    %v236 = vld [vmem:[#allocation3 + $0x121] sm:$0xff]
    %v237 = vld [vmem:[#allocation3 + $0x129] sm:$0xff]
    %v238 = vld [vmem:[#allocation3 + $0x139] sm:$0xff]
    %v239 = vld [vmem:[#allocation3 + $0x141] sm:$0xff]
    %v240 = vld [vmem:[#allocation3 + $0x151] sm:$0xff]
    %v241 = vld [vmem:[#allocation3 + $0x159] sm:$0xff]
    %v242 = vld [vmem:[#allocation3 + $0x169] sm:$0xff]
    %v243 = vld [vmem:[#allocation3 + $0x171] sm:$0xff]
    %v244 = vld [vmem:[#allocation3 + $0x181] sm:$0xff]
    %v245 = vld [vmem:[#allocation3 + $0x189] sm:$0xff]
    %v246 = vld [vmem:[#allocation3 + $0x199] sm:$0xff]
    %v247 = vld [vmem:[#allocation3 + $0x1a1] sm:$0xff]
    %v248 = vld [vmem:[#allocation3 + $0x1b1] sm:$0xff]
    %v249 = vld [vmem:[#allocation3 + $0x1b9] sm:$0xff]
    %v250 = vld [vmem:[#allocation3 + $0x1c9] sm:$0xff]
    %v251 = vld [vmem:[#allocation3 + $0x1d1] sm:$0xff]
    %v252 = vld [vmem:[#allocation3 + $0x1e1] sm:$0xff]
    %v253 = vld [vmem:[#allocation3 + $0x1e9] sm:$0xff]
    %v254 = vld [vmem:[#allocation3 + $0x1f9] sm:$0xff]
    %v255 = vld [vmem:[#allocation3 + $0x201] sm:$0xff]
    %v256 = vld [vmem:[#allocation3 + $0x211] sm:$0xff]
    %v257 = vld [vmem:[#allocation3 + $0x219] sm:$0xff]
    %v258 = vld [vmem:[#allocation3 + $0x229] sm:$0xff]
    %v259 = vld [vmem:[#allocation3 + $0x231] sm:$0xff]
    %v260 = vld [vmem:[#allocation3 + $0x241] sm:$0xff]
    %v261 = vld [vmem:[#allocation3 + $0x249] sm:$0xff]
    %v262 = vld [vmem:[#allocation3 + $0x259] sm:$0xff]
    %v263 = vld [vmem:[#allocation3 + $0x261] sm:$0xff]
    %v264 = vld [vmem:[#allocation3 + $0x271] sm:$0xff]
    %v265 = vld [vmem:[#allocation3 + $0x279] sm:$0xff]
    %v266 = vld [vmem:[#allocation3 + $0x289] sm:$0xff]
    %v267 = vld [vmem:[#allocation3 + $0x291] sm:$0xff]
    %v268 = vld [vmem:[#allocation3 + $0x2a1] sm:$0xff]
    %v269 = vld [vmem:[#allocation3 + $0x2a9] sm:$0xff]
    %v270 = vld [vmem:[#allocation3 + $0x2b9] sm:$0xff]
    %v271 = vld [vmem:[#allocation3 + $0x2c1] sm:$0xff]
    %v272 = vld [vmem:[#allocation3 + $0x2d1] sm:$0xff]
    %v273 = vld [vmem:[#allocation3 + $0x2d9] sm:$0xff]
    %v274 = vld [vmem:[#allocation3 + $0x2e9] sm:$0xff]
    %v275 = vld [vmem:[#allocation3 + $0x2f1] sm:$0xff]
    %v276 = vld [vmem:[#allocation3 + $0x301] sm:$0xff]
    %v277 = vld [vmem:[#allocation3 + $0x309] sm:$0xff]
    %v278 = vld [vmem:[#allocation3 + $0x319] sm:$0xff]
    %v279 = vld [vmem:[#allocation3 + $0x321] sm:$0xff]
    %v280 = vld [vmem:[#allocation3 + $0x331] sm:$0xff]
    %v281 = vld [vmem:[#allocation3 + $0x339] sm:$0xff]
    %v282 = vld [vmem:[#allocation3 + $0x349] sm:$0xff]
    %v283 = vld [vmem:[#allocation3 + $0x351] sm:$0xff]
    %v284 = vld [vmem:[#allocation3 + $0x2] sm:$0xff]
    %v285 = vld [vmem:[#allocation3 + $0xa] sm:$0xff]
    %v286 = vld [vmem:[#allocation3 + $0x1a] sm:$0xff]
    %v287 = vld [vmem:[#allocation3 + $0x22] sm:$0xff]
    %v288 = vld [vmem:[#allocation3 + $0x32] sm:$0xff]
    %v289 = vld [vmem:[#allocation3 + $0x3a] sm:$0xff]
    %v290 = vld [vmem:[#allocation3 + $0x4a] sm:$0xff]
    %v291 = vld [vmem:[#allocation3 + $0x52] sm:$0xff]
    %v292 = vld [vmem:[#allocation3 + $0x62] sm:$0xff]
    %v293 = vld [vmem:[#allocation3 + $0x6a] sm:$0xff]
    %v294 = vld [vmem:[#allocation3 + $0x7a] sm:$0xff]
    %v295 = vld [vmem:[#allocation3 + $0x82] sm:$0xff]
    %v296 = vld [vmem:[#allocation3 + $0x92] sm:$0xff]
    %v297 = vld [vmem:[#allocation3 + $0x9a] sm:$0xff]
    %v298 = vld [vmem:[#allocation3 + $0xaa] sm:$0xff]
    %v299 = vld [vmem:[#allocation3 + $0xb2] sm:$0xff]
    %v300 = vld [vmem:[#allocation3 + $0xc2] sm:$0xff]
    %v301 = vld [vmem:[#allocation3 + $0xca] sm:$0xff]
    %v302 = vld [vmem:[#allocation3 + $0xda] sm:$0xff]
    %v303 = vld [vmem:[#allocation3 + $0xe2] sm:$0xff]
    %v304 = vld [vmem:[#allocation3 + $0xf2] sm:$0xff]
    %v305 = vld [vmem:[#allocation3 + $0xfa] sm:$0xff]
    %v306 = vld [vmem:[#allocation3 + $0x10a] sm:$0xff]
    %v307 = vld [vmem:[#allocation3 + $0x112] sm:$0xff]
    %v308 = vld [vmem:[#allocation3 + $0x122] sm:$0xff]
    %v309 = vld [vmem:[#allocation3 + $0x12a] sm:$0xff]
    %v310 = vld [vmem:[#allocation3 + $0x13a] sm:$0xff]
    %v311 = vld [vmem:[#allocation3 + $0x142] sm:$0xff]
    %v312 = vld [vmem:[#allocation3 + $0x152] sm:$0xff]
    %v313 = vld [vmem:[#allocation3 + $0x15a] sm:$0xff]
    %v314 = vld [vmem:[#allocation3 + $0x16a] sm:$0xff]
    %v315 = vld [vmem:[#allocation3 + $0x172] sm:$0xff]
    %v316 = vld [vmem:[#allocation3 + $0x182] sm:$0xff]
    %v317 = vld [vmem:[#allocation3 + $0x18a] sm:$0xff]
    %v318 = vld [vmem:[#allocation3 + $0x19a] sm:$0xff]
    %v319 = vld [vmem:[#allocation3 + $0x1a2] sm:$0xff]
    %v320 = vld [vmem:[#allocation3 + $0x1b2] sm:$0xff]
    %v321 = vld [vmem:[#allocation3 + $0x1ba] sm:$0xff]
    %v322 = vld [vmem:[#allocation3 + $0x1ca] sm:$0xff]
    %v323 = vld [vmem:[#allocation3 + $0x1d2] sm:$0xff]
    %v324 = vld [vmem:[#allocation3 + $0x1e2] sm:$0xff]
    %v325 = vld [vmem:[#allocation3 + $0x1ea] sm:$0xff]
    %v326 = vld [vmem:[#allocation3 + $0x1fa] sm:$0xff]
    %v327 = vld [vmem:[#allocation3 + $0x202] sm:$0xff]
    %v328 = vld [vmem:[#allocation3 + $0x212] sm:$0xff]
    %v329 = vld [vmem:[#allocation3 + $0x21a] sm:$0xff]
    %v330 = vld [vmem:[#allocation3 + $0x22a] sm:$0xff]
    %v331 = vld [vmem:[#allocation3 + $0x232] sm:$0xff]
    %v332 = vld [vmem:[#allocation3 + $0x242] sm:$0xff]
    %v333 = vld [vmem:[#allocation3 + $0x24a] sm:$0xff]
    %v334 = vld [vmem:[#allocation3 + $0x25a] sm:$0xff]
    %v335 = vld [vmem:[#allocation3 + $0x262] sm:$0xff]
    %v336 = vld [vmem:[#allocation3 + $0x272] sm:$0xff]
    %v337 = vld [vmem:[#allocation3 + $0x27a] sm:$0xff]
    %v338 = vld [vmem:[#allocation3 + $0x28a] sm:$0xff]
    %v339 = vld [vmem:[#allocation3 + $0x292] sm:$0xff]
    %v340 = vld [vmem:[#allocation3 + $0x2a2] sm:$0xff]
    %v341 = vld [vmem:[#allocation3 + $0x2aa] sm:$0xff]
    %v342 = vld [vmem:[#allocation3 + $0x2ba] sm:$0xff]
    %v343 = vld [vmem:[#allocation3 + $0x2c2] sm:$0xff]
    %v344 = vld [vmem:[#allocation3 + $0x2d2] sm:$0xff]
    %v345 = vld [vmem:[#allocation3 + $0x2da] sm:$0xff]
    %v346 = vld [vmem:[#allocation3 + $0x2ea] sm:$0xff]
    %v347 = vld [vmem:[#allocation3 + $0x2f2] sm:$0xff]
    %v348 = vld [vmem:[#allocation3 + $0x302] sm:$0xff]
    %v349 = vld [vmem:[#allocation3 + $0x30a] sm:$0xff]
    %v350 = vld [vmem:[#allocation3 + $0x31a] sm:$0xff]
    %v351 = vld [vmem:[#allocation3 + $0x322] sm:$0xff]
    %v352 = vld [vmem:[#allocation3 + $0x332] sm:$0xff]
    %v353 = vld [vmem:[#allocation3 + $0x33a] sm:$0xff]
    %v354 = vld [vmem:[#allocation3 + $0x34a] sm:$0xff]
    %v355 = vld [vmem:[#allocation3 + $0x352] sm:$0xff]
    %356 = vrot.lane.b32.xlu0 %v212, 4
    %v357 = vpop.permute.xlu0 %356
    %358 = vrot.lane.b32.xlu0 %v213, 4
    %v359 = vpop.permute.xlu0 %358
    %360 = vrot.lane.b32.xlu0 %v214, 4
    %v361 = vpop.permute.xlu0 %360
    %362 = vrot.lane.b32.xlu0 %v215, 4
    %v363 = vpop.permute.xlu0 %362
    %364 = vrot.lane.b32.xlu0 %v216, 4
    %v365 = vpop.permute.xlu0 %364
    %366 = vrot.lane.b32.xlu0 %v217, 4
    %v367 = vpop.permute.xlu0 %366
    %368 = vrot.lane.b32.xlu0 %v218, 4
    %v369 = vpop.permute.xlu0 %368
    %370 = vrot.lane.b32.xlu0 %v219, 4
    %v371 = vpop.permute.xlu0 %370
    %372 = vrot.lane.b32.xlu0 %v220, 4
    %v373 = vpop.permute.xlu0 %372
    %374 = vrot.lane.b32.xlu0 %v221, 4
    %v375 = vpop.permute.xlu0 %374
    %376 = vrot.lane.b32.xlu0 %v222, 4
    %v377 = vpop.permute.xlu0 %376
    %378 = vrot.lane.b32.xlu0 %v223, 4
    %v379 = vpop.permute.xlu0 %378
    %380 = vrot.lane.b32.xlu0 %v224, 4
    %v381 = vpop.permute.xlu0 %380
    %382 = vrot.lane.b32.xlu0 %v225, 4
    %v383 = vpop.permute.xlu0 %382
    %384 = vrot.lane.b32.xlu0 %v226, 4
    %v385 = vpop.permute.xlu0 %384
    %386 = vrot.lane.b32.xlu0 %v227, 4
    %v387 = vpop.permute.xlu0 %386
    %388 = vrot.lane.b32.xlu0 %v228, 4
    %v389 = vpop.permute.xlu0 %388
    %390 = vrot.lane.b32.xlu0 %v229, 4
    %v391 = vpop.permute.xlu0 %390
    %392 = vrot.lane.b32.xlu0 %v230, 4
    %v393 = vpop.permute.xlu0 %392
    %394 = vrot.lane.b32.xlu0 %v231, 4
    %v395 = vpop.permute.xlu0 %394
    %396 = vrot.lane.b32.xlu0 %v232, 4
    %v397 = vpop.permute.xlu0 %396
    %398 = vrot.lane.b32.xlu0 %v233, 4
    %v399 = vpop.permute.xlu0 %398
    %400 = vrot.lane.b32.xlu0 %v234, 4
    %v401 = vpop.permute.xlu0 %400
    %402 = vrot.lane.b32.xlu0 %v235, 4
    %v403 = vpop.permute.xlu0 %402
    %404 = vrot.lane.b32.xlu0 %v236, 4
    %v405 = vpop.permute.xlu0 %404
    %406 = vrot.lane.b32.xlu0 %v237, 4
    %v407 = vpop.permute.xlu0 %406
    %408 = vrot.lane.b32.xlu0 %v238, 4
    %v409 = vpop.permute.xlu0 %408
    %410 = vrot.lane.b32.xlu0 %v239, 4
    %v411 = vpop.permute.xlu0 %410
    %412 = vrot.lane.b32.xlu0 %v240, 4
    %v413 = vpop.permute.xlu0 %412
    %414 = vrot.lane.b32.xlu0 %v241, 4
    %v415 = vpop.permute.xlu0 %414
    %416 = vrot.lane.b32.xlu0 %v242, 4
    %v417 = vpop.permute.xlu0 %416
    %418 = vrot.lane.b32.xlu0 %v243, 4
    %v419 = vpop.permute.xlu0 %418
    %420 = vrot.lane.b32.xlu0 %v248, 4
    %v421 = vpop.permute.xlu0 %420
    %422 = vrot.lane.b32.xlu0 %v249, 4
    %v423 = vpop.permute.xlu0 %422
    %424 = vrot.lane.b32.xlu0 %v250, 4
    %v425 = vpop.permute.xlu0 %424
    %426 = vrot.lane.b32.xlu0 %v251, 4
    %v427 = vpop.permute.xlu0 %426
    %428 = vrot.lane.b32.xlu0 %v252, 4
    %v429 = vpop.permute.xlu0 %428
    %430 = vrot.lane.b32.xlu0 %v253, 4
    %v431 = vpop.permute.xlu0 %430
    %432 = vrot.lane.b32.xlu0 %v254, 4
    %v433 = vpop.permute.xlu0 %432
    %434 = vrot.lane.b32.xlu0 %v255, 4
    %v435 = vpop.permute.xlu0 %434
    %436 = vrot.lane.b32.xlu0 %v256, 4
    %v437 = vpop.permute.xlu0 %436
    %438 = vrot.lane.b32.xlu0 %v257, 4
    %v439 = vpop.permute.xlu0 %438
    %440 = vrot.lane.b32.xlu0 %v258, 4
    %v441 = vpop.permute.xlu0 %440
    %442 = vrot.lane.b32.xlu0 %v259, 4
    %v443 = vpop.permute.xlu0 %442
    %444 = vrot.lane.b32.xlu0 %v260, 4
    %v445 = vpop.permute.xlu0 %444
    %446 = vrot.lane.b32.xlu0 %v261, 4
    %v447 = vpop.permute.xlu0 %446
    %448 = vrot.lane.b32.xlu0 %v262, 4
    %v449 = vpop.permute.xlu0 %448
    %450 = vrot.lane.b32.xlu0 %v263, 4
    %v451 = vpop.permute.xlu0 %450
    %452 = vrot.lane.b32.xlu0 %v264, 4
    %v453 = vpop.permute.xlu0 %452
    %454 = vrot.lane.b32.xlu0 %v265, 4
    %v455 = vpop.permute.xlu0 %454
    %456 = vrot.lane.b32.xlu0 %v266, 4
    %v457 = vpop.permute.xlu0 %456
    %458 = vrot.lane.b32.xlu0 %v267, 4
    %v459 = vpop.permute.xlu0 %458
    %460 = vrot.lane.b32.xlu0 %v268, 4
    %v461 = vpop.permute.xlu0 %460
    %462 = vrot.lane.b32.xlu0 %v269, 4
    %v463 = vpop.permute.xlu0 %462
    %464 = vrot.lane.b32.xlu0 %v270, 4
    %v465 = vpop.permute.xlu0 %464
    %466 = vrot.lane.b32.xlu0 %v271, 4
    %v467 = vpop.permute.xlu0 %466
    %468 = vrot.lane.b32.xlu0 %v272, 4
    %v469 = vpop.permute.xlu0 %468
    %470 = vrot.lane.b32.xlu0 %v273, 4
    %v471 = vpop.permute.xlu0 %470
    %472 = vrot.lane.b32.xlu0 %v274, 4
    %v473 = vpop.permute.xlu0 %472
    %474 = vrot.lane.b32.xlu0 %v275, 4
    %v475 = vpop.permute.xlu0 %474
    %476 = vrot.lane.b32.xlu0 %v276, 4
    %v477 = vpop.permute.xlu0 %476
    %478 = vrot.lane.b32.xlu0 %v277, 4
    %v479 = vpop.permute.xlu0 %478
    %480 = vrot.lane.b32.xlu0 %v278, 4
    %v481 = vpop.permute.xlu0 %480
    %482 = vrot.lane.b32.xlu0 %v279, 4
    %v483 = vpop.permute.xlu0 %482
    %v484 = vadd.f32 %v140, %v357
    %v485 = vadd.f32 %v141, %v359
    %v486 = vadd.f32 %v142, %v361
    %v487 = vadd.f32 %v143, %v363
    %v488 = vadd.f32 %v144, %v365
    %v489 = vadd.f32 %v145, %v367
    %v490 = vadd.f32 %v146, %v369
    %v491 = vadd.f32 %v147, %v371
    %v492 = vadd.f32 %v148, %v373
    %v493 = vadd.f32 %v149, %v375
    %v494 = vadd.f32 %v150, %v377
    %v495 = vadd.f32 %v151, %v379
    %v496 = vadd.f32 %v152, %v381
    %v497 = vadd.f32 %v153, %v383
    %v498 = vadd.f32 %v154, %v385
    %v499 = vadd.f32 %v155, %v387
    %v500 = vadd.f32 %v156, %v389
    %v501 = vadd.f32 %v157, %v391
    %v502 = vadd.f32 %v158, %v393
    %v503 = vadd.f32 %v159, %v395
    %v504 = vadd.f32 %v160, %v397
    %v505 = vadd.f32 %v161, %v399
    %v506 = vadd.f32 %v162, %v401
    %v507 = vadd.f32 %v163, %v403
    %v508 = vadd.f32 %v164, %v405
    %v509 = vadd.f32 %v165, %v407
    %v510 = vadd.f32 %v166, %v409
    %v511 = vadd.f32 %v167, %v411
    %v512 = vadd.f32 %v168, %v413
    %v513 = vadd.f32 %v169, %v415
    %v514 = vadd.f32 %v170, %v417
    %v515 = vadd.f32 %v171, %v419
    %v516 = vadd.f32 %v176, %v421
    %v517 = vadd.f32 %v177, %v423
    %v518 = vadd.f32 %v178, %v425
    %v519 = vadd.f32 %v179, %v427
    %v520 = vadd.f32 %v180, %v429
    %v521 = vadd.f32 %v181, %v431
    %v522 = vadd.f32 %v182, %v433
    %v523 = vadd.f32 %v183, %v435
    %v524 = vadd.f32 %v184, %v437
    %v525 = vadd.f32 %v185, %v439
    %v526 = vadd.f32 %v186, %v441
    %v527 = vadd.f32 %v187, %v443
    %v528 = vadd.f32 %v188, %v445
    %v529 = vadd.f32 %v189, %v447
    %v530 = vadd.f32 %v190, %v449
    %v531 = vadd.f32 %v191, %v451
    %v532 = vadd.f32 %v192, %v453
    %v533 = vadd.f32 %v193, %v455
    %v534 = vadd.f32 %v194, %v457
    %v535 = vadd.f32 %v195, %v459
    %v536 = vadd.f32 %v196, %v461
    %v537 = vadd.f32 %v197, %v463
    %v538 = vadd.f32 %v198, %v465
    %v539 = vadd.f32 %v199, %v467
    %v540 = vadd.f32 %v200, %v469
    %v541 = vadd.f32 %v201, %v471
    %v542 = vadd.f32 %v202, %v473
    %v543 = vadd.f32 %v203, %v475
    %v544 = vadd.f32 %v204, %v477
    %v545 = vadd.f32 %v205, %v479
    %v546 = vadd.f32 %v206, %v481
    %v547 = vadd.f32 %v207, %v483
    %548 = vrot.lane.b32.xlu0 %v284, 8
    %v549 = vpop.permute.xlu0 %548
    %550 = vrot.lane.b32.xlu0 %v285, 8
    %v551 = vpop.permute.xlu0 %550
    %552 = vrot.lane.b32.xlu0 %v286, 8
    %v553 = vpop.permute.xlu0 %552
    %554 = vrot.lane.b32.xlu0 %v287, 8
    %v555 = vpop.permute.xlu0 %554
    %556 = vrot.lane.b32.xlu0 %v288, 8
    %v557 = vpop.permute.xlu0 %556
    %558 = vrot.lane.b32.xlu0 %v289, 8
    %v559 = vpop.permute.xlu0 %558
    %560 = vrot.lane.b32.xlu0 %v290, 8
    %v561 = vpop.permute.xlu0 %560
    %562 = vrot.lane.b32.xlu0 %v291, 8
    %v563 = vpop.permute.xlu0 %562
    %564 = vrot.lane.b32.xlu0 %v292, 8
    %v565 = vpop.permute.xlu0 %564
    %566 = vrot.lane.b32.xlu0 %v293, 8
    %v567 = vpop.permute.xlu0 %566
    %568 = vrot.lane.b32.xlu0 %v294, 8
    %v569 = vpop.permute.xlu0 %568
    %570 = vrot.lane.b32.xlu0 %v295, 8
    %v571 = vpop.permute.xlu0 %570
    %572 = vrot.lane.b32.xlu0 %v296, 8
    %v573 = vpop.permute.xlu0 %572
    %574 = vrot.lane.b32.xlu0 %v297, 8
    %v575 = vpop.permute.xlu0 %574
    %576 = vrot.lane.b32.xlu0 %v298, 8
    %v577 = vpop.permute.xlu0 %576
    %578 = vrot.lane.b32.xlu0 %v299, 8
    %v579 = vpop.permute.xlu0 %578
    %580 = vrot.lane.b32.xlu0 %v300, 8
    %v581 = vpop.permute.xlu0 %580
    %582 = vrot.lane.b32.xlu0 %v301, 8
    %v583 = vpop.permute.xlu0 %582
    %584 = vrot.lane.b32.xlu0 %v302, 8
    %v585 = vpop.permute.xlu0 %584
    %586 = vrot.lane.b32.xlu0 %v303, 8
    %v587 = vpop.permute.xlu0 %586
    %588 = vrot.lane.b32.xlu0 %v304, 8
    %v589 = vpop.permute.xlu0 %588
    %590 = vrot.lane.b32.xlu0 %v305, 8
    %v591 = vpop.permute.xlu0 %590
    %592 = vrot.lane.b32.xlu0 %v306, 8
    %v593 = vpop.permute.xlu0 %592
    %594 = vrot.lane.b32.xlu0 %v307, 8
    %v595 = vpop.permute.xlu0 %594
    %596 = vrot.lane.b32.xlu0 %v308, 8
    %v597 = vpop.permute.xlu0 %596
    %598 = vrot.lane.b32.xlu0 %v309, 8
    %v599 = vpop.permute.xlu0 %598
    %600 = vrot.lane.b32.xlu0 %v310, 8
    %v601 = vpop.permute.xlu0 %600
    %602 = vrot.lane.b32.xlu0 %v311, 8
    %v603 = vpop.permute.xlu0 %602
    %604 = vrot.lane.b32.xlu0 %v312, 8
    %v605 = vpop.permute.xlu0 %604
    %606 = vrot.lane.b32.xlu0 %v313, 8
    %v607 = vpop.permute.xlu0 %606
    %608 = vrot.lane.b32.xlu0 %v314, 8
    %v609 = vpop.permute.xlu0 %608
    %610 = vrot.lane.b32.xlu0 %v315, 8
    %v611 = vpop.permute.xlu0 %610
    %612 = vrot.lane.b32.xlu0 %v320, 8
    %v613 = vpop.permute.xlu0 %612
    %614 = vrot.lane.b32.xlu0 %v321, 8
    %v615 = vpop.permute.xlu0 %614
    %616 = vrot.lane.b32.xlu0 %v322, 8
    %v617 = vpop.permute.xlu0 %616
    %618 = vrot.lane.b32.xlu0 %v323, 8
    %v619 = vpop.permute.xlu0 %618
    %620 = vrot.lane.b32.xlu0 %v324, 8
    %v621 = vpop.permute.xlu0 %620
    %622 = vrot.lane.b32.xlu0 %v325, 8
    %v623 = vpop.permute.xlu0 %622
    %624 = vrot.lane.b32.xlu0 %v326, 8
    %v625 = vpop.permute.xlu0 %624
    %626 = vrot.lane.b32.xlu0 %v327, 8
    %v627 = vpop.permute.xlu0 %626
    %628 = vrot.lane.b32.xlu0 %v328, 8
    %v629 = vpop.permute.xlu0 %628
    %630 = vrot.lane.b32.xlu0 %v329, 8
    %v631 = vpop.permute.xlu0 %630
    %632 = vrot.lane.b32.xlu0 %v330, 8
    %v633 = vpop.permute.xlu0 %632
    %634 = vrot.lane.b32.xlu0 %v331, 8
    %v635 = vpop.permute.xlu0 %634
    %636 = vrot.lane.b32.xlu0 %v332, 8
    %v637 = vpop.permute.xlu0 %636
    %638 = vrot.lane.b32.xlu0 %v333, 8
    %v639 = vpop.permute.xlu0 %638
    %640 = vrot.lane.b32.xlu0 %v334, 8
    %v641 = vpop.permute.xlu0 %640
    %642 = vrot.lane.b32.xlu0 %v335, 8
    %v643 = vpop.permute.xlu0 %642
    %644 = vrot.lane.b32.xlu0 %v336, 8
    %v645 = vpop.permute.xlu0 %644
    %646 = vrot.lane.b32.xlu0 %v337, 8
    %v647 = vpop.permute.xlu0 %646
    %648 = vrot.lane.b32.xlu0 %v338, 8
    %v649 = vpop.permute.xlu0 %648
    %650 = vrot.lane.b32.xlu0 %v339, 8
    %v651 = vpop.permute.xlu0 %650
    %652 = vrot.lane.b32.xlu0 %v340, 8
    %v653 = vpop.permute.xlu0 %652
    %654 = vrot.lane.b32.xlu0 %v341, 8
    %v655 = vpop.permute.xlu0 %654
    %656 = vrot.lane.b32.xlu0 %v342, 8
    %v657 = vpop.permute.xlu0 %656
    %658 = vrot.lane.b32.xlu0 %v343, 8
    %v659 = vpop.permute.xlu0 %658
    %660 = vrot.lane.b32.xlu0 %v344, 8
    %v661 = vpop.permute.xlu0 %660
    %662 = vrot.lane.b32.xlu0 %v345, 8
    %v663 = vpop.permute.xlu0 %662
    %664 = vrot.lane.b32.xlu0 %v346, 8
    %v665 = vpop.permute.xlu0 %664
    %666 = vrot.lane.b32.xlu0 %v347, 8
    %v667 = vpop.permute.xlu0 %666
    %668 = vrot.lane.b32.xlu0 %v348, 8
    %v669 = vpop.permute.xlu0 %668
    %670 = vrot.lane.b32.xlu0 %v349, 8
    %v671 = vpop.permute.xlu0 %670
    %672 = vrot.lane.b32.xlu0 %v350, 8
    %v673 = vpop.permute.xlu0 %672
    %674 = vrot.lane.b32.xlu0 %v351, 8
    %v675 = vpop.permute.xlu0 %674
    %v676 = vadd.f32 %v484, %v549
    %v677 = vadd.f32 %v485, %v551
    %v678 = vadd.f32 %v486, %v553
    %v679 = vadd.f32 %v487, %v555
    %v680 = vadd.f32 %v488, %v557
    %v681 = vadd.f32 %v489, %v559
    %v682 = vadd.f32 %v490, %v561
    %v683 = vadd.f32 %v491, %v563
    %v684 = vadd.f32 %v492, %v565
    %v685 = vadd.f32 %v493, %v567
    %v686 = vadd.f32 %v494, %v569
    %v687 = vadd.f32 %v495, %v571
    %v688 = vadd.f32 %v496, %v573
    %v689 = vadd.f32 %v497, %v575
    %v690 = vadd.f32 %v498, %v577
    %v691 = vadd.f32 %v499, %v579
    %v692 = vadd.f32 %v500, %v581
    %v693 = vadd.f32 %v501, %v583
    %v694 = vadd.f32 %v502, %v585
    %v695 = vadd.f32 %v503, %v587
    %v696 = vadd.f32 %v504, %v589
    %v697 = vadd.f32 %v505, %v591
    %v698 = vadd.f32 %v506, %v593
    %v699 = vadd.f32 %v507, %v595
    %v700 = vadd.f32 %v508, %v597
    %v701 = vadd.f32 %v509, %v599
    %v702 = vadd.f32 %v510, %v601
    %v703 = vadd.f32 %v511, %v603
    %v704 = vadd.f32 %v512, %v605
    %v705 = vadd.f32 %v513, %v607
    %v706 = vadd.f32 %v514, %v609
    %v707 = vadd.f32 %v515, %v611
    %v708 = vadd.f32 %v516, %v613
    %v709 = vadd.f32 %v517, %v615
    %v710 = vadd.f32 %v518, %v617
    %v711 = vadd.f32 %v519, %v619
    %v712 = vadd.f32 %v520, %v621
    %v713 = vadd.f32 %v521, %v623
    %v714 = vadd.f32 %v522, %v625
    %v715 = vadd.f32 %v523, %v627
    %v716 = vadd.f32 %v524, %v629
    %v717 = vadd.f32 %v525, %v631
    %v718 = vadd.f32 %v526, %v633
    %v719 = vadd.f32 %v527, %v635
    %v720 = vadd.f32 %v528, %v637
    %v721 = vadd.f32 %v529, %v639
    %v722 = vadd.f32 %v530, %v641
    %v723 = vadd.f32 %v531, %v643
    %v724 = vadd.f32 %v532, %v645
    %v725 = vadd.f32 %v533, %v647
    %v726 = vadd.f32 %v534, %v649
    %v727 = vadd.f32 %v535, %v651
    %v728 = vadd.f32 %v536, %v653
    %v729 = vadd.f32 %v537, %v655
    %v730 = vadd.f32 %v538, %v657
    %v731 = vadd.f32 %v539, %v659
    %v732 = vadd.f32 %v540, %v661
    %v733 = vadd.f32 %v541, %v663
    %v734 = vadd.f32 %v542, %v665
    %v735 = vadd.f32 %v543, %v667
    %v736 = vadd.f32 %v544, %v669
    %v737 = vadd.f32 %v545, %v671
    %v738 = vadd.f32 %v546, %v673
    %v739 = vadd.f32 %v547, %v675
    %740 = vrot.lane.b32.xlu0 %v142, 12
    %v741 = vpop.permute.xlu0 %740
    %742 = vrot.lane.b32.xlu0 %v143, 12
    %v743 = vpop.permute.xlu0 %742
    %744 = vrot.lane.b32.xlu0 %v144, 12
    %v745 = vpop.permute.xlu0 %744
    %746 = vrot.lane.b32.xlu0 %v145, 12
    %v747 = vpop.permute.xlu0 %746
    %748 = vrot.lane.b32.xlu0 %v146, 12
    %v749 = vpop.permute.xlu0 %748
    %750 = vrot.lane.b32.xlu0 %v147, 12
    %v751 = vpop.permute.xlu0 %750
    %752 = vrot.lane.b32.xlu0 %v148, 12
    %v753 = vpop.permute.xlu0 %752
    %754 = vrot.lane.b32.xlu0 %v149, 12
    %v755 = vpop.permute.xlu0 %754
    %756 = vrot.lane.b32.xlu0 %v150, 12
    %v757 = vpop.permute.xlu0 %756
    %758 = vrot.lane.b32.xlu0 %v151, 12
    %v759 = vpop.permute.xlu0 %758
    %760 = vrot.lane.b32.xlu0 %v152, 12
    %v761 = vpop.permute.xlu0 %760
    %762 = vrot.lane.b32.xlu0 %v153, 12
    %v763 = vpop.permute.xlu0 %762
    %764 = vrot.lane.b32.xlu0 %v154, 12
    %v765 = vpop.permute.xlu0 %764
    %766 = vrot.lane.b32.xlu0 %v155, 12
    %v767 = vpop.permute.xlu0 %766
    %768 = vrot.lane.b32.xlu0 %v156, 12
    %v769 = vpop.permute.xlu0 %768
    %770 = vrot.lane.b32.xlu0 %v157, 12
    %v771 = vpop.permute.xlu0 %770
    %772 = vrot.lane.b32.xlu0 %v158, 12
    %v773 = vpop.permute.xlu0 %772
    %774 = vrot.lane.b32.xlu0 %v159, 12
    %v775 = vpop.permute.xlu0 %774
    %776 = vrot.lane.b32.xlu0 %v160, 12
    %v777 = vpop.permute.xlu0 %776
    %778 = vrot.lane.b32.xlu0 %v161, 12
    %v779 = vpop.permute.xlu0 %778
    %780 = vrot.lane.b32.xlu0 %v162, 12
    %v781 = vpop.permute.xlu0 %780
    %782 = vrot.lane.b32.xlu0 %v163, 12
    %v783 = vpop.permute.xlu0 %782
    %784 = vrot.lane.b32.xlu0 %v164, 12
    %v785 = vpop.permute.xlu0 %784
    %786 = vrot.lane.b32.xlu0 %v165, 12
    %v787 = vpop.permute.xlu0 %786
    %788 = vrot.lane.b32.xlu0 %v166, 12
    %v789 = vpop.permute.xlu0 %788
    %790 = vrot.lane.b32.xlu0 %v167, 12
    %v791 = vpop.permute.xlu0 %790
    %792 = vrot.lane.b32.xlu0 %v168, 12
    %v793 = vpop.permute.xlu0 %792
    %794 = vrot.lane.b32.xlu0 %v169, 12
    %v795 = vpop.permute.xlu0 %794
    %796 = vrot.lane.b32.xlu0 %v170, 12
    %v797 = vpop.permute.xlu0 %796
    %798 = vrot.lane.b32.xlu0 %v171, 12
    %v799 = vpop.permute.xlu0 %798
    %800 = vrot.lane.b32.xlu0 %v172, 12
    %v801 = vpop.permute.xlu0 %800
    %802 = vrot.lane.b32.xlu0 %v173, 12
    %v803 = vpop.permute.xlu0 %802
    %804 = vrot.lane.b32.xlu0 %v178, 12
    %v805 = vpop.permute.xlu0 %804
    %806 = vrot.lane.b32.xlu0 %v179, 12
    %v807 = vpop.permute.xlu0 %806
    %808 = vrot.lane.b32.xlu0 %v180, 12
    %v809 = vpop.permute.xlu0 %808
    %810 = vrot.lane.b32.xlu0 %v181, 12
    %v811 = vpop.permute.xlu0 %810
    %812 = vrot.lane.b32.xlu0 %v182, 12
    %v813 = vpop.permute.xlu0 %812
    %814 = vrot.lane.b32.xlu0 %v183, 12
    %v815 = vpop.permute.xlu0 %814
    %816 = vrot.lane.b32.xlu0 %v184, 12
    %v817 = vpop.permute.xlu0 %816
    %818 = vrot.lane.b32.xlu0 %v185, 12
    %v819 = vpop.permute.xlu0 %818
    %820 = vrot.lane.b32.xlu0 %v186, 12
    %v821 = vpop.permute.xlu0 %820
    %822 = vrot.lane.b32.xlu0 %v187, 12
    %v823 = vpop.permute.xlu0 %822
    %824 = vrot.lane.b32.xlu0 %v188, 12
    %v825 = vpop.permute.xlu0 %824
    %826 = vrot.lane.b32.xlu0 %v189, 12
    %v827 = vpop.permute.xlu0 %826
    %828 = vrot.lane.b32.xlu0 %v190, 12
    %v829 = vpop.permute.xlu0 %828
    %830 = vrot.lane.b32.xlu0 %v191, 12
    %v831 = vpop.permute.xlu0 %830
    %832 = vrot.lane.b32.xlu0 %v192, 12
    %v833 = vpop.permute.xlu0 %832
    %834 = vrot.lane.b32.xlu0 %v193, 12
    %v835 = vpop.permute.xlu0 %834
    %836 = vrot.lane.b32.xlu0 %v194, 12
    %v837 = vpop.permute.xlu0 %836
    %838 = vrot.lane.b32.xlu0 %v195, 12
    %v839 = vpop.permute.xlu0 %838
    %840 = vrot.lane.b32.xlu0 %v196, 12
    %v841 = vpop.permute.xlu0 %840
    %842 = vrot.lane.b32.xlu0 %v197, 12
    %v843 = vpop.permute.xlu0 %842
    %844 = vrot.lane.b32.xlu0 %v198, 12
    %v845 = vpop.permute.xlu0 %844
    %846 = vrot.lane.b32.xlu0 %v199, 12
    %v847 = vpop.permute.xlu0 %846
    %848 = vrot.lane.b32.xlu0 %v200, 12
    %v849 = vpop.permute.xlu0 %848
    %850 = vrot.lane.b32.xlu0 %v201, 12
    %v851 = vpop.permute.xlu0 %850
    %852 = vrot.lane.b32.xlu0 %v202, 12
    %v853 = vpop.permute.xlu0 %852
    %854 = vrot.lane.b32.xlu0 %v203, 12
    %v855 = vpop.permute.xlu0 %854
    %856 = vrot.lane.b32.xlu0 %v204, 12
    %v857 = vpop.permute.xlu0 %856
    %858 = vrot.lane.b32.xlu0 %v205, 12
    %v859 = vpop.permute.xlu0 %858
    %860 = vrot.lane.b32.xlu0 %v206, 12
    %v861 = vpop.permute.xlu0 %860
    %862 = vrot.lane.b32.xlu0 %v207, 12
    %v863 = vpop.permute.xlu0 %862
    %864 = vrot.lane.b32.xlu0 %v208, 12
    %v865 = vpop.permute.xlu0 %864
    %866 = vrot.lane.b32.xlu0 %v209, 12
    %v867 = vpop.permute.xlu0 %866
    %v868 = vadd.f32 %v676, %v741
    %v869 = vadd.f32 %v677, %v743
    %v870 = vadd.f32 %v678, %v745
    %v871 = vadd.f32 %v679, %v747
    %v872 = vadd.f32 %v680, %v749
    %v873 = vadd.f32 %v681, %v751
    %v874 = vadd.f32 %v682, %v753
    %v875 = vadd.f32 %v683, %v755
    %v876 = vadd.f32 %v684, %v757
    %v877 = vadd.f32 %v685, %v759
    %v878 = vadd.f32 %v686, %v761
    %v879 = vadd.f32 %v687, %v763
    %v880 = vadd.f32 %v688, %v765
    %v881 = vadd.f32 %v689, %v767
    %v882 = vadd.f32 %v690, %v769
    %v883 = vadd.f32 %v691, %v771
    %v884 = vadd.f32 %v692, %v773
    %v885 = vadd.f32 %v693, %v775
    %v886 = vadd.f32 %v694, %v777
    %v887 = vadd.f32 %v695, %v779
    %v888 = vadd.f32 %v696, %v781
    %v889 = vadd.f32 %v697, %v783
    %v890 = vadd.f32 %v698, %v785
    %v891 = vadd.f32 %v699, %v787
    %v892 = vadd.f32 %v700, %v789
    %v893 = vadd.f32 %v701, %v791
    %v894 = vadd.f32 %v702, %v793
    %v895 = vadd.f32 %v703, %v795
    %v896 = vadd.f32 %v704, %v797
    %v897 = vadd.f32 %v705, %v799
    %v898 = vadd.f32 %v706, %v801
    %v899 = vadd.f32 %v707, %v803
    %v900 = vadd.f32 %v708, %v805
    %v901 = vadd.f32 %v709, %v807
    %v902 = vadd.f32 %v710, %v809
    %v903 = vadd.f32 %v711, %v811
    %v904 = vadd.f32 %v712, %v813
    %v905 = vadd.f32 %v713, %v815
    %v906 = vadd.f32 %v714, %v817
    %v907 = vadd.f32 %v715, %v819
    %v908 = vadd.f32 %v716, %v821
    %v909 = vadd.f32 %v717, %v823
    %v910 = vadd.f32 %v718, %v825
    %v911 = vadd.f32 %v719, %v827
    %v912 = vadd.f32 %v720, %v829
    %v913 = vadd.f32 %v721, %v831
    %v914 = vadd.f32 %v722, %v833
    %v915 = vadd.f32 %v723, %v835
    %v916 = vadd.f32 %v724, %v837
    %v917 = vadd.f32 %v725, %v839
    %v918 = vadd.f32 %v726, %v841
    %v919 = vadd.f32 %v727, %v843
    %v920 = vadd.f32 %v728, %v845
    %v921 = vadd.f32 %v729, %v847
    %v922 = vadd.f32 %v730, %v849
    %v923 = vadd.f32 %v731, %v851
    %v924 = vadd.f32 %v732, %v853
    %v925 = vadd.f32 %v733, %v855
    %v926 = vadd.f32 %v734, %v857
    %v927 = vadd.f32 %v735, %v859
    %v928 = vadd.f32 %v736, %v861
    %v929 = vadd.f32 %v737, %v863
    %v930 = vadd.f32 %v738, %v865
    %v931 = vadd.f32 %v739, %v867
    %932 = vrot.lane.b32.xlu0 %v214, 16
    %v933 = vpop.permute.xlu0 %932
    %934 = vrot.lane.b32.xlu0 %v215, 16
    %v935 = vpop.permute.xlu0 %934
    %936 = vrot.lane.b32.xlu0 %v216, 16
    %v937 = vpop.permute.xlu0 %936
    %938 = vrot.lane.b32.xlu0 %v217, 16
    %v939 = vpop.permute.xlu0 %938
    %940 = vrot.lane.b32.xlu0 %v218, 16
    %v941 = vpop.permute.xlu0 %940
    %942 = vrot.lane.b32.xlu0 %v219, 16
    %v943 = vpop.permute.xlu0 %942
    %944 = vrot.lane.b32.xlu0 %v220, 16
    %v945 = vpop.permute.xlu0 %944
    %946 = vrot.lane.b32.xlu0 %v221, 16
    %v947 = vpop.permute.xlu0 %946
    %948 = vrot.lane.b32.xlu0 %v222, 16
    %v949 = vpop.permute.xlu0 %948
    %950 = vrot.lane.b32.xlu0 %v223, 16
    %v951 = vpop.permute.xlu0 %950
    %952 = vrot.lane.b32.xlu0 %v224, 16
    %v953 = vpop.permute.xlu0 %952
    %954 = vrot.lane.b32.xlu0 %v225, 16
    %v955 = vpop.permute.xlu0 %954
    %956 = vrot.lane.b32.xlu0 %v226, 16
    %v957 = vpop.permute.xlu0 %956
    %958 = vrot.lane.b32.xlu0 %v227, 16
    %v959 = vpop.permute.xlu0 %958
    %960 = vrot.lane.b32.xlu0 %v228, 16
    %v961 = vpop.permute.xlu0 %960
    %962 = vrot.lane.b32.xlu0 %v229, 16
    %v963 = vpop.permute.xlu0 %962
    %964 = vrot.lane.b32.xlu0 %v230, 16
    %v965 = vpop.permute.xlu0 %964
    %966 = vrot.lane.b32.xlu0 %v231, 16
    %v967 = vpop.permute.xlu0 %966
    %968 = vrot.lane.b32.xlu0 %v232, 16
    %v969 = vpop.permute.xlu0 %968
    %970 = vrot.lane.b32.xlu0 %v233, 16
    %v971 = vpop.permute.xlu0 %970
    %972 = vrot.lane.b32.xlu0 %v234, 16
    %v973 = vpop.permute.xlu0 %972
    %974 = vrot.lane.b32.xlu0 %v235, 16
    %v975 = vpop.permute.xlu0 %974
    %976 = vrot.lane.b32.xlu0 %v236, 16
    %v977 = vpop.permute.xlu0 %976
    %978 = vrot.lane.b32.xlu0 %v237, 16
    %v979 = vpop.permute.xlu0 %978
    %980 = vrot.lane.b32.xlu0 %v238, 16
    %v981 = vpop.permute.xlu0 %980
    %982 = vrot.lane.b32.xlu0 %v239, 16
    %v983 = vpop.permute.xlu0 %982
    %984 = vrot.lane.b32.xlu0 %v240, 16
    %v985 = vpop.permute.xlu0 %984
    %986 = vrot.lane.b32.xlu0 %v241, 16
    %v987 = vpop.permute.xlu0 %986
    %988 = vrot.lane.b32.xlu0 %v242, 16
    %v989 = vpop.permute.xlu0 %988
    %990 = vrot.lane.b32.xlu0 %v243, 16
    %v991 = vpop.permute.xlu0 %990
    %992 = vrot.lane.b32.xlu0 %v244, 16
    %v993 = vpop.permute.xlu0 %992
    %994 = vrot.lane.b32.xlu0 %v245, 16
    %v995 = vpop.permute.xlu0 %994
    %996 = vrot.lane.b32.xlu0 %v250, 16
    %v997 = vpop.permute.xlu0 %996
    %998 = vrot.lane.b32.xlu0 %v251, 16
    %v999 = vpop.permute.xlu0 %998
    %1000 = vrot.lane.b32.xlu0 %v252, 16
    %v1001 = vpop.permute.xlu0 %1000
    %1002 = vrot.lane.b32.xlu0 %v253, 16
    %v1003 = vpop.permute.xlu0 %1002
    %1004 = vrot.lane.b32.xlu0 %v254, 16
    %v1005 = vpop.permute.xlu0 %1004
    %1006 = vrot.lane.b32.xlu0 %v255, 16
    %v1007 = vpop.permute.xlu0 %1006
    %1008 = vrot.lane.b32.xlu0 %v256, 16
    %v1009 = vpop.permute.xlu0 %1008
    %1010 = vrot.lane.b32.xlu0 %v257, 16
    %v1011 = vpop.permute.xlu0 %1010
    %1012 = vrot.lane.b32.xlu0 %v258, 16
    %v1013 = vpop.permute.xlu0 %1012
    %1014 = vrot.lane.b32.xlu0 %v259, 16
    %v1015 = vpop.permute.xlu0 %1014
    %1016 = vrot.lane.b32.xlu0 %v260, 16
    %v1017 = vpop.permute.xlu0 %1016
    %1018 = vrot.lane.b32.xlu0 %v261, 16
    %v1019 = vpop.permute.xlu0 %1018
    %1020 = vrot.lane.b32.xlu0 %v262, 16
    %v1021 = vpop.permute.xlu0 %1020
    %1022 = vrot.lane.b32.xlu0 %v263, 16
    %v1023 = vpop.permute.xlu0 %1022
    %1024 = vrot.lane.b32.xlu0 %v264, 16
    %v1025 = vpop.permute.xlu0 %1024
    %1026 = vrot.lane.b32.xlu0 %v265, 16
    %v1027 = vpop.permute.xlu0 %1026
    %1028 = vrot.lane.b32.xlu0 %v266, 16
    %v1029 = vpop.permute.xlu0 %1028
    %1030 = vrot.lane.b32.xlu0 %v267, 16
    %v1031 = vpop.permute.xlu0 %1030
    %1032 = vrot.lane.b32.xlu0 %v268, 16
    %v1033 = vpop.permute.xlu0 %1032
    %1034 = vrot.lane.b32.xlu0 %v269, 16
    %v1035 = vpop.permute.xlu0 %1034
    %1036 = vrot.lane.b32.xlu0 %v270, 16
    %v1037 = vpop.permute.xlu0 %1036
    %1038 = vrot.lane.b32.xlu0 %v271, 16
    %v1039 = vpop.permute.xlu0 %1038
    %1040 = vrot.lane.b32.xlu0 %v272, 16
    %v1041 = vpop.permute.xlu0 %1040
    %1042 = vrot.lane.b32.xlu0 %v273, 16
    %v1043 = vpop.permute.xlu0 %1042
    %1044 = vrot.lane.b32.xlu0 %v274, 16
    %v1045 = vpop.permute.xlu0 %1044
    %1046 = vrot.lane.b32.xlu0 %v275, 16
    %v1047 = vpop.permute.xlu0 %1046
    %1048 = vrot.lane.b32.xlu0 %v276, 16
    %v1049 = vpop.permute.xlu0 %1048
    %1050 = vrot.lane.b32.xlu0 %v277, 16
    %v1051 = vpop.permute.xlu0 %1050
    %1052 = vrot.lane.b32.xlu0 %v278, 16
    %v1053 = vpop.permute.xlu0 %1052
    %1054 = vrot.lane.b32.xlu0 %v279, 16
    %v1055 = vpop.permute.xlu0 %1054
    %1056 = vrot.lane.b32.xlu0 %v280, 16
    %v1057 = vpop.permute.xlu0 %1056
    %1058 = vrot.lane.b32.xlu0 %v281, 16
    %v1059 = vpop.permute.xlu0 %1058
    %v1060 = vadd.f32 %v868, %v933
    %v1061 = vadd.f32 %v869, %v935
    %v1062 = vadd.f32 %v870, %v937
    %v1063 = vadd.f32 %v871, %v939
    %v1064 = vadd.f32 %v872, %v941
    %v1065 = vadd.f32 %v873, %v943
    %v1066 = vadd.f32 %v874, %v945
    %v1067 = vadd.f32 %v875, %v947
    %v1068 = vadd.f32 %v876, %v949
    %v1069 = vadd.f32 %v877, %v951
    %v1070 = vadd.f32 %v878, %v953
    %v1071 = vadd.f32 %v879, %v955
    %v1072 = vadd.f32 %v880, %v957
    %v1073 = vadd.f32 %v881, %v959
    %v1074 = vadd.f32 %v882, %v961
    %v1075 = vadd.f32 %v883, %v963
    %v1076 = vadd.f32 %v884, %v965
    %v1077 = vadd.f32 %v885, %v967
    %v1078 = vadd.f32 %v886, %v969
    %v1079 = vadd.f32 %v887, %v971
    %v1080 = vadd.f32 %v888, %v973
    %v1081 = vadd.f32 %v889, %v975
    %v1082 = vadd.f32 %v890, %v977
    %v1083 = vadd.f32 %v891, %v979
    %v1084 = vadd.f32 %v892, %v981
    %v1085 = vadd.f32 %v893, %v983
    %v1086 = vadd.f32 %v894, %v985
    %v1087 = vadd.f32 %v895, %v987
    %v1088 = vadd.f32 %v896, %v989
    %v1089 = vadd.f32 %v897, %v991
    %v1090 = vadd.f32 %v898, %v993
    %v1091 = vadd.f32 %v899, %v995
    %v1092 = vadd.f32 %v900, %v997
    %v1093 = vadd.f32 %v901, %v999
    %v1094 = vadd.f32 %v902, %v1001
    %v1095 = vadd.f32 %v903, %v1003
    %v1096 = vadd.f32 %v904, %v1005
    %v1097 = vadd.f32 %v905, %v1007
    %v1098 = vadd.f32 %v906, %v1009
    %v1099 = vadd.f32 %v907, %v1011
    %v1100 = vadd.f32 %v908, %v1013
    %v1101 = vadd.f32 %v909, %v1015
    %v1102 = vadd.f32 %v910, %v1017
    %v1103 = vadd.f32 %v911, %v1019
    %v1104 = vadd.f32 %v912, %v1021
    %v1105 = vadd.f32 %v913, %v1023
    %v1106 = vadd.f32 %v914, %v1025
    %v1107 = vadd.f32 %v915, %v1027
    %v1108 = vadd.f32 %v916, %v1029
    %v1109 = vadd.f32 %v917, %v1031
    %v1110 = vadd.f32 %v918, %v1033
    %v1111 = vadd.f32 %v919, %v1035
    %v1112 = vadd.f32 %v920, %v1037
    %v1113 = vadd.f32 %v921, %v1039
    %v1114 = vadd.f32 %v922, %v1041
    %v1115 = vadd.f32 %v923, %v1043
    %v1116 = vadd.f32 %v924, %v1045
    %v1117 = vadd.f32 %v925, %v1047
    %v1118 = vadd.f32 %v926, %v1049
    %v1119 = vadd.f32 %v927, %v1051
    %v1120 = vadd.f32 %v928, %v1053
    %v1121 = vadd.f32 %v929, %v1055
    %v1122 = vadd.f32 %v930, %v1057
    %v1123 = vadd.f32 %v931, %v1059
    %1124 = vrot.lane.b32.xlu0 %v286, 20
    %v1125 = vpop.permute.xlu0 %1124
    %1126 = vrot.lane.b32.xlu0 %v287, 20
    %v1127 = vpop.permute.xlu0 %1126
    %1128 = vrot.lane.b32.xlu0 %v288, 20
    %v1129 = vpop.permute.xlu0 %1128
    %1130 = vrot.lane.b32.xlu0 %v289, 20
    %v1131 = vpop.permute.xlu0 %1130
    %1132 = vrot.lane.b32.xlu0 %v290, 20
    %v1133 = vpop.permute.xlu0 %1132
    %1134 = vrot.lane.b32.xlu0 %v291, 20
    %v1135 = vpop.permute.xlu0 %1134
    %1136 = vrot.lane.b32.xlu0 %v292, 20
    %v1137 = vpop.permute.xlu0 %1136
    %1138 = vrot.lane.b32.xlu0 %v293, 20
    %v1139 = vpop.permute.xlu0 %1138
    %1140 = vrot.lane.b32.xlu0 %v294, 20
    %v1141 = vpop.permute.xlu0 %1140
    %1142 = vrot.lane.b32.xlu0 %v295, 20
    %v1143 = vpop.permute.xlu0 %1142
    %1144 = vrot.lane.b32.xlu0 %v296, 20
    %v1145 = vpop.permute.xlu0 %1144
    %1146 = vrot.lane.b32.xlu0 %v297, 20
    %v1147 = vpop.permute.xlu0 %1146
    %1148 = vrot.lane.b32.xlu0 %v298, 20
    %v1149 = vpop.permute.xlu0 %1148
    %1150 = vrot.lane.b32.xlu0 %v299, 20
    %v1151 = vpop.permute.xlu0 %1150
    %1152 = vrot.lane.b32.xlu0 %v300, 20
    %v1153 = vpop.permute.xlu0 %1152
    %1154 = vrot.lane.b32.xlu0 %v301, 20
    %v1155 = vpop.permute.xlu0 %1154
    %1156 = vrot.lane.b32.xlu0 %v302, 20
    %v1157 = vpop.permute.xlu0 %1156
    %1158 = vrot.lane.b32.xlu0 %v303, 20
    %v1159 = vpop.permute.xlu0 %1158
    %1160 = vrot.lane.b32.xlu0 %v304, 20
    %v1161 = vpop.permute.xlu0 %1160
    %1162 = vrot.lane.b32.xlu0 %v305, 20
    %v1163 = vpop.permute.xlu0 %1162
    %1164 = vrot.lane.b32.xlu0 %v306, 20
    %v1165 = vpop.permute.xlu0 %1164
    %1166 = vrot.lane.b32.xlu0 %v307, 20
    %v1167 = vpop.permute.xlu0 %1166
    %1168 = vrot.lane.b32.xlu0 %v308, 20
    %v1169 = vpop.permute.xlu0 %1168
    %1170 = vrot.lane.b32.xlu0 %v309, 20
    %v1171 = vpop.permute.xlu0 %1170
    %1172 = vrot.lane.b32.xlu0 %v310, 20
    %v1173 = vpop.permute.xlu0 %1172
    %1174 = vrot.lane.b32.xlu0 %v311, 20
    %v1175 = vpop.permute.xlu0 %1174
    %1176 = vrot.lane.b32.xlu0 %v312, 20
    %v1177 = vpop.permute.xlu0 %1176
    %1178 = vrot.lane.b32.xlu0 %v313, 20
    %v1179 = vpop.permute.xlu0 %1178
    %1180 = vrot.lane.b32.xlu0 %v314, 20
    %v1181 = vpop.permute.xlu0 %1180
    %1182 = vrot.lane.b32.xlu0 %v315, 20
    %v1183 = vpop.permute.xlu0 %1182
    %1184 = vrot.lane.b32.xlu0 %v316, 20
    %v1185 = vpop.permute.xlu0 %1184
    %1186 = vrot.lane.b32.xlu0 %v317, 20
    %v1187 = vpop.permute.xlu0 %1186
    %1188 = vrot.lane.b32.xlu0 %v322, 20
    %v1189 = vpop.permute.xlu0 %1188
    %1190 = vrot.lane.b32.xlu0 %v323, 20
    %v1191 = vpop.permute.xlu0 %1190
    %1192 = vrot.lane.b32.xlu0 %v324, 20
    %v1193 = vpop.permute.xlu0 %1192
    %1194 = vrot.lane.b32.xlu0 %v325, 20
    %v1195 = vpop.permute.xlu0 %1194
    %1196 = vrot.lane.b32.xlu0 %v326, 20
    %v1197 = vpop.permute.xlu0 %1196
    %1198 = vrot.lane.b32.xlu0 %v327, 20
    %v1199 = vpop.permute.xlu0 %1198
    %1200 = vrot.lane.b32.xlu0 %v328, 20
    %v1201 = vpop.permute.xlu0 %1200
    %1202 = vrot.lane.b32.xlu0 %v329, 20
    %v1203 = vpop.permute.xlu0 %1202
    %1204 = vrot.lane.b32.xlu0 %v330, 20
    %v1205 = vpop.permute.xlu0 %1204
    %1206 = vrot.lane.b32.xlu0 %v331, 20
    %v1207 = vpop.permute.xlu0 %1206
    %1208 = vrot.lane.b32.xlu0 %v332, 20
    %v1209 = vpop.permute.xlu0 %1208
    %1210 = vrot.lane.b32.xlu0 %v333, 20
    %v1211 = vpop.permute.xlu0 %1210
    %1212 = vrot.lane.b32.xlu0 %v334, 20
    %v1213 = vpop.permute.xlu0 %1212
    %1214 = vrot.lane.b32.xlu0 %v335, 20
    %v1215 = vpop.permute.xlu0 %1214
    %1216 = vrot.lane.b32.xlu0 %v336, 20
    %v1217 = vpop.permute.xlu0 %1216
    %1218 = vrot.lane.b32.xlu0 %v337, 20
    %v1219 = vpop.permute.xlu0 %1218
    %1220 = vrot.lane.b32.xlu0 %v338, 20
    %v1221 = vpop.permute.xlu0 %1220
    %1222 = vrot.lane.b32.xlu0 %v339, 20
    %v1223 = vpop.permute.xlu0 %1222
    %1224 = vrot.lane.b32.xlu0 %v340, 20
    %v1225 = vpop.permute.xlu0 %1224
    %1226 = vrot.lane.b32.xlu0 %v341, 20
    %v1227 = vpop.permute.xlu0 %1226
    %1228 = vrot.lane.b32.xlu0 %v342, 20
    %v1229 = vpop.permute.xlu0 %1228
    %1230 = vrot.lane.b32.xlu0 %v343, 20
    %v1231 = vpop.permute.xlu0 %1230
    %1232 = vrot.lane.b32.xlu0 %v344, 20
    %v1233 = vpop.permute.xlu0 %1232
    %1234 = vrot.lane.b32.xlu0 %v345, 20
    %v1235 = vpop.permute.xlu0 %1234
    %1236 = vrot.lane.b32.xlu0 %v346, 20
    %v1237 = vpop.permute.xlu0 %1236
    %1238 = vrot.lane.b32.xlu0 %v347, 20
    %v1239 = vpop.permute.xlu0 %1238
    %1240 = vrot.lane.b32.xlu0 %v348, 20
    %v1241 = vpop.permute.xlu0 %1240
    %1242 = vrot.lane.b32.xlu0 %v349, 20
    %v1243 = vpop.permute.xlu0 %1242
    %1244 = vrot.lane.b32.xlu0 %v350, 20
    %v1245 = vpop.permute.xlu0 %1244
    %1246 = vrot.lane.b32.xlu0 %v351, 20
    %v1247 = vpop.permute.xlu0 %1246
    %1248 = vrot.lane.b32.xlu0 %v352, 20
    %v1249 = vpop.permute.xlu0 %1248
    %1250 = vrot.lane.b32.xlu0 %v353, 20
    %v1251 = vpop.permute.xlu0 %1250
    %v1252 = vadd.f32 %v1060, %v1125
    %v1253 = vadd.f32 %v1061, %v1127
    %v1254 = vadd.f32 %v1062, %v1129
    %v1255 = vadd.f32 %v1063, %v1131
    %v1256 = vadd.f32 %v1064, %v1133
    %v1257 = vadd.f32 %v1065, %v1135
    %v1258 = vadd.f32 %v1066, %v1137
    %v1259 = vadd.f32 %v1067, %v1139
    %v1260 = vadd.f32 %v1068, %v1141
    %v1261 = vadd.f32 %v1069, %v1143
    %v1262 = vadd.f32 %v1070, %v1145
    %v1263 = vadd.f32 %v1071, %v1147
    %v1264 = vadd.f32 %v1072, %v1149
    %v1265 = vadd.f32 %v1073, %v1151
    %v1266 = vadd.f32 %v1074, %v1153
    %v1267 = vadd.f32 %v1075, %v1155
    %v1268 = vadd.f32 %v1076, %v1157
    %v1269 = vadd.f32 %v1077, %v1159
    %v1270 = vadd.f32 %v1078, %v1161
    %v1271 = vadd.f32 %v1079, %v1163
    %v1272 = vadd.f32 %v1080, %v1165
    %v1273 = vadd.f32 %v1081, %v1167
    %v1274 = vadd.f32 %v1082, %v1169
    %v1275 = vadd.f32 %v1083, %v1171
    %v1276 = vadd.f32 %v1084, %v1173
    %v1277 = vadd.f32 %v1085, %v1175
    %v1278 = vadd.f32 %v1086, %v1177
    %v1279 = vadd.f32 %v1087, %v1179
    %v1280 = vadd.f32 %v1088, %v1181
    %v1281 = vadd.f32 %v1089, %v1183
    %v1282 = vadd.f32 %v1090, %v1185
    %v1283 = vadd.f32 %v1091, %v1187
    %v1284 = vadd.f32 %v1092, %v1189
    %v1285 = vadd.f32 %v1093, %v1191
    %v1286 = vadd.f32 %v1094, %v1193
    %v1287 = vadd.f32 %v1095, %v1195
    %v1288 = vadd.f32 %v1096, %v1197
    %v1289 = vadd.f32 %v1097, %v1199
    %v1290 = vadd.f32 %v1098, %v1201
    %v1291 = vadd.f32 %v1099, %v1203
    %v1292 = vadd.f32 %v1100, %v1205
    %v1293 = vadd.f32 %v1101, %v1207
    %v1294 = vadd.f32 %v1102, %v1209
    %v1295 = vadd.f32 %v1103, %v1211
    %v1296 = vadd.f32 %v1104, %v1213
    %v1297 = vadd.f32 %v1105, %v1215
    %v1298 = vadd.f32 %v1106, %v1217
    %v1299 = vadd.f32 %v1107, %v1219
    %v1300 = vadd.f32 %v1108, %v1221
    %v1301 = vadd.f32 %v1109, %v1223
    %v1302 = vadd.f32 %v1110, %v1225
    %v1303 = vadd.f32 %v1111, %v1227
    %v1304 = vadd.f32 %v1112, %v1229
    %v1305 = vadd.f32 %v1113, %v1231
    %v1306 = vadd.f32 %v1114, %v1233
    %v1307 = vadd.f32 %v1115, %v1235
    %v1308 = vadd.f32 %v1116, %v1237
    %v1309 = vadd.f32 %v1117, %v1239
    %v1310 = vadd.f32 %v1118, %v1241
    %v1311 = vadd.f32 %v1119, %v1243
    %v1312 = vadd.f32 %v1120, %v1245
    %v1313 = vadd.f32 %v1121, %v1247
    %v1314 = vadd.f32 %v1122, %v1249
    %v1315 = vadd.f32 %v1123, %v1251
    %1316 = vrot.lane.b32.xlu0 %v144, 24
    %v1317 = vpop.permute.xlu0 %1316
    %1318 = vrot.lane.b32.xlu0 %v145, 24
    %v1319 = vpop.permute.xlu0 %1318
    %1320 = vrot.lane.b32.xlu0 %v146, 24
    %v1321 = vpop.permute.xlu0 %1320
    %1322 = vrot.lane.b32.xlu0 %v147, 24
    %v1323 = vpop.permute.xlu0 %1322
    %1324 = vrot.lane.b32.xlu0 %v148, 24
    %v1325 = vpop.permute.xlu0 %1324
    %1326 = vrot.lane.b32.xlu0 %v149, 24
    %v1327 = vpop.permute.xlu0 %1326
    %1328 = vrot.lane.b32.xlu0 %v150, 24
    %v1329 = vpop.permute.xlu0 %1328
    %1330 = vrot.lane.b32.xlu0 %v151, 24
    %v1331 = vpop.permute.xlu0 %1330
    %1332 = vrot.lane.b32.xlu0 %v152, 24
    %v1333 = vpop.permute.xlu0 %1332
    %1334 = vrot.lane.b32.xlu0 %v153, 24
    %v1335 = vpop.permute.xlu0 %1334
    %1336 = vrot.lane.b32.xlu0 %v154, 24
    %v1337 = vpop.permute.xlu0 %1336
    %1338 = vrot.lane.b32.xlu0 %v155, 24
    %v1339 = vpop.permute.xlu0 %1338
    %1340 = vrot.lane.b32.xlu0 %v156, 24
    %v1341 = vpop.permute.xlu0 %1340
    %1342 = vrot.lane.b32.xlu0 %v157, 24
    %v1343 = vpop.permute.xlu0 %1342
    %1344 = vrot.lane.b32.xlu0 %v158, 24
    %v1345 = vpop.permute.xlu0 %1344
    %1346 = vrot.lane.b32.xlu0 %v159, 24
    %v1347 = vpop.permute.xlu0 %1346
    %1348 = vrot.lane.b32.xlu0 %v160, 24
    %v1349 = vpop.permute.xlu0 %1348
    %1350 = vrot.lane.b32.xlu0 %v161, 24
    %v1351 = vpop.permute.xlu0 %1350
    %1352 = vrot.lane.b32.xlu0 %v162, 24
    %v1353 = vpop.permute.xlu0 %1352
    %1354 = vrot.lane.b32.xlu0 %v163, 24
    %v1355 = vpop.permute.xlu0 %1354
    %1356 = vrot.lane.b32.xlu0 %v164, 24
    %v1357 = vpop.permute.xlu0 %1356
    %1358 = vrot.lane.b32.xlu0 %v165, 24
    %v1359 = vpop.permute.xlu0 %1358
    %1360 = vrot.lane.b32.xlu0 %v166, 24
    %v1361 = vpop.permute.xlu0 %1360
    %1362 = vrot.lane.b32.xlu0 %v167, 24
    %v1363 = vpop.permute.xlu0 %1362
    %1364 = vrot.lane.b32.xlu0 %v168, 24
    %v1365 = vpop.permute.xlu0 %1364
    %1366 = vrot.lane.b32.xlu0 %v169, 24
    %v1367 = vpop.permute.xlu0 %1366
    %1368 = vrot.lane.b32.xlu0 %v170, 24
    %v1369 = vpop.permute.xlu0 %1368
    %1370 = vrot.lane.b32.xlu0 %v171, 24
    %v1371 = vpop.permute.xlu0 %1370
    %1372 = vrot.lane.b32.xlu0 %v172, 24
    %v1373 = vpop.permute.xlu0 %1372
    %1374 = vrot.lane.b32.xlu0 %v173, 24
    %v1375 = vpop.permute.xlu0 %1374
    %1376 = vrot.lane.b32.xlu0 %v174, 24
    %v1377 = vpop.permute.xlu0 %1376
    %1378 = vrot.lane.b32.xlu0 %v175, 24
    %v1379 = vpop.permute.xlu0 %1378
    %1380 = vrot.lane.b32.xlu0 %v180, 24
    %v1381 = vpop.permute.xlu0 %1380
    %1382 = vrot.lane.b32.xlu0 %v181, 24
    %v1383 = vpop.permute.xlu0 %1382
    %1384 = vrot.lane.b32.xlu0 %v182, 24
    %v1385 = vpop.permute.xlu0 %1384
    %1386 = vrot.lane.b32.xlu0 %v183, 24
    %v1387 = vpop.permute.xlu0 %1386
    %1388 = vrot.lane.b32.xlu0 %v184, 24
    %v1389 = vpop.permute.xlu0 %1388
    %1390 = vrot.lane.b32.xlu0 %v185, 24
    %v1391 = vpop.permute.xlu0 %1390
    %1392 = vrot.lane.b32.xlu0 %v186, 24
    %v1393 = vpop.permute.xlu0 %1392
    %1394 = vrot.lane.b32.xlu0 %v187, 24
    %v1395 = vpop.permute.xlu0 %1394
    %1396 = vrot.lane.b32.xlu0 %v188, 24
    %v1397 = vpop.permute.xlu0 %1396
    %1398 = vrot.lane.b32.xlu0 %v189, 24
    %v1399 = vpop.permute.xlu0 %1398
    %1400 = vrot.lane.b32.xlu0 %v190, 24
    %v1401 = vpop.permute.xlu0 %1400
    %1402 = vrot.lane.b32.xlu0 %v191, 24
    %v1403 = vpop.permute.xlu0 %1402
    %1404 = vrot.lane.b32.xlu0 %v192, 24
    %v1405 = vpop.permute.xlu0 %1404
    %1406 = vrot.lane.b32.xlu0 %v193, 24
    %v1407 = vpop.permute.xlu0 %1406
    %1408 = vrot.lane.b32.xlu0 %v194, 24
    %v1409 = vpop.permute.xlu0 %1408
    %1410 = vrot.lane.b32.xlu0 %v195, 24
    %v1411 = vpop.permute.xlu0 %1410
    %1412 = vrot.lane.b32.xlu0 %v196, 24
    %v1413 = vpop.permute.xlu0 %1412
    %1414 = vrot.lane.b32.xlu0 %v197, 24
    %v1415 = vpop.permute.xlu0 %1414
    %1416 = vrot.lane.b32.xlu0 %v198, 24
    %v1417 = vpop.permute.xlu0 %1416
    %1418 = vrot.lane.b32.xlu0 %v199, 24
    %v1419 = vpop.permute.xlu0 %1418
    %1420 = vrot.lane.b32.xlu0 %v200, 24
    %v1421 = vpop.permute.xlu0 %1420
    %1422 = vrot.lane.b32.xlu0 %v201, 24
    %v1423 = vpop.permute.xlu0 %1422
    %1424 = vrot.lane.b32.xlu0 %v202, 24
    %v1425 = vpop.permute.xlu0 %1424
    %1426 = vrot.lane.b32.xlu0 %v203, 24
    %v1427 = vpop.permute.xlu0 %1426
    %1428 = vrot.lane.b32.xlu0 %v204, 24
    %v1429 = vpop.permute.xlu0 %1428
    %1430 = vrot.lane.b32.xlu0 %v205, 24
    %v1431 = vpop.permute.xlu0 %1430
    %1432 = vrot.lane.b32.xlu0 %v206, 24
    %v1433 = vpop.permute.xlu0 %1432
    %1434 = vrot.lane.b32.xlu0 %v207, 24
    %v1435 = vpop.permute.xlu0 %1434
    %1436 = vrot.lane.b32.xlu0 %v208, 24
    %v1437 = vpop.permute.xlu0 %1436
    %1438 = vrot.lane.b32.xlu0 %v209, 24
    %v1439 = vpop.permute.xlu0 %1438
    %1440 = vrot.lane.b32.xlu0 %v210, 24
    %v1441 = vpop.permute.xlu0 %1440
    %1442 = vrot.lane.b32.xlu0 %v211, 24
    %v1443 = vpop.permute.xlu0 %1442
    %v1444 = vadd.f32 %v1252, %v1317
    %v1445 = vadd.f32 %v1253, %v1319
    %v1446 = vadd.f32 %v1254, %v1321
    %v1447 = vadd.f32 %v1255, %v1323
    %v1448 = vadd.f32 %v1256, %v1325
    %v1449 = vadd.f32 %v1257, %v1327
    %v1450 = vadd.f32 %v1258, %v1329
    %v1451 = vadd.f32 %v1259, %v1331
    %v1452 = vadd.f32 %v1260, %v1333
    %v1453 = vadd.f32 %v1261, %v1335
    %v1454 = vadd.f32 %v1262, %v1337
    %v1455 = vadd.f32 %v1263, %v1339
    %v1456 = vadd.f32 %v1264, %v1341
    %v1457 = vadd.f32 %v1265, %v1343
    %v1458 = vadd.f32 %v1266, %v1345
    %v1459 = vadd.f32 %v1267, %v1347
    %v1460 = vadd.f32 %v1268, %v1349
    %v1461 = vadd.f32 %v1269, %v1351
    %v1462 = vadd.f32 %v1270, %v1353
    %v1463 = vadd.f32 %v1271, %v1355
    %v1464 = vadd.f32 %v1272, %v1357
    %v1465 = vadd.f32 %v1273, %v1359
    %v1466 = vadd.f32 %v1274, %v1361
    %v1467 = vadd.f32 %v1275, %v1363
    %v1468 = vadd.f32 %v1276, %v1365
    %v1469 = vadd.f32 %v1277, %v1367
    %v1470 = vadd.f32 %v1278, %v1369
    %v1471 = vadd.f32 %v1279, %v1371
    %v1472 = vadd.f32 %v1280, %v1373
    %v1473 = vadd.f32 %v1281, %v1375
    %v1474 = vadd.f32 %v1282, %v1377
    %v1475 = vadd.f32 %v1283, %v1379
    %v1476 = vadd.f32 %v1284, %v1381
    %v1477 = vadd.f32 %v1285, %v1383
    %v1478 = vadd.f32 %v1286, %v1385
    %v1479 = vadd.f32 %v1287, %v1387
    %v1480 = vadd.f32 %v1288, %v1389
    %v1481 = vadd.f32 %v1289, %v1391
    %v1482 = vadd.f32 %v1290, %v1393
    %v1483 = vadd.f32 %v1291, %v1395
    %v1484 = vadd.f32 %v1292, %v1397
    %v1485 = vadd.f32 %v1293, %v1399
    %v1486 = vadd.f32 %v1294, %v1401
    %v1487 = vadd.f32 %v1295, %v1403
    %v1488 = vadd.f32 %v1296, %v1405
    %v1489 = vadd.f32 %v1297, %v1407
    %v1490 = vadd.f32 %v1298, %v1409
    %v1491 = vadd.f32 %v1299, %v1411
    %v1492 = vadd.f32 %v1300, %v1413
    %v1493 = vadd.f32 %v1301, %v1415
    %v1494 = vadd.f32 %v1302, %v1417
    %v1495 = vadd.f32 %v1303, %v1419
    %v1496 = vadd.f32 %v1304, %v1421
    %v1497 = vadd.f32 %v1305, %v1423
    %v1498 = vadd.f32 %v1306, %v1425
    %v1499 = vadd.f32 %v1307, %v1427
    %v1500 = vadd.f32 %v1308, %v1429
    %v1501 = vadd.f32 %v1309, %v1431
    %v1502 = vadd.f32 %v1310, %v1433
    %v1503 = vadd.f32 %v1311, %v1435
    %v1504 = vadd.f32 %v1312, %v1437
    %v1505 = vadd.f32 %v1313, %v1439
    %v1506 = vadd.f32 %v1314, %v1441
    %v1507 = vadd.f32 %v1315, %v1443
    %1508 = vrot.lane.b32.xlu0 %v216, 28
    %v1509 = vpop.permute.xlu0 %1508
    %1510 = vrot.lane.b32.xlu0 %v217, 28
    %v1511 = vpop.permute.xlu0 %1510
    %1512 = vrot.lane.b32.xlu0 %v218, 28
    %v1513 = vpop.permute.xlu0 %1512
    %1514 = vrot.lane.b32.xlu0 %v219, 28
    %v1515 = vpop.permute.xlu0 %1514
    %1516 = vrot.lane.b32.xlu0 %v220, 28
    %v1517 = vpop.permute.xlu0 %1516
    %1518 = vrot.lane.b32.xlu0 %v221, 28
    %v1519 = vpop.permute.xlu0 %1518
    %1520 = vrot.lane.b32.xlu0 %v222, 28
    %v1521 = vpop.permute.xlu0 %1520
    %1522 = vrot.lane.b32.xlu0 %v223, 28
    %v1523 = vpop.permute.xlu0 %1522
    %1524 = vrot.lane.b32.xlu0 %v224, 28
    %v1525 = vpop.permute.xlu0 %1524
    %1526 = vrot.lane.b32.xlu0 %v225, 28
    %v1527 = vpop.permute.xlu0 %1526
    %1528 = vrot.lane.b32.xlu0 %v226, 28
    %v1529 = vpop.permute.xlu0 %1528
    %1530 = vrot.lane.b32.xlu0 %v227, 28
    %v1531 = vpop.permute.xlu0 %1530
    %1532 = vrot.lane.b32.xlu0 %v228, 28
    %v1533 = vpop.permute.xlu0 %1532
    %1534 = vrot.lane.b32.xlu0 %v229, 28
    %v1535 = vpop.permute.xlu0 %1534
    %1536 = vrot.lane.b32.xlu0 %v230, 28
    %v1537 = vpop.permute.xlu0 %1536
    %1538 = vrot.lane.b32.xlu0 %v231, 28
    %v1539 = vpop.permute.xlu0 %1538
    %1540 = vrot.lane.b32.xlu0 %v232, 28
    %v1541 = vpop.permute.xlu0 %1540
    %1542 = vrot.lane.b32.xlu0 %v233, 28
    %v1543 = vpop.permute.xlu0 %1542
    %1544 = vrot.lane.b32.xlu0 %v234, 28
    %v1545 = vpop.permute.xlu0 %1544
    %1546 = vrot.lane.b32.xlu0 %v235, 28
    %v1547 = vpop.permute.xlu0 %1546
    %1548 = vrot.lane.b32.xlu0 %v236, 28
    %v1549 = vpop.permute.xlu0 %1548
    %1550 = vrot.lane.b32.xlu0 %v237, 28
    %v1551 = vpop.permute.xlu0 %1550
    %1552 = vrot.lane.b32.xlu0 %v238, 28
    %v1553 = vpop.permute.xlu0 %1552
    %1554 = vrot.lane.b32.xlu0 %v239, 28
    %v1555 = vpop.permute.xlu0 %1554
    %1556 = vrot.lane.b32.xlu0 %v240, 28
    %v1557 = vpop.permute.xlu0 %1556
    %1558 = vrot.lane.b32.xlu0 %v241, 28
    %v1559 = vpop.permute.xlu0 %1558
    %1560 = vrot.lane.b32.xlu0 %v242, 28
    %v1561 = vpop.permute.xlu0 %1560
    %1562 = vrot.lane.b32.xlu0 %v243, 28
    %v1563 = vpop.permute.xlu0 %1562
    %1564 = vrot.lane.b32.xlu0 %v244, 28
    %v1565 = vpop.permute.xlu0 %1564
    %1566 = vrot.lane.b32.xlu0 %v245, 28
    %v1567 = vpop.permute.xlu0 %1566
    %1568 = vrot.lane.b32.xlu0 %v246, 28
    %v1569 = vpop.permute.xlu0 %1568
    %1570 = vrot.lane.b32.xlu0 %v247, 28
    %v1571 = vpop.permute.xlu0 %1570
    %1572 = vrot.lane.b32.xlu0 %v252, 28
    %v1573 = vpop.permute.xlu0 %1572
    %1574 = vrot.lane.b32.xlu0 %v253, 28
    %v1575 = vpop.permute.xlu0 %1574
    %1576 = vrot.lane.b32.xlu0 %v254, 28
    %v1577 = vpop.permute.xlu0 %1576
    %1578 = vrot.lane.b32.xlu0 %v255, 28
    %v1579 = vpop.permute.xlu0 %1578
    %1580 = vrot.lane.b32.xlu0 %v256, 28
    %v1581 = vpop.permute.xlu0 %1580
    %1582 = vrot.lane.b32.xlu0 %v257, 28
    %v1583 = vpop.permute.xlu0 %1582
    %1584 = vrot.lane.b32.xlu0 %v258, 28
    %v1585 = vpop.permute.xlu0 %1584
    %1586 = vrot.lane.b32.xlu0 %v259, 28
    %v1587 = vpop.permute.xlu0 %1586
    %1588 = vrot.lane.b32.xlu0 %v260, 28
    %v1589 = vpop.permute.xlu0 %1588
    %1590 = vrot.lane.b32.xlu0 %v261, 28
    %v1591 = vpop.permute.xlu0 %1590
    %1592 = vrot.lane.b32.xlu0 %v262, 28
    %v1593 = vpop.permute.xlu0 %1592
    %1594 = vrot.lane.b32.xlu0 %v263, 28
    %v1595 = vpop.permute.xlu0 %1594
    %1596 = vrot.lane.b32.xlu0 %v264, 28
    %v1597 = vpop.permute.xlu0 %1596
    %1598 = vrot.lane.b32.xlu0 %v265, 28
    %v1599 = vpop.permute.xlu0 %1598
    %1600 = vrot.lane.b32.xlu0 %v266, 28
    %v1601 = vpop.permute.xlu0 %1600
    %1602 = vrot.lane.b32.xlu0 %v267, 28
    %v1603 = vpop.permute.xlu0 %1602
    %1604 = vrot.lane.b32.xlu0 %v268, 28
    %v1605 = vpop.permute.xlu0 %1604
    %1606 = vrot.lane.b32.xlu0 %v269, 28
    %v1607 = vpop.permute.xlu0 %1606
    %1608 = vrot.lane.b32.xlu0 %v270, 28
    %v1609 = vpop.permute.xlu0 %1608
    %1610 = vrot.lane.b32.xlu0 %v271, 28
    %v1611 = vpop.permute.xlu0 %1610
    %1612 = vrot.lane.b32.xlu0 %v272, 28
    %v1613 = vpop.permute.xlu0 %1612
    %1614 = vrot.lane.b32.xlu0 %v273, 28
    %v1615 = vpop.permute.xlu0 %1614
    %1616 = vrot.lane.b32.xlu0 %v274, 28
    %v1617 = vpop.permute.xlu0 %1616
    %1618 = vrot.lane.b32.xlu0 %v275, 28
    %v1619 = vpop.permute.xlu0 %1618
    %1620 = vrot.lane.b32.xlu0 %v276, 28
    %v1621 = vpop.permute.xlu0 %1620
    %1622 = vrot.lane.b32.xlu0 %v277, 28
    %v1623 = vpop.permute.xlu0 %1622
    %1624 = vrot.lane.b32.xlu0 %v278, 28
    %v1625 = vpop.permute.xlu0 %1624
    %1626 = vrot.lane.b32.xlu0 %v279, 28
    %v1627 = vpop.permute.xlu0 %1626
    %1628 = vrot.lane.b32.xlu0 %v280, 28
    %v1629 = vpop.permute.xlu0 %1628
    %1630 = vrot.lane.b32.xlu0 %v281, 28
    %v1631 = vpop.permute.xlu0 %1630
    %1632 = vrot.lane.b32.xlu0 %v282, 28
    %v1633 = vpop.permute.xlu0 %1632
    %1634 = vrot.lane.b32.xlu0 %v283, 28
    %v1635 = vpop.permute.xlu0 %1634
    %v1636 = vadd.f32 %v1444, %v1509
    %v1637 = vadd.f32 %v1445, %v1511
    %v1638 = vadd.f32 %v1446, %v1513
    %v1639 = vadd.f32 %v1447, %v1515
    %v1640 = vadd.f32 %v1448, %v1517
    %v1641 = vadd.f32 %v1449, %v1519
    %v1642 = vadd.f32 %v1450, %v1521
    %v1643 = vadd.f32 %v1451, %v1523
    %v1644 = vadd.f32 %v1452, %v1525
    %v1645 = vadd.f32 %v1453, %v1527
    %v1646 = vadd.f32 %v1454, %v1529
    %v1647 = vadd.f32 %v1455, %v1531
    %v1648 = vadd.f32 %v1456, %v1533
    %v1649 = vadd.f32 %v1457, %v1535
    %v1650 = vadd.f32 %v1458, %v1537
    %v1651 = vadd.f32 %v1459, %v1539
    %v1652 = vadd.f32 %v1460, %v1541
    %v1653 = vadd.f32 %v1461, %v1543
    %v1654 = vadd.f32 %v1462, %v1545
    %v1655 = vadd.f32 %v1463, %v1547
    %v1656 = vadd.f32 %v1464, %v1549
    %v1657 = vadd.f32 %v1465, %v1551
    %v1658 = vadd.f32 %v1466, %v1553
    %v1659 = vadd.f32 %v1467, %v1555
    %v1660 = vadd.f32 %v1468, %v1557
    %v1661 = vadd.f32 %v1469, %v1559
    %v1662 = vadd.f32 %v1470, %v1561
    %v1663 = vadd.f32 %v1471, %v1563
    %v1664 = vadd.f32 %v1472, %v1565
    %v1665 = vadd.f32 %v1473, %v1567
    %v1666 = vadd.f32 %v1474, %v1569
    %v1667 = vadd.f32 %v1475, %v1571
    %v1668 = vadd.f32 %v1476, %v1573
    %v1669 = vadd.f32 %v1477, %v1575
    %v1670 = vadd.f32 %v1478, %v1577
    %v1671 = vadd.f32 %v1479, %v1579
    %v1672 = vadd.f32 %v1480, %v1581
    %v1673 = vadd.f32 %v1481, %v1583
    %v1674 = vadd.f32 %v1482, %v1585
    %v1675 = vadd.f32 %v1483, %v1587
    %v1676 = vadd.f32 %v1484, %v1589
    %v1677 = vadd.f32 %v1485, %v1591
    %v1678 = vadd.f32 %v1486, %v1593
    %v1679 = vadd.f32 %v1487, %v1595
    %v1680 = vadd.f32 %v1488, %v1597
    %v1681 = vadd.f32 %v1489, %v1599
    %v1682 = vadd.f32 %v1490, %v1601
    %v1683 = vadd.f32 %v1491, %v1603
    %v1684 = vadd.f32 %v1492, %v1605
    %v1685 = vadd.f32 %v1493, %v1607
    %v1686 = vadd.f32 %v1494, %v1609
    %v1687 = vadd.f32 %v1495, %v1611
    %v1688 = vadd.f32 %v1496, %v1613
    %v1689 = vadd.f32 %v1497, %v1615
    %v1690 = vadd.f32 %v1498, %v1617
    %v1691 = vadd.f32 %v1499, %v1619
    %v1692 = vadd.f32 %v1500, %v1621
    %v1693 = vadd.f32 %v1501, %v1623
    %v1694 = vadd.f32 %v1502, %v1625
    %v1695 = vadd.f32 %v1503, %v1627
    %v1696 = vadd.f32 %v1504, %v1629
    %v1697 = vadd.f32 %v1505, %v1631
    %v1698 = vadd.f32 %v1506, %v1633
    %v1699 = vadd.f32 %v1507, %v1635
    %1700 = vrot.lane.b32.xlu0 %v288, 32
    %v1701 = vpop.permute.xlu0 %1700
    %1702 = vrot.lane.b32.xlu0 %v289, 32
    %v1703 = vpop.permute.xlu0 %1702
    %1704 = vrot.lane.b32.xlu0 %v290, 32
    %v1705 = vpop.permute.xlu0 %1704
    %1706 = vrot.lane.b32.xlu0 %v291, 32
    %v1707 = vpop.permute.xlu0 %1706
    %1708 = vrot.lane.b32.xlu0 %v292, 32
    %v1709 = vpop.permute.xlu0 %1708
    %1710 = vrot.lane.b32.xlu0 %v293, 32
    %v1711 = vpop.permute.xlu0 %1710
    %1712 = vrot.lane.b32.xlu0 %v294, 32
    %v1713 = vpop.permute.xlu0 %1712
    %1714 = vrot.lane.b32.xlu0 %v295, 32
    %v1715 = vpop.permute.xlu0 %1714
    %1716 = vrot.lane.b32.xlu0 %v296, 32
    %v1717 = vpop.permute.xlu0 %1716
    %1718 = vrot.lane.b32.xlu0 %v297, 32
    %v1719 = vpop.permute.xlu0 %1718
    %1720 = vrot.lane.b32.xlu0 %v298, 32
    %v1721 = vpop.permute.xlu0 %1720
    %1722 = vrot.lane.b32.xlu0 %v299, 32
    %v1723 = vpop.permute.xlu0 %1722
    %1724 = vrot.lane.b32.xlu0 %v300, 32
    %v1725 = vpop.permute.xlu0 %1724
    %1726 = vrot.lane.b32.xlu0 %v301, 32
    %v1727 = vpop.permute.xlu0 %1726
    %1728 = vrot.lane.b32.xlu0 %v302, 32
    %v1729 = vpop.permute.xlu0 %1728
    %1730 = vrot.lane.b32.xlu0 %v303, 32
    %v1731 = vpop.permute.xlu0 %1730
    %1732 = vrot.lane.b32.xlu0 %v304, 32
    %v1733 = vpop.permute.xlu0 %1732
    %1734 = vrot.lane.b32.xlu0 %v305, 32
    %v1735 = vpop.permute.xlu0 %1734
    %1736 = vrot.lane.b32.xlu0 %v306, 32
    %v1737 = vpop.permute.xlu0 %1736
    %1738 = vrot.lane.b32.xlu0 %v307, 32
    %v1739 = vpop.permute.xlu0 %1738
    %1740 = vrot.lane.b32.xlu0 %v308, 32
    %v1741 = vpop.permute.xlu0 %1740
    %1742 = vrot.lane.b32.xlu0 %v309, 32
    %v1743 = vpop.permute.xlu0 %1742
    %1744 = vrot.lane.b32.xlu0 %v310, 32
    %v1745 = vpop.permute.xlu0 %1744
    %1746 = vrot.lane.b32.xlu0 %v311, 32
    %v1747 = vpop.permute.xlu0 %1746
    %1748 = vrot.lane.b32.xlu0 %v312, 32
    %v1749 = vpop.permute.xlu0 %1748
    %1750 = vrot.lane.b32.xlu0 %v313, 32
    %v1751 = vpop.permute.xlu0 %1750
    %1752 = vrot.lane.b32.xlu0 %v314, 32
    %v1753 = vpop.permute.xlu0 %1752
    %1754 = vrot.lane.b32.xlu0 %v315, 32
    %v1755 = vpop.permute.xlu0 %1754
    %1756 = vrot.lane.b32.xlu0 %v316, 32
    %v1757 = vpop.permute.xlu0 %1756
    %1758 = vrot.lane.b32.xlu0 %v317, 32
    %v1759 = vpop.permute.xlu0 %1758
    %1760 = vrot.lane.b32.xlu0 %v318, 32
    %v1761 = vpop.permute.xlu0 %1760
    %1762 = vrot.lane.b32.xlu0 %v319, 32
    %v1763 = vpop.permute.xlu0 %1762
    %1764 = vrot.lane.b32.xlu0 %v324, 32
    %v1765 = vpop.permute.xlu0 %1764
    %1766 = vrot.lane.b32.xlu0 %v325, 32
    %v1767 = vpop.permute.xlu0 %1766
    %1768 = vrot.lane.b32.xlu0 %v326, 32
    %v1769 = vpop.permute.xlu0 %1768
    %1770 = vrot.lane.b32.xlu0 %v327, 32
    %v1771 = vpop.permute.xlu0 %1770
    %1772 = vrot.lane.b32.xlu0 %v328, 32
    %v1773 = vpop.permute.xlu0 %1772
    %1774 = vrot.lane.b32.xlu0 %v329, 32
    %v1775 = vpop.permute.xlu0 %1774
    %1776 = vrot.lane.b32.xlu0 %v330, 32
    %v1777 = vpop.permute.xlu0 %1776
    %1778 = vrot.lane.b32.xlu0 %v331, 32
    %v1779 = vpop.permute.xlu0 %1778
    %1780 = vrot.lane.b32.xlu0 %v332, 32
    %v1781 = vpop.permute.xlu0 %1780
    %1782 = vrot.lane.b32.xlu0 %v333, 32
    %v1783 = vpop.permute.xlu0 %1782
    %1784 = vrot.lane.b32.xlu0 %v334, 32
    %v1785 = vpop.permute.xlu0 %1784
    %1786 = vrot.lane.b32.xlu0 %v335, 32
    %v1787 = vpop.permute.xlu0 %1786
    %1788 = vrot.lane.b32.xlu0 %v336, 32
    %v1789 = vpop.permute.xlu0 %1788
    %1790 = vrot.lane.b32.xlu0 %v337, 32
    %v1791 = vpop.permute.xlu0 %1790
    %1792 = vrot.lane.b32.xlu0 %v338, 32
    %v1793 = vpop.permute.xlu0 %1792
    %1794 = vrot.lane.b32.xlu0 %v339, 32
    %v1795 = vpop.permute.xlu0 %1794
    %1796 = vrot.lane.b32.xlu0 %v340, 32
    %v1797 = vpop.permute.xlu0 %1796
    %1798 = vrot.lane.b32.xlu0 %v341, 32
    %v1799 = vpop.permute.xlu0 %1798
    %1800 = vrot.lane.b32.xlu0 %v342, 32
    %v1801 = vpop.permute.xlu0 %1800
    %1802 = vrot.lane.b32.xlu0 %v343, 32
    %v1803 = vpop.permute.xlu0 %1802
    %1804 = vrot.lane.b32.xlu0 %v344, 32
    %v1805 = vpop.permute.xlu0 %1804
    %1806 = vrot.lane.b32.xlu0 %v345, 32
    %v1807 = vpop.permute.xlu0 %1806
    %1808 = vrot.lane.b32.xlu0 %v346, 32
    %v1809 = vpop.permute.xlu0 %1808
    %1810 = vrot.lane.b32.xlu0 %v347, 32
    %v1811 = vpop.permute.xlu0 %1810
    %1812 = vrot.lane.b32.xlu0 %v348, 32
    %v1813 = vpop.permute.xlu0 %1812
    %1814 = vrot.lane.b32.xlu0 %v349, 32
    %v1815 = vpop.permute.xlu0 %1814
    %1816 = vrot.lane.b32.xlu0 %v350, 32
    %v1817 = vpop.permute.xlu0 %1816
    %1818 = vrot.lane.b32.xlu0 %v351, 32
    %v1819 = vpop.permute.xlu0 %1818
    %1820 = vrot.lane.b32.xlu0 %v352, 32
    %v1821 = vpop.permute.xlu0 %1820
    %1822 = vrot.lane.b32.xlu0 %v353, 32
    %v1823 = vpop.permute.xlu0 %1822
    %1824 = vrot.lane.b32.xlu0 %v354, 32
    %v1825 = vpop.permute.xlu0 %1824
    %1826 = vrot.lane.b32.xlu0 %v355, 32
    %v1827 = vpop.permute.xlu0 %1826
    %v1828 = vadd.f32 %v1636, %v1701
    %v1829 = vadd.f32 %v1637, %v1703
    %v1830 = vadd.f32 %v1638, %v1705
    %v1831 = vadd.f32 %v1639, %v1707
    %v1832 = vadd.f32 %v1640, %v1709
    %v1833 = vadd.f32 %v1641, %v1711
    %v1834 = vadd.f32 %v1642, %v1713
    %v1835 = vadd.f32 %v1643, %v1715
    %v1836 = vadd.f32 %v1644, %v1717
    %v1837 = vadd.f32 %v1645, %v1719
    %v1838 = vadd.f32 %v1646, %v1721
    %v1839 = vadd.f32 %v1647, %v1723
    %v1840 = vadd.f32 %v1648, %v1725
    %v1841 = vadd.f32 %v1649, %v1727
    %v1842 = vadd.f32 %v1650, %v1729
    %v1843 = vadd.f32 %v1651, %v1731
    %v1844 = vadd.f32 %v1652, %v1733
    %v1845 = vadd.f32 %v1653, %v1735
    %v1846 = vadd.f32 %v1654, %v1737
    %v1847 = vadd.f32 %v1655, %v1739
    %v1848 = vadd.f32 %v1656, %v1741
    %v1849 = vadd.f32 %v1657, %v1743
    %v1850 = vadd.f32 %v1658, %v1745
    %v1851 = vadd.f32 %v1659, %v1747
    %v1852 = vadd.f32 %v1660, %v1749
    %v1853 = vadd.f32 %v1661, %v1751
    %v1854 = vadd.f32 %v1662, %v1753
    %v1855 = vadd.f32 %v1663, %v1755
    %v1856 = vadd.f32 %v1664, %v1757
    %v1857 = vadd.f32 %v1665, %v1759
    %v1858 = vadd.f32 %v1666, %v1761
    %v1859 = vadd.f32 %v1667, %v1763
    %v1860 = vadd.f32 %v1668, %v1765
    %v1861 = vadd.f32 %v1669, %v1767
    %v1862 = vadd.f32 %v1670, %v1769
    %v1863 = vadd.f32 %v1671, %v1771
    %v1864 = vadd.f32 %v1672, %v1773
    %v1865 = vadd.f32 %v1673, %v1775
    %v1866 = vadd.f32 %v1674, %v1777
    %v1867 = vadd.f32 %v1675, %v1779
    %v1868 = vadd.f32 %v1676, %v1781
    %v1869 = vadd.f32 %v1677, %v1783
    %v1870 = vadd.f32 %v1678, %v1785
    %v1871 = vadd.f32 %v1679, %v1787
    %v1872 = vadd.f32 %v1680, %v1789
    %v1873 = vadd.f32 %v1681, %v1791
    %v1874 = vadd.f32 %v1682, %v1793
    %v1875 = vadd.f32 %v1683, %v1795
    %v1876 = vadd.f32 %v1684, %v1797
    %v1877 = vadd.f32 %v1685, %v1799
    %v1878 = vadd.f32 %v1686, %v1801
    %v1879 = vadd.f32 %v1687, %v1803
    %v1880 = vadd.f32 %v1688, %v1805
    %v1881 = vadd.f32 %v1689, %v1807
    %v1882 = vadd.f32 %v1690, %v1809
    %v1883 = vadd.f32 %v1691, %v1811
    %v1884 = vadd.f32 %v1692, %v1813
    %v1885 = vadd.f32 %v1693, %v1815
    %v1886 = vadd.f32 %v1694, %v1817
    %v1887 = vadd.f32 %v1695, %v1819
    %v1888 = vadd.f32 %v1696, %v1821
    %v1889 = vadd.f32 %v1697, %v1823
    %v1890 = vadd.f32 %v1698, %v1825
    %v1891 = vadd.f32 %v1699, %v1827
    %v1892 = vld [vmem:[#allocation6] sm:$0xff]
    %v1893 = vld [vmem:[#allocation6 + $0x8] sm:$0xff]
    %v1894 = vld [vmem:[#allocation6 + $0x10] sm:$0xff]
    %v1895 = vld [vmem:[#allocation6 + $0x18] sm:$0xff]
    %v1896 = vld [vmem:[#allocation6 + $0x20] sm:$0xff]
    %v1897 = vld [vmem:[#allocation6 + $0x28] sm:$0xff]
    %v1898 = vld [vmem:[#allocation6 + $0x30] sm:$0xff]
    %v1899 = vld [vmem:[#allocation6 + $0x38] sm:$0xff]
    %v1900 = vld [vmem:[#allocation6 + $0x40] sm:$0xff]
    %v1901 = vld [vmem:[#allocation6 + $0x48] sm:$0xff]
    %v1902 = vld [vmem:[#allocation6 + $0x50] sm:$0xff]
    %v1903 = vld [vmem:[#allocation6 + $0x58] sm:$0xff]
    %v1904 = vld [vmem:[#allocation6 + $0x60] sm:$0xff]
    %v1905 = vld [vmem:[#allocation6 + $0x68] sm:$0xff]
    %v1906 = vld [vmem:[#allocation6 + $0x70] sm:$0xff]
    %v1907 = vld [vmem:[#allocation6 + $0x78] sm:$0xff]
    %v1908 = vld [vmem:[%s2] sm:$0x1]
    %v1910 = vlaneseq
    %v1911 = vshrl.u32 %v1910, 7
    %v1912 = vsub.s32 0, %v1911
    %v1913 = vrot.slane %v1908, %v1912
    %1915 = vmatprep.subr.mxu0 0.0
    %1916 = vmatpush1.msra.mxu0 %v1907
    %1917 = vmatprep.subr.mxu0 0.0
    %1918 = vmatpush1.msra.mxu0 %v1906
    %1919 = vmatprep.subr.mxu0 0.0
    %1920 = vmatpush1.msra.mxu0 %v1905
    %1921 = vmatprep.subr.mxu0 0.0
    %1922 = vmatpush1.msra.mxu0 %v1904
    %1923 = vmatprep.subr.mxu0 0.0
    %1924 = vmatpush1.msra.mxu0 %v1903
    %1925 = vmatprep.subr.mxu0 0.0
    %1926 = vmatpush1.msra.mxu0 %v1902
    %1927 = vmatprep.subr.mxu0 0.0
    %1928 = vmatpush1.msra.mxu0 %v1901
    %1929 = vmatprep.subr.mxu0 0.0
    %1930 = vmatpush1.msra.mxu0 %v1900
    %1931 = vmatprep.subr.mxu0 0.0
    %1932 = vmatpush1.msra.mxu0 %v1899
    %1933 = vmatprep.subr.mxu0 0.0
    %1934 = vmatpush1.msra.mxu0 %v1898
    %1935 = vmatprep.subr.mxu0 0.0
    %1936 = vmatpush1.msra.mxu0 %v1897
    %1937 = vmatprep.subr.mxu0 0.0
    %1938 = vmatpush1.msra.mxu0 %v1896
    %1939 = vmatprep.subr.mxu0 0.0
    %1940 = vmatpush1.msra.mxu0 %v1895
    %1941 = vmatprep.subr.mxu0 0.0
    %1942 = vmatpush1.msra.mxu0 %v1894
    %1943 = vmatprep.subr.mxu0 0.0
    %1944 = vmatpush1.msra.mxu0 %v1893
    %1945 = vmatprep.subr.mxu0 0.0
    %1946 = vmatpush1.msra.mxu0 %v1892
    %1947 = vmatprep.subr.mxu0 0.0
    %1948 = vmatpush2.msra.mxu0 0.0
    %1949 = vmatprep.subr.mxu0 0.0
    %1950 = vmatpush2.msra.mxu0 0.0
    %1951 = vmatprep.subr.mxu0 0.0
    %1952 = vmatpush2.msra.mxu0 0.0
    %1953 = vmatprep.subr.mxu0 0.0
    %1954 = vmatpush2.msra.mxu0 0.0
    %1955 = vmatprep.subr.mxu0 0.0
    %1956 = vmatpush2.msra.mxu0 0.0
    %1957 = vmatprep.subr.mxu0 0.0
    %1958 = vmatpush2.msra.mxu0 0.0
    %1959 = vmatprep.subr.mxu0 0.0
    %1960 = vmatpush2.msra.mxu0 0.0
    %1961 = vmatprep.subr.mxu0 0.0
    %1962 = vmatpush2.msra.mxu0 0.0
    %1963 = vmatprep.subr.mxu0 0.0
    %1964 = vmatpush2.msra.mxu0 0.0
    %1965 = vmatprep.subr.mxu0 0.0
    %1966 = vmatpush2.msra.mxu0 0.0
    %1967 = vmatprep.subr.mxu0 0.0
    %1968 = vmatpush2.msra.mxu0 0.0
    %1969 = vmatprep.subr.mxu0 0.0
    %1970 = vmatpush2.msra.mxu0 0.0
    %1971 = vmatprep.subr.mxu0 0.0
    %1972 = vmatpush2.msra.mxu0 0.0
    %1973 = vmatprep.subr.mxu0 0.0
    %1974 = vmatpush2.msra.mxu0 0.0
    %1975 = vmatprep.subr.mxu0 0.0
    %1976 = vmatpush2.msra.mxu0 0.0
    %1977 = vmatprep.subr.mxu0 0.0
    %1978 = vmatpush2.msra.mxu0 0.0
    %1979 = vmatprep.mubr.f32.mxu0 0.0
    %1980 = vmatmul.mubr.f32.gmra.mxu0 %v1828
    %v1981 = vpop.f32.mrf.mxu0
    %v1982 = vadd.f32 %v1913, %v1981
    %v1983 = vpop.f32.mrf.mxu0
    %1984 = vmatprep.mubr.f32.mxu0 0.0
    %1985 = vmatmul.mubr.f32.gmra.mxu0 %v1829
    %v1986 = vpop.f32.mrf.mxu0
    %v1987 = vadd.f32 %v1913, %v1986
    %v1988 = vpop.f32.mrf.mxu0
    %1989 = vmatprep.mubr.f32.mxu0 0.0
    %1990 = vmatmul.mubr.f32.gmra.mxu0 %v1830
    %v1991 = vpop.f32.mrf.mxu0
    %v1992 = vadd.f32 %v1913, %v1991
    %v1993 = vpop.f32.mrf.mxu0
    %1994 = vmatprep.mubr.f32.mxu0 0.0
    %1995 = vmatmul.mubr.f32.gmra.mxu0 %v1831
    %v1996 = vpop.f32.mrf.mxu0
    %v1997 = vadd.f32 %v1913, %v1996
    %v1998 = vpop.f32.mrf.mxu0
    %1999 = vmatprep.mubr.f32.mxu0 0.0
    %2000 = vmatmul.mubr.f32.gmra.mxu0 %v1832
    %v2001 = vpop.f32.mrf.mxu0
    %v2002 = vadd.f32 %v1913, %v2001
    %v2003 = vpop.f32.mrf.mxu0
    %2004 = vmatprep.mubr.f32.mxu0 0.0
    %2005 = vmatmul.mubr.f32.gmra.mxu0 %v1833
    %v2006 = vpop.f32.mrf.mxu0
    %v2007 = vadd.f32 %v1913, %v2006
    %v2008 = vpop.f32.mrf.mxu0
    %2009 = vmatprep.mubr.f32.mxu0 0.0
    %2010 = vmatmul.mubr.f32.gmra.mxu0 %v1834
    %v2011 = vpop.f32.mrf.mxu0
    %v2012 = vadd.f32 %v1913, %v2011
    %v2013 = vpop.f32.mrf.mxu0
    %2014 = vmatprep.mubr.f32.mxu0 0.0
    %2015 = vmatmul.mubr.f32.gmra.mxu0 %v1835
    %v2016 = vpop.f32.mrf.mxu0
    %v2017 = vadd.f32 %v1913, %v2016
    %v2018 = vpop.f32.mrf.mxu0
    %2019 = vmatprep.mubr.f32.mxu0 0.0
    %2020 = vmatmul.mubr.f32.gmra.mxu0 %v1836
    %v2021 = vpop.f32.mrf.mxu0
    %v2022 = vadd.f32 %v1913, %v2021
    %v2023 = vpop.f32.mrf.mxu0
    %2024 = vmatprep.mubr.f32.mxu0 0.0
    %2025 = vmatmul.mubr.f32.gmra.mxu0 %v1837
    %v2026 = vpop.f32.mrf.mxu0
    %v2027 = vadd.f32 %v1913, %v2026
    %v2028 = vpop.f32.mrf.mxu0
    %2029 = vmatprep.mubr.f32.mxu0 0.0
    %2030 = vmatmul.mubr.f32.gmra.mxu0 %v1838
    %v2031 = vpop.f32.mrf.mxu0
    %v2032 = vadd.f32 %v1913, %v2031
    %v2033 = vpop.f32.mrf.mxu0
    %2034 = vmatprep.mubr.f32.mxu0 0.0
    %2035 = vmatmul.mubr.f32.gmra.mxu0 %v1839
    %v2036 = vpop.f32.mrf.mxu0
    %v2037 = vadd.f32 %v1913, %v2036
    %v2038 = vpop.f32.mrf.mxu0
    %2039 = vmatprep.mubr.f32.mxu0 0.0
    %2040 = vmatmul.mubr.f32.gmra.mxu0 %v1840
    %v2041 = vpop.f32.mrf.mxu0
    %v2042 = vadd.f32 %v1913, %v2041
    %v2043 = vpop.f32.mrf.mxu0
    %2044 = vmatprep.mubr.f32.mxu0 0.0
    %2045 = vmatmul.mubr.f32.gmra.mxu0 %v1841
    %v2046 = vpop.f32.mrf.mxu0
    %v2047 = vadd.f32 %v1913, %v2046
    %v2048 = vpop.f32.mrf.mxu0
    %2049 = vmatprep.mubr.f32.mxu0 0.0
    %2050 = vmatmul.mubr.f32.gmra.mxu0 %v1842
    %v2051 = vpop.f32.mrf.mxu0
    %v2052 = vadd.f32 %v1913, %v2051
    %v2053 = vpop.f32.mrf.mxu0
    %2054 = vmatprep.mubr.f32.mxu0 0.0
    %2055 = vmatmul.mubr.f32.gmra.mxu0 %v1843
    %v2056 = vpop.f32.mrf.mxu0
    %v2057 = vadd.f32 %v1913, %v2056
    %v2058 = vpop.f32.mrf.mxu0
    %2059 = vmatprep.mubr.f32.mxu0 0.0
    %2060 = vmatmul.mubr.f32.gmra.mxu0 %v1844
    %v2061 = vpop.f32.mrf.mxu0
    %v2062 = vadd.f32 %v1913, %v2061
    %v2063 = vpop.f32.mrf.mxu0
    %2064 = vmatprep.mubr.f32.mxu0 0.0
    %2065 = vmatmul.mubr.f32.gmra.mxu0 %v1845
    %v2066 = vpop.f32.mrf.mxu0
    %v2067 = vadd.f32 %v1913, %v2066
    %v2068 = vpop.f32.mrf.mxu0
    %2069 = vmatprep.mubr.f32.mxu0 0.0
    %2070 = vmatmul.mubr.f32.gmra.mxu0 %v1846
    %v2071 = vpop.f32.mrf.mxu0
    %v2072 = vadd.f32 %v1913, %v2071
    %v2073 = vpop.f32.mrf.mxu0
    %2074 = vmatprep.mubr.f32.mxu0 0.0
    %2075 = vmatmul.mubr.f32.gmra.mxu0 %v1847
    %v2076 = vpop.f32.mrf.mxu0
    %v2077 = vadd.f32 %v1913, %v2076
    %v2078 = vpop.f32.mrf.mxu0
    %2079 = vmatprep.mubr.f32.mxu0 0.0
    %2080 = vmatmul.mubr.f32.gmra.mxu0 %v1848
    %v2081 = vpop.f32.mrf.mxu0
    %v2082 = vadd.f32 %v1913, %v2081
    %v2083 = vpop.f32.mrf.mxu0
    %2084 = vmatprep.mubr.f32.mxu0 0.0
    %2085 = vmatmul.mubr.f32.gmra.mxu0 %v1849
    %v2086 = vpop.f32.mrf.mxu0
    %v2087 = vadd.f32 %v1913, %v2086
    %v2088 = vpop.f32.mrf.mxu0
    %2089 = vmatprep.mubr.f32.mxu0 0.0
    %2090 = vmatmul.mubr.f32.gmra.mxu0 %v1850
    %v2091 = vpop.f32.mrf.mxu0
    %v2092 = vadd.f32 %v1913, %v2091
    %v2093 = vpop.f32.mrf.mxu0
    %2094 = vmatprep.mubr.f32.mxu0 0.0
    %2095 = vmatmul.mubr.f32.gmra.mxu0 %v1851
    %v2096 = vpop.f32.mrf.mxu0
    %v2097 = vadd.f32 %v1913, %v2096
    %v2098 = vpop.f32.mrf.mxu0
    %2099 = vmatprep.mubr.f32.mxu0 0.0
    %2100 = vmatmul.mubr.f32.gmra.mxu0 %v1852
    %v2101 = vpop.f32.mrf.mxu0
    %v2102 = vadd.f32 %v1913, %v2101
    %v2103 = vpop.f32.mrf.mxu0
    %2104 = vmatprep.mubr.f32.mxu0 0.0
    %2105 = vmatmul.mubr.f32.gmra.mxu0 %v1853
    %v2106 = vpop.f32.mrf.mxu0
    %v2107 = vadd.f32 %v1913, %v2106
    %v2108 = vpop.f32.mrf.mxu0
    %2109 = vmatprep.mubr.f32.mxu0 0.0
    %2110 = vmatmul.mubr.f32.gmra.mxu0 %v1854
    %v2111 = vpop.f32.mrf.mxu0
    %v2112 = vadd.f32 %v1913, %v2111
    %v2113 = vpop.f32.mrf.mxu0
    %2114 = vmatprep.mubr.f32.mxu0 0.0
    %2115 = vmatmul.mubr.f32.gmra.mxu0 %v1855
    %v2116 = vpop.f32.mrf.mxu0
    %v2117 = vadd.f32 %v1913, %v2116
    %v2118 = vpop.f32.mrf.mxu0
    %2119 = vmatprep.mubr.f32.mxu0 0.0
    %2120 = vmatmul.mubr.f32.gmra.mxu0 %v1856
    %v2121 = vpop.f32.mrf.mxu0
    %v2122 = vadd.f32 %v1913, %v2121
    %v2123 = vpop.f32.mrf.mxu0
    %2124 = vmatprep.mubr.f32.mxu0 0.0
    %2125 = vmatmul.mubr.f32.gmra.mxu0 %v1857
    %v2126 = vpop.f32.mrf.mxu0
    %v2127 = vadd.f32 %v1913, %v2126
    %v2128 = vpop.f32.mrf.mxu0
    %2129 = vmatprep.mubr.f32.mxu0 0.0
    %2130 = vmatmul.mubr.f32.gmra.mxu0 %v1858
    %v2131 = vpop.f32.mrf.mxu0
    %v2132 = vadd.f32 %v1913, %v2131
    %v2133 = vpop.f32.mrf.mxu0
    %2134 = vmatprep.mubr.f32.mxu0 0.0
    %2135 = vmatmul.mubr.f32.gmra.mxu0 %v1859
    %v2136 = vpop.f32.mrf.mxu0
    %v2137 = vadd.f32 %v1913, %v2136
    %v2138 = vpop.f32.mrf.mxu0
    %2139 = vmatprep.mubr.f32.mxu0 0.0
    %2140 = vmatmul.mubr.f32.gmra.mxu0 %v1860
    %v2141 = vpop.f32.mrf.mxu0
    %v2142 = vadd.f32 %v1913, %v2141
    %v2143 = vpop.f32.mrf.mxu0
    %2144 = vmatprep.mubr.f32.mxu0 0.0
    %2145 = vmatmul.mubr.f32.gmra.mxu0 %v1861
    %v2146 = vpop.f32.mrf.mxu0
    %v2147 = vadd.f32 %v1913, %v2146
    %v2148 = vpop.f32.mrf.mxu0
    %2149 = vmatprep.mubr.f32.mxu0 0.0
    %2150 = vmatmul.mubr.f32.gmra.mxu0 %v1862
    %v2151 = vpop.f32.mrf.mxu0
    %v2152 = vadd.f32 %v1913, %v2151
    %v2153 = vpop.f32.mrf.mxu0
    %2154 = vmatprep.mubr.f32.mxu0 0.0
    %2155 = vmatmul.mubr.f32.gmra.mxu0 %v1863
    %v2156 = vpop.f32.mrf.mxu0
    %v2157 = vadd.f32 %v1913, %v2156
    %v2158 = vpop.f32.mrf.mxu0
    %2159 = vmatprep.mubr.f32.mxu0 0.0
    %2160 = vmatmul.mubr.f32.gmra.mxu0 %v1864
    %v2161 = vpop.f32.mrf.mxu0
    %v2162 = vadd.f32 %v1913, %v2161
    %v2163 = vpop.f32.mrf.mxu0
    %2164 = vmatprep.mubr.f32.mxu0 0.0
    %2165 = vmatmul.mubr.f32.gmra.mxu0 %v1865
    %v2166 = vpop.f32.mrf.mxu0
    %v2167 = vadd.f32 %v1913, %v2166
    %v2168 = vpop.f32.mrf.mxu0
    %2169 = vmatprep.mubr.f32.mxu0 0.0
    %2170 = vmatmul.mubr.f32.gmra.mxu0 %v1866
    %v2171 = vpop.f32.mrf.mxu0
    %v2172 = vadd.f32 %v1913, %v2171
    %v2173 = vpop.f32.mrf.mxu0
    %2174 = vmatprep.mubr.f32.mxu0 0.0
    %2175 = vmatmul.mubr.f32.gmra.mxu0 %v1867
    %v2176 = vpop.f32.mrf.mxu0
    %v2177 = vadd.f32 %v1913, %v2176
    %v2178 = vpop.f32.mrf.mxu0
    %2179 = vmatprep.mubr.f32.mxu0 0.0
    %2180 = vmatmul.mubr.f32.gmra.mxu0 %v1868
    %v2181 = vpop.f32.mrf.mxu0
    %v2182 = vadd.f32 %v1913, %v2181
    %v2183 = vpop.f32.mrf.mxu0
    %2184 = vmatprep.mubr.f32.mxu0 0.0
    %2185 = vmatmul.mubr.f32.gmra.mxu0 %v1869
    %v2186 = vpop.f32.mrf.mxu0
    %v2187 = vadd.f32 %v1913, %v2186
    %v2188 = vpop.f32.mrf.mxu0
    %2189 = vmatprep.mubr.f32.mxu0 0.0
    %2190 = vmatmul.mubr.f32.gmra.mxu0 %v1870
    %v2191 = vpop.f32.mrf.mxu0
    %v2192 = vadd.f32 %v1913, %v2191
    %v2193 = vpop.f32.mrf.mxu0
    %2194 = vmatprep.mubr.f32.mxu0 0.0
    %2195 = vmatmul.mubr.f32.gmra.mxu0 %v1871
    %v2196 = vpop.f32.mrf.mxu0
    %v2197 = vadd.f32 %v1913, %v2196
    %v2198 = vpop.f32.mrf.mxu0
    %2199 = vmatprep.mubr.f32.mxu0 0.0
    %2200 = vmatmul.mubr.f32.gmra.mxu0 %v1872
    %v2201 = vpop.f32.mrf.mxu0
    %v2202 = vadd.f32 %v1913, %v2201
    %v2203 = vpop.f32.mrf.mxu0
    %2204 = vmatprep.mubr.f32.mxu0 0.0
    %2205 = vmatmul.mubr.f32.gmra.mxu0 %v1873
    %v2206 = vpop.f32.mrf.mxu0
    %v2207 = vadd.f32 %v1913, %v2206
    %v2208 = vpop.f32.mrf.mxu0
    %2209 = vmatprep.mubr.f32.mxu0 0.0
    %2210 = vmatmul.mubr.f32.gmra.mxu0 %v1874
    %v2211 = vpop.f32.mrf.mxu0
    %v2212 = vadd.f32 %v1913, %v2211
    %v2213 = vpop.f32.mrf.mxu0
    %2214 = vmatprep.mubr.f32.mxu0 0.0
    %2215 = vmatmul.mubr.f32.gmra.mxu0 %v1875
    %v2216 = vpop.f32.mrf.mxu0
    %v2217 = vadd.f32 %v1913, %v2216
    %v2218 = vpop.f32.mrf.mxu0
    %2219 = vmatprep.mubr.f32.mxu0 0.0
    %2220 = vmatmul.mubr.f32.gmra.mxu0 %v1876
    %v2221 = vpop.f32.mrf.mxu0
    %v2222 = vadd.f32 %v1913, %v2221
    %v2223 = vpop.f32.mrf.mxu0
    %2224 = vmatprep.mubr.f32.mxu0 0.0
    %2225 = vmatmul.mubr.f32.gmra.mxu0 %v1877
    %v2226 = vpop.f32.mrf.mxu0
    %v2227 = vadd.f32 %v1913, %v2226
    %v2228 = vpop.f32.mrf.mxu0
    %2229 = vmatprep.mubr.f32.mxu0 0.0
    %2230 = vmatmul.mubr.f32.gmra.mxu0 %v1878
    %v2231 = vpop.f32.mrf.mxu0
    %v2232 = vadd.f32 %v1913, %v2231
    %v2233 = vpop.f32.mrf.mxu0
    %2234 = vmatprep.mubr.f32.mxu0 0.0
    %2235 = vmatmul.mubr.f32.gmra.mxu0 %v1879
    %v2236 = vpop.f32.mrf.mxu0
    %v2237 = vadd.f32 %v1913, %v2236
    %v2238 = vpop.f32.mrf.mxu0
    %2239 = vmatprep.mubr.f32.mxu0 0.0
    %2240 = vmatmul.mubr.f32.gmra.mxu0 %v1880
    %v2241 = vpop.f32.mrf.mxu0
    %v2242 = vadd.f32 %v1913, %v2241
    %v2243 = vpop.f32.mrf.mxu0
    %2244 = vmatprep.mubr.f32.mxu0 0.0
    %2245 = vmatmul.mubr.f32.gmra.mxu0 %v1881
    %v2246 = vpop.f32.mrf.mxu0
    %v2247 = vadd.f32 %v1913, %v2246
    %v2248 = vpop.f32.mrf.mxu0
    %2249 = vmatprep.mubr.f32.mxu0 0.0
    %2250 = vmatmul.mubr.f32.gmra.mxu0 %v1882
    %v2251 = vpop.f32.mrf.mxu0
    %v2252 = vadd.f32 %v1913, %v2251
    %v2253 = vpop.f32.mrf.mxu0
    %2254 = vmatprep.mubr.f32.mxu0 0.0
    %2255 = vmatmul.mubr.f32.gmra.mxu0 %v1883
    %v2256 = vpop.f32.mrf.mxu0
    %v2257 = vadd.f32 %v1913, %v2256
    %v2258 = vpop.f32.mrf.mxu0
    %2259 = vmatprep.mubr.f32.mxu0 0.0
    %2260 = vmatmul.mubr.f32.gmra.mxu0 %v1884
    %v2261 = vpop.f32.mrf.mxu0
    %v2262 = vadd.f32 %v1913, %v2261
    %v2263 = vpop.f32.mrf.mxu0
    %2264 = vmatprep.mubr.f32.mxu0 0.0
    %2265 = vmatmul.mubr.f32.gmra.mxu0 %v1885
    %v2266 = vpop.f32.mrf.mxu0
    %v2267 = vadd.f32 %v1913, %v2266
    %v2268 = vpop.f32.mrf.mxu0
    %2269 = vmatprep.mubr.f32.mxu0 0.0
    %2270 = vmatmul.mubr.f32.gmra.mxu0 %v1886
    %v2271 = vpop.f32.mrf.mxu0
    %v2272 = vadd.f32 %v1913, %v2271
    %v2273 = vpop.f32.mrf.mxu0
    %2274 = vmatprep.mubr.f32.mxu0 0.0
    %2275 = vmatmul.mubr.f32.gmra.mxu0 %v1887
    %v2276 = vpop.f32.mrf.mxu0
    %v2277 = vadd.f32 %v1913, %v2276
    %v2278 = vpop.f32.mrf.mxu0
    %2279 = vmatprep.mubr.f32.mxu0 0.0
    %2280 = vmatmul.mubr.f32.gmra.mxu0 %v1888
    %v2281 = vpop.f32.mrf.mxu0
    %v2282 = vadd.f32 %v1913, %v2281
    %v2283 = vpop.f32.mrf.mxu0
    %2284 = vmatprep.mubr.f32.mxu0 0.0
    %2285 = vmatmul.mubr.f32.gmra.mxu0 %v1889
    %v2286 = vpop.f32.mrf.mxu0
    %v2287 = vadd.f32 %v1913, %v2286
    %v2288 = vpop.f32.mrf.mxu0
    %2289 = vmatprep.mubr.f32.mxu0 0.0
    %2290 = vmatmul.mubr.f32.gmra.mxu0 %v1890
    %v2291 = vpop.f32.mrf.mxu0
    %v2292 = vadd.f32 %v1913, %v2291
    %v2293 = vpop.f32.mrf.mxu0
    %2294 = vmatprep.mubr.f32.mxu0 0.0
    %2295 = vmatmul.mubr.f32.gmra.mxu0 %v1891
    %v2296 = vpop.f32.mrf.mxu0
    %v2297 = vadd.f32 %v1913, %v2296
    %v2298 = vpop.f32.mrf.mxu0
    %2299 = vdwg.mxu0
    %v2300 = vmax.f32 %v1982, 0.0
    %v2301 = vmax.f32 %v1987, 0.0
    %v2302 = vmax.f32 %v1992, 0.0
    %v2303 = vmax.f32 %v1997, 0.0
    %v2304 = vmax.f32 %v2002, 0.0
    %v2305 = vmax.f32 %v2007, 0.0
    %v2306 = vmax.f32 %v2012, 0.0
    %v2307 = vmax.f32 %v2017, 0.0
    %v2308 = vmax.f32 %v2022, 0.0
    %v2309 = vmax.f32 %v2027, 0.0
    %v2310 = vmax.f32 %v2032, 0.0
    %v2311 = vmax.f32 %v2037, 0.0
    %v2312 = vmax.f32 %v2042, 0.0
    %v2313 = vmax.f32 %v2047, 0.0
    %v2314 = vmax.f32 %v2052, 0.0
    %v2315 = vmax.f32 %v2057, 0.0
    %v2316 = vmax.f32 %v2062, 0.0
    %v2317 = vmax.f32 %v2067, 0.0
    %v2318 = vmax.f32 %v2072, 0.0
    %v2319 = vmax.f32 %v2077, 0.0
    %v2320 = vmax.f32 %v2082, 0.0
    %v2321 = vmax.f32 %v2087, 0.0
    %v2322 = vmax.f32 %v2092, 0.0
    %v2323 = vmax.f32 %v2097, 0.0
    %v2324 = vmax.f32 %v2102, 0.0
    %v2325 = vmax.f32 %v2107, 0.0
    %v2326 = vmax.f32 %v2112, 0.0
    %v2327 = vmax.f32 %v2117, 0.0
    %v2328 = vmax.f32 %v2122, 0.0
    %v2329 = vmax.f32 %v2127, 0.0
    %v2330 = vmax.f32 %v2132, 0.0
    %v2331 = vmax.f32 %v2137, 0.0
    %v2332 = vmax.f32 %v2142, 0.0
    %v2333 = vmax.f32 %v2147, 0.0
    %v2334 = vmax.f32 %v2152, 0.0
    %v2335 = vmax.f32 %v2157, 0.0
    %v2336 = vmax.f32 %v2162, 0.0
    %v2337 = vmax.f32 %v2167, 0.0
    %v2338 = vmax.f32 %v2172, 0.0
    %v2339 = vmax.f32 %v2177, 0.0
    %v2340 = vmax.f32 %v2182, 0.0
    %v2341 = vmax.f32 %v2187, 0.0
    %v2342 = vmax.f32 %v2192, 0.0
    %v2343 = vmax.f32 %v2197, 0.0
    %v2344 = vmax.f32 %v2202, 0.0
    %v2345 = vmax.f32 %v2207, 0.0
    %v2346 = vmax.f32 %v2212, 0.0
    %v2347 = vmax.f32 %v2217, 0.0
    %v2348 = vmax.f32 %v2222, 0.0
    %v2349 = vmax.f32 %v2227, 0.0
    %v2350 = vmax.f32 %v2232, 0.0
    %v2351 = vmax.f32 %v2237, 0.0
    %v2352 = vmax.f32 %v2242, 0.0
    %v2353 = vmax.f32 %v2247, 0.0
    %v2354 = vmax.f32 %v2252, 0.0
    %v2355 = vmax.f32 %v2257, 0.0
    %v2356 = vmax.f32 %v2262, 0.0
    %v2357 = vmax.f32 %v2267, 0.0
    %v2358 = vmax.f32 %v2272, 0.0
    %v2359 = vmax.f32 %v2277, 0.0
    %v2360 = vmax.f32 %v2282, 0.0
    %v2361 = vmax.f32 %v2287, 0.0
    %v2362 = vmax.f32 %v2292, 0.0
    %v2363 = vmax.f32 %v2297, 0.0
    %2364 = vst [vmem:[%s75 + $0x1] sm:$0xff] %v2300
    %2365 = vst [vmem:[%s75 + $0x9] sm:$0xff] %v2301
    %2366 = vst [vmem:[%s75 + $0x19] sm:$0xff] %v2302
    %2367 = vst [vmem:[%s75 + $0x21] sm:$0xff] %v2303
    %2368 = vst [vmem:[%s75 + $0x31] sm:$0xff] %v2304
    %2369 = vst [vmem:[%s75 + $0x39] sm:$0xff] %v2305
    %2370 = vst [vmem:[%s75 + $0x49] sm:$0xff] %v2306
    %2371 = vst [vmem:[%s75 + $0x51] sm:$0xff] %v2307
    %2372 = vst [vmem:[%s75 + $0x61] sm:$0xff] %v2308
    %2373 = vst [vmem:[%s75 + $0x69] sm:$0xff] %v2309
    %2374 = vst [vmem:[%s75 + $0x79] sm:$0xff] %v2310
    %2375 = vst [vmem:[%s75 + $0x81] sm:$0xff] %v2311
    %2376 = vst [vmem:[%s75 + $0x91] sm:$0xff] %v2312
    %2377 = vst [vmem:[%s75 + $0x99] sm:$0xff] %v2313
    %2378 = vst [vmem:[%s75 + $0xa9] sm:$0xff] %v2314
    %2379 = vst [vmem:[%s75 + $0xb1] sm:$0xff] %v2315
    %2380 = vst [vmem:[%s75 + $0xc1] sm:$0xff] %v2316
    %2381 = vst [vmem:[%s75 + $0xc9] sm:$0xff] %v2317
    %2382 = vst [vmem:[%s75 + $0xd9] sm:$0xff] %v2318
    %2383 = vst [vmem:[%s75 + $0xe1] sm:$0xff] %v2319
    %2384 = vst [vmem:[%s75 + $0xf1] sm:$0xff] %v2320
    %2385 = vst [vmem:[%s75 + $0xf9] sm:$0xff] %v2321
    %2386 = vst [vmem:[%s75 + $0x109] sm:$0xff] %v2322
    %2387 = vst [vmem:[%s75 + $0x111] sm:$0xff] %v2323
    %2388 = vst [vmem:[%s75 + $0x121] sm:$0xff] %v2324
    %2389 = vst [vmem:[%s75 + $0x129] sm:$0xff] %v2325
    %2390 = vst [vmem:[%s75 + $0x139] sm:$0xff] %v2326
    %2391 = vst [vmem:[%s75 + $0x141] sm:$0xff] %v2327
    %2392 = vst [vmem:[%s75 + $0x151] sm:$0xff] %v2328
    %2393 = vst [vmem:[%s75 + $0x159] sm:$0xff] %v2329
    %2394 = vst [vmem:[%s75 + $0x169] sm:$0xff] %v2330
    %2395 = vst [vmem:[%s75 + $0x171] sm:$0xff] %v2331
    %2396 = vst [vmem:[%s75 + $0x1b1] sm:$0xff] %v2332
    %2397 = vst [vmem:[%s75 + $0x1b9] sm:$0xff] %v2333
    %2398 = vst [vmem:[%s75 + $0x1c9] sm:$0xff] %v2334
    %2399 = vst [vmem:[%s75 + $0x1d1] sm:$0xff] %v2335
    %2400 = vst [vmem:[%s75 + $0x1e1] sm:$0xff] %v2336
    %2401 = vst [vmem:[%s75 + $0x1e9] sm:$0xff] %v2337
    %2402 = vst [vmem:[%s75 + $0x1f9] sm:$0xff] %v2338
    %2403 = vst [vmem:[%s75 + $0x201] sm:$0xff] %v2339
    %2404 = vst [vmem:[%s75 + $0x211] sm:$0xff] %v2340
    %2405 = vst [vmem:[%s75 + $0x219] sm:$0xff] %v2341
    %2406 = vst [vmem:[%s75 + $0x229] sm:$0xff] %v2342
    %2407 = vst [vmem:[%s75 + $0x231] sm:$0xff] %v2343
    %2408 = vst [vmem:[%s75 + $0x241] sm:$0xff] %v2344
    %2409 = vst [vmem:[%s75 + $0x249] sm:$0xff] %v2345
    %2410 = vst [vmem:[%s75 + $0x259] sm:$0xff] %v2346
    %2411 = vst [vmem:[%s75 + $0x261] sm:$0xff] %v2347
    %2412 = vst [vmem:[%s75 + $0x271] sm:$0xff] %v2348
    %2413 = vst [vmem:[%s75 + $0x279] sm:$0xff] %v2349
    %2414 = vst [vmem:[%s75 + $0x289] sm:$0xff] %v2350
    %2415 = vst [vmem:[%s75 + $0x291] sm:$0xff] %v2351
    %2416 = vst [vmem:[%s75 + $0x2a1] sm:$0xff] %v2352
    %2417 = vst [vmem:[%s75 + $0x2a9] sm:$0xff] %v2353
    %2418 = vst [vmem:[%s75 + $0x2b9] sm:$0xff] %v2354
    %2419 = vst [vmem:[%s75 + $0x2c1] sm:$0xff] %v2355
    %2420 = vst [vmem:[%s75 + $0x2d1] sm:$0xff] %v2356
    %2421 = vst [vmem:[%s75 + $0x2d9] sm:$0xff] %v2357
    %2422 = vst [vmem:[%s75 + $0x2e9] sm:$0xff] %v2358
    %2423 = vst [vmem:[%s75 + $0x2f1] sm:$0xff] %v2359
    %2424 = vst [vmem:[%s75 + $0x301] sm:$0xff] %v2360
    %2425 = vst [vmem:[%s75 + $0x309] sm:$0xff] %v2361
    %2426 = vst [vmem:[%s75 + $0x319] sm:$0xff] %v2362
    %2427 = vst [vmem:[%s75 + $0x321] sm:$0xff] %v2363
    %s2428 = scalar_lea.vmem [#allocation3], 24
    %v2429 = vld [vmem:[%s2428 + $0x1] sm:$0xff]
    %v2430 = vld [vmem:[%s2428 + $0x9] sm:$0xff]
    %v2431 = vld [vmem:[%s2428 + $0x19] sm:$0xff]
    %v2432 = vld [vmem:[%s2428 + $0x21] sm:$0xff]
    %v2433 = vld [vmem:[%s2428 + $0x31] sm:$0xff]
    %v2434 = vld [vmem:[%s2428 + $0x39] sm:$0xff]
    %v2435 = vld [vmem:[%s2428 + $0x49] sm:$0xff]
    %v2436 = vld [vmem:[%s2428 + $0x51] sm:$0xff]
    %v2437 = vld [vmem:[%s2428 + $0x61] sm:$0xff]
    %v2438 = vld [vmem:[%s2428 + $0x69] sm:$0xff]
    %v2439 = vld [vmem:[%s2428 + $0x79] sm:$0xff]
    %v2440 = vld [vmem:[%s2428 + $0x81] sm:$0xff]
    %v2441 = vld [vmem:[%s2428 + $0x91] sm:$0xff]
    %v2442 = vld [vmem:[%s2428 + $0x99] sm:$0xff]
    %v2443 = vld [vmem:[%s2428 + $0xa9] sm:$0xff]
    %v2444 = vld [vmem:[%s2428 + $0xb1] sm:$0xff]
    %v2445 = vld [vmem:[%s2428 + $0xc1] sm:$0xff]
    %v2446 = vld [vmem:[%s2428 + $0xc9] sm:$0xff]
    %v2447 = vld [vmem:[%s2428 + $0xd9] sm:$0xff]
    %v2448 = vld [vmem:[%s2428 + $0xe1] sm:$0xff]
    %v2449 = vld [vmem:[%s2428 + $0xf1] sm:$0xff]
    %v2450 = vld [vmem:[%s2428 + $0xf9] sm:$0xff]
    %v2451 = vld [vmem:[%s2428 + $0x109] sm:$0xff]
    %v2452 = vld [vmem:[%s2428 + $0x111] sm:$0xff]
    %v2453 = vld [vmem:[%s2428 + $0x121] sm:$0xff]
    %v2454 = vld [vmem:[%s2428 + $0x129] sm:$0xff]
    %v2455 = vld [vmem:[%s2428 + $0x139] sm:$0xff]
    %v2456 = vld [vmem:[%s2428 + $0x141] sm:$0xff]
    %v2457 = vld [vmem:[%s2428 + $0x151] sm:$0xff]
    %v2458 = vld [vmem:[%s2428 + $0x159] sm:$0xff]
    %v2459 = vld [vmem:[%s2428 + $0x169] sm:$0xff]
    %v2460 = vld [vmem:[%s2428 + $0x171] sm:$0xff]
    %v2461 = vld [vmem:[%s2428 + $0x1b1] sm:$0xff]
    %v2462 = vld [vmem:[%s2428 + $0x1b9] sm:$0xff]
    %v2463 = vld [vmem:[%s2428 + $0x1c9] sm:$0xff]
    %v2464 = vld [vmem:[%s2428 + $0x1d1] sm:$0xff]
    %v2465 = vld [vmem:[%s2428 + $0x1e1] sm:$0xff]
    %v2466 = vld [vmem:[%s2428 + $0x1e9] sm:$0xff]
    %v2467 = vld [vmem:[%s2428 + $0x1f9] sm:$0xff]
    %v2468 = vld [vmem:[%s2428 + $0x201] sm:$0xff]
    %v2469 = vld [vmem:[%s2428 + $0x211] sm:$0xff]
    %v2470 = vld [vmem:[%s2428 + $0x219] sm:$0xff]
    %v2471 = vld [vmem:[%s2428 + $0x229] sm:$0xff]
    %v2472 = vld [vmem:[%s2428 + $0x231] sm:$0xff]
    %v2473 = vld [vmem:[%s2428 + $0x241] sm:$0xff]
    %v2474 = vld [vmem:[%s2428 + $0x249] sm:$0xff]
    %v2475 = vld [vmem:[%s2428 + $0x259] sm:$0xff]
    %v2476 = vld [vmem:[%s2428 + $0x261] sm:$0xff]
    %v2477 = vld [vmem:[%s2428 + $0x271] sm:$0xff]
    %v2478 = vld [vmem:[%s2428 + $0x279] sm:$0xff]
    %v2479 = vld [vmem:[%s2428 + $0x289] sm:$0xff]
    %v2480 = vld [vmem:[%s2428 + $0x291] sm:$0xff]
    %v2481 = vld [vmem:[%s2428 + $0x2a1] sm:$0xff]
    %v2482 = vld [vmem:[%s2428 + $0x2a9] sm:$0xff]
    %v2483 = vld [vmem:[%s2428 + $0x2b9] sm:$0xff]
    %v2484 = vld [vmem:[%s2428 + $0x2c1] sm:$0xff]
    %v2485 = vld [vmem:[%s2428 + $0x2d1] sm:$0xff]
    %v2486 = vld [vmem:[%s2428 + $0x2d9] sm:$0xff]
    %v2487 = vld [vmem:[%s2428 + $0x2e9] sm:$0xff]
    %v2488 = vld [vmem:[%s2428 + $0x2f1] sm:$0xff]
    %v2489 = vld [vmem:[%s2428 + $0x301] sm:$0xff]
    %v2490 = vld [vmem:[%s2428 + $0x309] sm:$0xff]
    %v2491 = vld [vmem:[%s2428 + $0x319] sm:$0xff]
    %v2492 = vld [vmem:[%s2428 + $0x321] sm:$0xff]
    %v2493 = vld [vmem:[#allocation2] sm:$0xff]
    %v2494 = vld [vmem:[#allocation2 + $0x8] sm:$0xff]
    %v2495 = vld [vmem:[#allocation2 + $0x18] sm:$0xff]
    %v2496 = vld [vmem:[#allocation2 + $0x20] sm:$0xff]
    %v2497 = vld [vmem:[#allocation2 + $0x30] sm:$0xff]
    %v2498 = vld [vmem:[#allocation2 + $0x38] sm:$0xff]
    %v2499 = vld [vmem:[#allocation2 + $0x48] sm:$0xff]
    %v2500 = vld [vmem:[#allocation2 + $0x50] sm:$0xff]
    %v2501 = vld [vmem:[#allocation2 + $0x60] sm:$0xff]
    %v2502 = vld [vmem:[#allocation2 + $0x68] sm:$0xff]
    %v2503 = vld [vmem:[#allocation2 + $0x78] sm:$0xff]
    %v2504 = vld [vmem:[#allocation2 + $0x80] sm:$0xff]
    %v2505 = vld [vmem:[#allocation2 + $0x90] sm:$0xff]
    %v2506 = vld [vmem:[#allocation2 + $0x98] sm:$0xff]
    %v2507 = vld [vmem:[#allocation2 + $0xa8] sm:$0xff]
    %v2508 = vld [vmem:[#allocation2 + $0xb0] sm:$0xff]
    %v2509 = vld [vmem:[#allocation2 + $0xc0] sm:$0xff]
    %v2510 = vld [vmem:[#allocation2 + $0xc8] sm:$0xff]
    %v2511 = vld [vmem:[#allocation2 + $0xd8] sm:$0xff]
    %v2512 = vld [vmem:[#allocation2 + $0xe0] sm:$0xff]
    %v2513 = vld [vmem:[#allocation2 + $0xf0] sm:$0xff]
    %v2514 = vld [vmem:[#allocation2 + $0xf8] sm:$0xff]
    %v2515 = vld [vmem:[#allocation2 + $0x108] sm:$0xff]
    %v2516 = vld [vmem:[#allocation2 + $0x110] sm:$0xff]
    %v2517 = vld [vmem:[#allocation2 + $0x120] sm:$0xff]
    %v2518 = vld [vmem:[#allocation2 + $0x128] sm:$0xff]
    %v2519 = vld [vmem:[#allocation2 + $0x138] sm:$0xff]
    %v2520 = vld [vmem:[#allocation2 + $0x140] sm:$0xff]
    %v2521 = vld [vmem:[#allocation2 + $0x150] sm:$0xff]
    %v2522 = vld [vmem:[#allocation2 + $0x158] sm:$0xff]
    %v2523 = vld [vmem:[#allocation2 + $0x168] sm:$0xff]
    %v2524 = vld [vmem:[#allocation2 + $0x170] sm:$0xff]
    %v2525 = vld [vmem:[#allocation2 + $0x180] sm:$0xff]
    %v2526 = vld [vmem:[#allocation2 + $0x188] sm:$0xff]
    %v2527 = vld [vmem:[#allocation2 + $0x198] sm:$0xff]
    %v2528 = vld [vmem:[#allocation2 + $0x1a0] sm:$0xff]
    %v2529 = vld [vmem:[#allocation2 + $0x1b0] sm:$0xff]
    %v2530 = vld [vmem:[#allocation2 + $0x1b8] sm:$0xff]
    %v2531 = vld [vmem:[#allocation2 + $0x1c8] sm:$0xff]
    %v2532 = vld [vmem:[#allocation2 + $0x1d0] sm:$0xff]
    %v2533 = vld [vmem:[#allocation2 + $0x1e0] sm:$0xff]
    %v2534 = vld [vmem:[#allocation2 + $0x1e8] sm:$0xff]
    %v2535 = vld [vmem:[#allocation2 + $0x1f8] sm:$0xff]
    %v2536 = vld [vmem:[#allocation2 + $0x200] sm:$0xff]
    %v2537 = vld [vmem:[#allocation2 + $0x210] sm:$0xff]
    %v2538 = vld [vmem:[#allocation2 + $0x218] sm:$0xff]
    %v2539 = vld [vmem:[#allocation2 + $0x228] sm:$0xff]
    %v2540 = vld [vmem:[#allocation2 + $0x230] sm:$0xff]
    %v2541 = vld [vmem:[#allocation2 + $0x240] sm:$0xff]
    %v2542 = vld [vmem:[#allocation2 + $0x248] sm:$0xff]
    %v2543 = vld [vmem:[#allocation2 + $0x258] sm:$0xff]
    %v2544 = vld [vmem:[#allocation2 + $0x260] sm:$0xff]
    %v2545 = vld [vmem:[#allocation2 + $0x270] sm:$0xff]
    %v2546 = vld [vmem:[#allocation2 + $0x278] sm:$0xff]
    %v2547 = vld [vmem:[#allocation2 + $0x288] sm:$0xff]
    %v2548 = vld [vmem:[#allocation2 + $0x290] sm:$0xff]
    %v2549 = vld [vmem:[#allocation2 + $0x2a0] sm:$0xff]
    %v2550 = vld [vmem:[#allocation2 + $0x2a8] sm:$0xff]
    %v2551 = vld [vmem:[#allocation2 + $0x2b8] sm:$0xff]
    %v2552 = vld [vmem:[#allocation2 + $0x2c0] sm:$0xff]
    %v2553 = vld [vmem:[#allocation2 + $0x2d0] sm:$0xff]
    %v2554 = vld [vmem:[#allocation2 + $0x2d8] sm:$0xff]
    %v2555 = vld [vmem:[#allocation2 + $0x2e8] sm:$0xff]
    %v2556 = vld [vmem:[#allocation2 + $0x2f0] sm:$0xff]
    %v2557 = vld [vmem:[#allocation2 + $0x300] sm:$0xff]
    %v2558 = vld [vmem:[#allocation2 + $0x308] sm:$0xff]
    %v2559 = vld [vmem:[#allocation2 + $0x318] sm:$0xff]
    %v2560 = vld [vmem:[#allocation2 + $0x320] sm:$0xff]
    %v2561 = vld [vmem:[#allocation2 + $0x330] sm:$0xff]
    %v2562 = vld [vmem:[#allocation2 + $0x338] sm:$0xff]
    %v2563 = vld [vmem:[#allocation2 + $0x348] sm:$0xff]
    %v2564 = vld [vmem:[#allocation2 + $0x350] sm:$0xff]
    %v2565 = vld [vmem:[#allocation2 + $0x1] sm:$0xff]
    %v2566 = vld [vmem:[#allocation2 + $0x9] sm:$0xff]
    %v2567 = vld [vmem:[#allocation2 + $0x19] sm:$0xff]
    %v2568 = vld [vmem:[#allocation2 + $0x21] sm:$0xff]
    %v2569 = vld [vmem:[#allocation2 + $0x31] sm:$0xff]
    %v2570 = vld [vmem:[#allocation2 + $0x39] sm:$0xff]
    %v2571 = vld [vmem:[#allocation2 + $0x49] sm:$0xff]
    %v2572 = vld [vmem:[#allocation2 + $0x51] sm:$0xff]
    %v2573 = vld [vmem:[#allocation2 + $0x61] sm:$0xff]
    %v2574 = vld [vmem:[#allocation2 + $0x69] sm:$0xff]
    %v2575 = vld [vmem:[#allocation2 + $0x79] sm:$0xff]
    %v2576 = vld [vmem:[#allocation2 + $0x81] sm:$0xff]
    %v2577 = vld [vmem:[#allocation2 + $0x91] sm:$0xff]
    %v2578 = vld [vmem:[#allocation2 + $0x99] sm:$0xff]
    %v2579 = vld [vmem:[#allocation2 + $0xa9] sm:$0xff]
    %v2580 = vld [vmem:[#allocation2 + $0xb1] sm:$0xff]
    %v2581 = vld [vmem:[#allocation2 + $0xc1] sm:$0xff]
    %v2582 = vld [vmem:[#allocation2 + $0xc9] sm:$0xff]
    %v2583 = vld [vmem:[#allocation2 + $0xd9] sm:$0xff]
    %v2584 = vld [vmem:[#allocation2 + $0xe1] sm:$0xff]
    %v2585 = vld [vmem:[#allocation2 + $0xf1] sm:$0xff]
    %v2586 = vld [vmem:[#allocation2 + $0xf9] sm:$0xff]
    %v2587 = vld [vmem:[#allocation2 + $0x109] sm:$0xff]
    %v2588 = vld [vmem:[#allocation2 + $0x111] sm:$0xff]
    %v2589 = vld [vmem:[#allocation2 + $0x121] sm:$0xff]
    %v2590 = vld [vmem:[#allocation2 + $0x129] sm:$0xff]
    %v2591 = vld [vmem:[#allocation2 + $0x139] sm:$0xff]
    %v2592 = vld [vmem:[#allocation2 + $0x141] sm:$0xff]
    %v2593 = vld [vmem:[#allocation2 + $0x151] sm:$0xff]
    %v2594 = vld [vmem:[#allocation2 + $0x159] sm:$0xff]
    %v2595 = vld [vmem:[#allocation2 + $0x169] sm:$0xff]
    %v2596 = vld [vmem:[#allocation2 + $0x171] sm:$0xff]
    %v2597 = vld [vmem:[#allocation2 + $0x181] sm:$0xff]
    %v2598 = vld [vmem:[#allocation2 + $0x189] sm:$0xff]
    %v2599 = vld [vmem:[#allocation2 + $0x199] sm:$0xff]
    %v2600 = vld [vmem:[#allocation2 + $0x1a1] sm:$0xff]
    %v2601 = vld [vmem:[#allocation2 + $0x1b1] sm:$0xff]
    %v2602 = vld [vmem:[#allocation2 + $0x1b9] sm:$0xff]
    %v2603 = vld [vmem:[#allocation2 + $0x1c9] sm:$0xff]
    %v2604 = vld [vmem:[#allocation2 + $0x1d1] sm:$0xff]
    %v2605 = vld [vmem:[#allocation2 + $0x1e1] sm:$0xff]
    %v2606 = vld [vmem:[#allocation2 + $0x1e9] sm:$0xff]
    %v2607 = vld [vmem:[#allocation2 + $0x1f9] sm:$0xff]
    %v2608 = vld [vmem:[#allocation2 + $0x201] sm:$0xff]
    %v2609 = vld [vmem:[#allocation2 + $0x211] sm:$0xff]
    %v2610 = vld [vmem:[#allocation2 + $0x219] sm:$0xff]
    %v2611 = vld [vmem:[#allocation2 + $0x229] sm:$0xff]
    %v2612 = vld [vmem:[#allocation2 + $0x231] sm:$0xff]
    %v2613 = vld [vmem:[#allocation2 + $0x241] sm:$0xff]
    %v2614 = vld [vmem:[#allocation2 + $0x249] sm:$0xff]
    %v2615 = vld [vmem:[#allocation2 + $0x259] sm:$0xff]
    %v2616 = vld [vmem:[#allocation2 + $0x261] sm:$0xff]
    %v2617 = vld [vmem:[#allocation2 + $0x271] sm:$0xff]
    %v2618 = vld [vmem:[#allocation2 + $0x279] sm:$0xff]
    %v2619 = vld [vmem:[#allocation2 + $0x289] sm:$0xff]
    %v2620 = vld [vmem:[#allocation2 + $0x291] sm:$0xff]
    %v2621 = vld [vmem:[#allocation2 + $0x2a1] sm:$0xff]
    %v2622 = vld [vmem:[#allocation2 + $0x2a9] sm:$0xff]
    %v2623 = vld [vmem:[#allocation2 + $0x2b9] sm:$0xff]
    %v2624 = vld [vmem:[#allocation2 + $0x2c1] sm:$0xff]
    %v2625 = vld [vmem:[#allocation2 + $0x2d1] sm:$0xff]
    %v2626 = vld [vmem:[#allocation2 + $0x2d9] sm:$0xff]
    %v2627 = vld [vmem:[#allocation2 + $0x2e9] sm:$0xff]
    %v2628 = vld [vmem:[#allocation2 + $0x2f1] sm:$0xff]
    %v2629 = vld [vmem:[#allocation2 + $0x301] sm:$0xff]
    %v2630 = vld [vmem:[#allocation2 + $0x309] sm:$0xff]
    %v2631 = vld [vmem:[#allocation2 + $0x319] sm:$0xff]
    %v2632 = vld [vmem:[#allocation2 + $0x321] sm:$0xff]
    %v2633 = vld [vmem:[#allocation2 + $0x331] sm:$0xff]
    %v2634 = vld [vmem:[#allocation2 + $0x339] sm:$0xff]
    %v2635 = vld [vmem:[#allocation2 + $0x349] sm:$0xff]
    %v2636 = vld [vmem:[#allocation2 + $0x351] sm:$0xff]
    %v2637 = vld [vmem:[#allocation2 + $0x2] sm:$0xff]
    %v2638 = vld [vmem:[#allocation2 + $0xa] sm:$0xff]
    %v2639 = vld [vmem:[#allocation2 + $0x1a] sm:$0xff]
    %v2640 = vld [vmem:[#allocation2 + $0x22] sm:$0xff]
    %v2641 = vld [vmem:[#allocation2 + $0x32] sm:$0xff]
    %v2642 = vld [vmem:[#allocation2 + $0x3a] sm:$0xff]
    %v2643 = vld [vmem:[#allocation2 + $0x4a] sm:$0xff]
    %v2644 = vld [vmem:[#allocation2 + $0x52] sm:$0xff]
    %v2645 = vld [vmem:[#allocation2 + $0x62] sm:$0xff]
    %v2646 = vld [vmem:[#allocation2 + $0x6a] sm:$0xff]
    %v2647 = vld [vmem:[#allocation2 + $0x7a] sm:$0xff]
    %v2648 = vld [vmem:[#allocation2 + $0x82] sm:$0xff]
    %v2649 = vld [vmem:[#allocation2 + $0x92] sm:$0xff]
    %v2650 = vld [vmem:[#allocation2 + $0x9a] sm:$0xff]
    %v2651 = vld [vmem:[#allocation2 + $0xaa] sm:$0xff]
    %v2652 = vld [vmem:[#allocation2 + $0xb2] sm:$0xff]
    %v2653 = vld [vmem:[#allocation2 + $0xc2] sm:$0xff]
    %v2654 = vld [vmem:[#allocation2 + $0xca] sm:$0xff]
    %v2655 = vld [vmem:[#allocation2 + $0xda] sm:$0xff]
    %v2656 = vld [vmem:[#allocation2 + $0xe2] sm:$0xff]
    %v2657 = vld [vmem:[#allocation2 + $0xf2] sm:$0xff]
    %v2658 = vld [vmem:[#allocation2 + $0xfa] sm:$0xff]
    %v2659 = vld [vmem:[#allocation2 + $0x10a] sm:$0xff]
    %v2660 = vld [vmem:[#allocation2 + $0x112] sm:$0xff]
    %v2661 = vld [vmem:[#allocation2 + $0x122] sm:$0xff]
    %v2662 = vld [vmem:[#allocation2 + $0x12a] sm:$0xff]
    %v2663 = vld [vmem:[#allocation2 + $0x13a] sm:$0xff]
    %v2664 = vld [vmem:[#allocation2 + $0x142] sm:$0xff]
    %v2665 = vld [vmem:[#allocation2 + $0x152] sm:$0xff]
    %v2666 = vld [vmem:[#allocation2 + $0x15a] sm:$0xff]
    %v2667 = vld [vmem:[#allocation2 + $0x16a] sm:$0xff]
    %v2668 = vld [vmem:[#allocation2 + $0x172] sm:$0xff]
    %v2669 = vld [vmem:[#allocation2 + $0x182] sm:$0xff]
    %v2670 = vld [vmem:[#allocation2 + $0x18a] sm:$0xff]
    %v2671 = vld [vmem:[#allocation2 + $0x19a] sm:$0xff]
    %v2672 = vld [vmem:[#allocation2 + $0x1a2] sm:$0xff]
    %v2673 = vld [vmem:[#allocation2 + $0x1b2] sm:$0xff]
    %v2674 = vld [vmem:[#allocation2 + $0x1ba] sm:$0xff]
    %v2675 = vld [vmem:[#allocation2 + $0x1ca] sm:$0xff]
    %v2676 = vld [vmem:[#allocation2 + $0x1d2] sm:$0xff]
    %v2677 = vld [vmem:[#allocation2 + $0x1e2] sm:$0xff]
    %v2678 = vld [vmem:[#allocation2 + $0x1ea] sm:$0xff]
    %v2679 = vld [vmem:[#allocation2 + $0x1fa] sm:$0xff]
    %v2680 = vld [vmem:[#allocation2 + $0x202] sm:$0xff]
    %v2681 = vld [vmem:[#allocation2 + $0x212] sm:$0xff]
    %v2682 = vld [vmem:[#allocation2 + $0x21a] sm:$0xff]
    %v2683 = vld [vmem:[#allocation2 + $0x22a] sm:$0xff]
    %v2684 = vld [vmem:[#allocation2 + $0x232] sm:$0xff]
    %v2685 = vld [vmem:[#allocation2 + $0x242] sm:$0xff]
    %v2686 = vld [vmem:[#allocation2 + $0x24a] sm:$0xff]
    %v2687 = vld [vmem:[#allocation2 + $0x25a] sm:$0xff]
    %v2688 = vld [vmem:[#allocation2 + $0x262] sm:$0xff]
    %v2689 = vld [vmem:[#allocation2 + $0x272] sm:$0xff]
    %v2690 = vld [vmem:[#allocation2 + $0x27a] sm:$0xff]
    %v2691 = vld [vmem:[#allocation2 + $0x28a] sm:$0xff]
    %v2692 = vld [vmem:[#allocation2 + $0x292] sm:$0xff]
    %v2693 = vld [vmem:[#allocation2 + $0x2a2] sm:$0xff]
    %v2694 = vld [vmem:[#allocation2 + $0x2aa] sm:$0xff]
    %v2695 = vld [vmem:[#allocation2 + $0x2ba] sm:$0xff]
    %v2696 = vld [vmem:[#allocation2 + $0x2c2] sm:$0xff]
    %v2697 = vld [vmem:[#allocation2 + $0x2d2] sm:$0xff]
    %v2698 = vld [vmem:[#allocation2 + $0x2da] sm:$0xff]
    %v2699 = vld [vmem:[#allocation2 + $0x2ea] sm:$0xff]
    %v2700 = vld [vmem:[#allocation2 + $0x2f2] sm:$0xff]
    %v2701 = vld [vmem:[#allocation2 + $0x302] sm:$0xff]
    %v2702 = vld [vmem:[#allocation2 + $0x30a] sm:$0xff]
    %v2703 = vld [vmem:[#allocation2 + $0x31a] sm:$0xff]
    %v2704 = vld [vmem:[#allocation2 + $0x322] sm:$0xff]
    %v2705 = vld [vmem:[#allocation2 + $0x332] sm:$0xff]
    %v2706 = vld [vmem:[#allocation2 + $0x33a] sm:$0xff]
    %v2707 = vld [vmem:[#allocation2 + $0x34a] sm:$0xff]
    %v2708 = vld [vmem:[#allocation2 + $0x352] sm:$0xff]
    %2709 = vrot.lane.b32.xlu0 %v2565, 4
    %v2710 = vpop.permute.xlu0 %2709
    %2711 = vrot.lane.b32.xlu0 %v2566, 4
    %v2712 = vpop.permute.xlu0 %2711
    %2713 = vrot.lane.b32.xlu0 %v2567, 4
    %v2714 = vpop.permute.xlu0 %2713
    %2715 = vrot.lane.b32.xlu0 %v2568, 4
    %v2716 = vpop.permute.xlu0 %2715
    %2717 = vrot.lane.b32.xlu0 %v2569, 4
    %v2718 = vpop.permute.xlu0 %2717
    %2719 = vrot.lane.b32.xlu0 %v2570, 4
    %v2720 = vpop.permute.xlu0 %2719
    %2721 = vrot.lane.b32.xlu0 %v2571, 4
    %v2722 = vpop.permute.xlu0 %2721
    %2723 = vrot.lane.b32.xlu0 %v2572, 4
    %v2724 = vpop.permute.xlu0 %2723
    %2725 = vrot.lane.b32.xlu0 %v2573, 4
    %v2726 = vpop.permute.xlu0 %2725
    %2727 = vrot.lane.b32.xlu0 %v2574, 4
    %v2728 = vpop.permute.xlu0 %2727
    %2729 = vrot.lane.b32.xlu0 %v2575, 4
    %v2730 = vpop.permute.xlu0 %2729
    %2731 = vrot.lane.b32.xlu0 %v2576, 4
    %v2732 = vpop.permute.xlu0 %2731
    %2733 = vrot.lane.b32.xlu0 %v2577, 4
    %v2734 = vpop.permute.xlu0 %2733
    %2735 = vrot.lane.b32.xlu0 %v2578, 4
    %v2736 = vpop.permute.xlu0 %2735
    %2737 = vrot.lane.b32.xlu0 %v2579, 4
    %v2738 = vpop.permute.xlu0 %2737
    %2739 = vrot.lane.b32.xlu0 %v2580, 4
    %v2740 = vpop.permute.xlu0 %2739
    %2741 = vrot.lane.b32.xlu0 %v2581, 4
    %v2742 = vpop.permute.xlu0 %2741
    %2743 = vrot.lane.b32.xlu0 %v2582, 4
    %v2744 = vpop.permute.xlu0 %2743
    %2745 = vrot.lane.b32.xlu0 %v2583, 4
    %v2746 = vpop.permute.xlu0 %2745
    %2747 = vrot.lane.b32.xlu0 %v2584, 4
    %v2748 = vpop.permute.xlu0 %2747
    %2749 = vrot.lane.b32.xlu0 %v2585, 4
    %v2750 = vpop.permute.xlu0 %2749
    %2751 = vrot.lane.b32.xlu0 %v2586, 4
    %v2752 = vpop.permute.xlu0 %2751
    %2753 = vrot.lane.b32.xlu0 %v2587, 4
    %v2754 = vpop.permute.xlu0 %2753
    %2755 = vrot.lane.b32.xlu0 %v2588, 4
    %v2756 = vpop.permute.xlu0 %2755
    %2757 = vrot.lane.b32.xlu0 %v2589, 4
    %v2758 = vpop.permute.xlu0 %2757
    %2759 = vrot.lane.b32.xlu0 %v2590, 4
    %v2760 = vpop.permute.xlu0 %2759
    %2761 = vrot.lane.b32.xlu0 %v2591, 4
    %v2762 = vpop.permute.xlu0 %2761
    %2763 = vrot.lane.b32.xlu0 %v2592, 4
    %v2764 = vpop.permute.xlu0 %2763
    %2765 = vrot.lane.b32.xlu0 %v2593, 4
    %v2766 = vpop.permute.xlu0 %2765
    %2767 = vrot.lane.b32.xlu0 %v2594, 4
    %v2768 = vpop.permute.xlu0 %2767
    %2769 = vrot.lane.b32.xlu0 %v2595, 4
    %v2770 = vpop.permute.xlu0 %2769
    %2771 = vrot.lane.b32.xlu0 %v2596, 4
    %v2772 = vpop.permute.xlu0 %2771
    %2773 = vrot.lane.b32.xlu0 %v2601, 4
    %v2774 = vpop.permute.xlu0 %2773
    %2775 = vrot.lane.b32.xlu0 %v2602, 4
    %v2776 = vpop.permute.xlu0 %2775
    %2777 = vrot.lane.b32.xlu0 %v2603, 4
    %v2778 = vpop.permute.xlu0 %2777
    %2779 = vrot.lane.b32.xlu0 %v2604, 4
    %v2780 = vpop.permute.xlu0 %2779
    %2781 = vrot.lane.b32.xlu0 %v2605, 4
    %v2782 = vpop.permute.xlu0 %2781
    %2783 = vrot.lane.b32.xlu0 %v2606, 4
    %v2784 = vpop.permute.xlu0 %2783
    %2785 = vrot.lane.b32.xlu0 %v2607, 4
    %v2786 = vpop.permute.xlu0 %2785
    %2787 = vrot.lane.b32.xlu0 %v2608, 4
    %v2788 = vpop.permute.xlu0 %2787
    %2789 = vrot.lane.b32.xlu0 %v2609, 4
    %v2790 = vpop.permute.xlu0 %2789
    %2791 = vrot.lane.b32.xlu0 %v2610, 4
    %v2792 = vpop.permute.xlu0 %2791
    %2793 = vrot.lane.b32.xlu0 %v2611, 4
    %v2794 = vpop.permute.xlu0 %2793
    %2795 = vrot.lane.b32.xlu0 %v2612, 4
    %v2796 = vpop.permute.xlu0 %2795
    %2797 = vrot.lane.b32.xlu0 %v2613, 4
    %v2798 = vpop.permute.xlu0 %2797
    %2799 = vrot.lane.b32.xlu0 %v2614, 4
    %v2800 = vpop.permute.xlu0 %2799
    %2801 = vrot.lane.b32.xlu0 %v2615, 4
    %v2802 = vpop.permute.xlu0 %2801
    %2803 = vrot.lane.b32.xlu0 %v2616, 4
    %v2804 = vpop.permute.xlu0 %2803
    %2805 = vrot.lane.b32.xlu0 %v2617, 4
    %v2806 = vpop.permute.xlu0 %2805
    %2807 = vrot.lane.b32.xlu0 %v2618, 4
    %v2808 = vpop.permute.xlu0 %2807
    %2809 = vrot.lane.b32.xlu0 %v2619, 4
    %v2810 = vpop.permute.xlu0 %2809
    %2811 = vrot.lane.b32.xlu0 %v2620, 4
    %v2812 = vpop.permute.xlu0 %2811
    %2813 = vrot.lane.b32.xlu0 %v2621, 4
    %v2814 = vpop.permute.xlu0 %2813
    %2815 = vrot.lane.b32.xlu0 %v2622, 4
    %v2816 = vpop.permute.xlu0 %2815
    %2817 = vrot.lane.b32.xlu0 %v2623, 4
    %v2818 = vpop.permute.xlu0 %2817
    %2819 = vrot.lane.b32.xlu0 %v2624, 4
    %v2820 = vpop.permute.xlu0 %2819
    %2821 = vrot.lane.b32.xlu0 %v2625, 4
    %v2822 = vpop.permute.xlu0 %2821
    %2823 = vrot.lane.b32.xlu0 %v2626, 4
    %v2824 = vpop.permute.xlu0 %2823
    %2825 = vrot.lane.b32.xlu0 %v2627, 4
    %v2826 = vpop.permute.xlu0 %2825
    %2827 = vrot.lane.b32.xlu0 %v2628, 4
    %v2828 = vpop.permute.xlu0 %2827
    %2829 = vrot.lane.b32.xlu0 %v2629, 4
    %v2830 = vpop.permute.xlu0 %2829
    %2831 = vrot.lane.b32.xlu0 %v2630, 4
    %v2832 = vpop.permute.xlu0 %2831
    %2833 = vrot.lane.b32.xlu0 %v2631, 4
    %v2834 = vpop.permute.xlu0 %2833
    %2835 = vrot.lane.b32.xlu0 %v2632, 4
    %v2836 = vpop.permute.xlu0 %2835
    %v2837 = vadd.f32 %v2493, %v2710
    %v2838 = vadd.f32 %v2494, %v2712
    %v2839 = vadd.f32 %v2495, %v2714
    %v2840 = vadd.f32 %v2496, %v2716
    %v2841 = vadd.f32 %v2497, %v2718
    %v2842 = vadd.f32 %v2498, %v2720
    %v2843 = vadd.f32 %v2499, %v2722
    %v2844 = vadd.f32 %v2500, %v2724
    %v2845 = vadd.f32 %v2501, %v2726
    %v2846 = vadd.f32 %v2502, %v2728
    %v2847 = vadd.f32 %v2503, %v2730
    %v2848 = vadd.f32 %v2504, %v2732
    %v2849 = vadd.f32 %v2505, %v2734
    %v2850 = vadd.f32 %v2506, %v2736
    %v2851 = vadd.f32 %v2507, %v2738
    %v2852 = vadd.f32 %v2508, %v2740
    %v2853 = vadd.f32 %v2509, %v2742
    %v2854 = vadd.f32 %v2510, %v2744
    %v2855 = vadd.f32 %v2511, %v2746
    %v2856 = vadd.f32 %v2512, %v2748
    %v2857 = vadd.f32 %v2513, %v2750
    %v2858 = vadd.f32 %v2514, %v2752
    %v2859 = vadd.f32 %v2515, %v2754
    %v2860 = vadd.f32 %v2516, %v2756
    %v2861 = vadd.f32 %v2517, %v2758
    %v2862 = vadd.f32 %v2518, %v2760
    %v2863 = vadd.f32 %v2519, %v2762
    %v2864 = vadd.f32 %v2520, %v2764
    %v2865 = vadd.f32 %v2521, %v2766
    %v2866 = vadd.f32 %v2522, %v2768
    %v2867 = vadd.f32 %v2523, %v2770
    %v2868 = vadd.f32 %v2524, %v2772
    %v2869 = vadd.f32 %v2529, %v2774
    %v2870 = vadd.f32 %v2530, %v2776
    %v2871 = vadd.f32 %v2531, %v2778
    %v2872 = vadd.f32 %v2532, %v2780
    %v2873 = vadd.f32 %v2533, %v2782
    %v2874 = vadd.f32 %v2534, %v2784
    %v2875 = vadd.f32 %v2535, %v2786
    %v2876 = vadd.f32 %v2536, %v2788
    %v2877 = vadd.f32 %v2537, %v2790
    %v2878 = vadd.f32 %v2538, %v2792
    %v2879 = vadd.f32 %v2539, %v2794
    %v2880 = vadd.f32 %v2540, %v2796
    %v2881 = vadd.f32 %v2541, %v2798
    %v2882 = vadd.f32 %v2542, %v2800
    %v2883 = vadd.f32 %v2543, %v2802
    %v2884 = vadd.f32 %v2544, %v2804
    %v2885 = vadd.f32 %v2545, %v2806
    %v2886 = vadd.f32 %v2546, %v2808
    %v2887 = vadd.f32 %v2547, %v2810
    %v2888 = vadd.f32 %v2548, %v2812
    %v2889 = vadd.f32 %v2549, %v2814
    %v2890 = vadd.f32 %v2550, %v2816
    %v2891 = vadd.f32 %v2551, %v2818
    %v2892 = vadd.f32 %v2552, %v2820
    %v2893 = vadd.f32 %v2553, %v2822
    %v2894 = vadd.f32 %v2554, %v2824
    %v2895 = vadd.f32 %v2555, %v2826
    %v2896 = vadd.f32 %v2556, %v2828
    %v2897 = vadd.f32 %v2557, %v2830
    %v2898 = vadd.f32 %v2558, %v2832
    %v2899 = vadd.f32 %v2559, %v2834
    %v2900 = vadd.f32 %v2560, %v2836
    %2901 = vrot.lane.b32.xlu0 %v2637, 8
    %v2902 = vpop.permute.xlu0 %2901
    %2903 = vrot.lane.b32.xlu0 %v2638, 8
    %v2904 = vpop.permute.xlu0 %2903
    %2905 = vrot.lane.b32.xlu0 %v2639, 8
    %v2906 = vpop.permute.xlu0 %2905
    %2907 = vrot.lane.b32.xlu0 %v2640, 8
    %v2908 = vpop.permute.xlu0 %2907
    %2909 = vrot.lane.b32.xlu0 %v2641, 8
    %v2910 = vpop.permute.xlu0 %2909
    %2911 = vrot.lane.b32.xlu0 %v2642, 8
    %v2912 = vpop.permute.xlu0 %2911
    %2913 = vrot.lane.b32.xlu0 %v2643, 8
    %v2914 = vpop.permute.xlu0 %2913
    %2915 = vrot.lane.b32.xlu0 %v2644, 8
    %v2916 = vpop.permute.xlu0 %2915
    %2917 = vrot.lane.b32.xlu0 %v2645, 8
    %v2918 = vpop.permute.xlu0 %2917
    %2919 = vrot.lane.b32.xlu0 %v2646, 8
    %v2920 = vpop.permute.xlu0 %2919
    %2921 = vrot.lane.b32.xlu0 %v2647, 8
    %v2922 = vpop.permute.xlu0 %2921
    %2923 = vrot.lane.b32.xlu0 %v2648, 8
    %v2924 = vpop.permute.xlu0 %2923
    %2925 = vrot.lane.b32.xlu0 %v2649, 8
    %v2926 = vpop.permute.xlu0 %2925
    %2927 = vrot.lane.b32.xlu0 %v2650, 8
    %v2928 = vpop.permute.xlu0 %2927
    %2929 = vrot.lane.b32.xlu0 %v2651, 8
    %v2930 = vpop.permute.xlu0 %2929
    %2931 = vrot.lane.b32.xlu0 %v2652, 8
    %v2932 = vpop.permute.xlu0 %2931
    %2933 = vrot.lane.b32.xlu0 %v2653, 8
    %v2934 = vpop.permute.xlu0 %2933
    %2935 = vrot.lane.b32.xlu0 %v2654, 8
    %v2936 = vpop.permute.xlu0 %2935
    %2937 = vrot.lane.b32.xlu0 %v2655, 8
    %v2938 = vpop.permute.xlu0 %2937
    %2939 = vrot.lane.b32.xlu0 %v2656, 8
    %v2940 = vpop.permute.xlu0 %2939
    %2941 = vrot.lane.b32.xlu0 %v2657, 8
    %v2942 = vpop.permute.xlu0 %2941
    %2943 = vrot.lane.b32.xlu0 %v2658, 8
    %v2944 = vpop.permute.xlu0 %2943
    %2945 = vrot.lane.b32.xlu0 %v2659, 8
    %v2946 = vpop.permute.xlu0 %2945
    %2947 = vrot.lane.b32.xlu0 %v2660, 8
    %v2948 = vpop.permute.xlu0 %2947
    %2949 = vrot.lane.b32.xlu0 %v2661, 8
    %v2950 = vpop.permute.xlu0 %2949
    %2951 = vrot.lane.b32.xlu0 %v2662, 8
    %v2952 = vpop.permute.xlu0 %2951
    %2953 = vrot.lane.b32.xlu0 %v2663, 8
    %v2954 = vpop.permute.xlu0 %2953
    %2955 = vrot.lane.b32.xlu0 %v2664, 8
    %v2956 = vpop.permute.xlu0 %2955
    %2957 = vrot.lane.b32.xlu0 %v2665, 8
    %v2958 = vpop.permute.xlu0 %2957
    %2959 = vrot.lane.b32.xlu0 %v2666, 8
    %v2960 = vpop.permute.xlu0 %2959
    %2961 = vrot.lane.b32.xlu0 %v2667, 8
    %v2962 = vpop.permute.xlu0 %2961
    %2963 = vrot.lane.b32.xlu0 %v2668, 8
    %v2964 = vpop.permute.xlu0 %2963
    %2965 = vrot.lane.b32.xlu0 %v2673, 8
    %v2966 = vpop.permute.xlu0 %2965
    %2967 = vrot.lane.b32.xlu0 %v2674, 8
    %v2968 = vpop.permute.xlu0 %2967
    %2969 = vrot.lane.b32.xlu0 %v2675, 8
    %v2970 = vpop.permute.xlu0 %2969
    %2971 = vrot.lane.b32.xlu0 %v2676, 8
    %v2972 = vpop.permute.xlu0 %2971
    %2973 = vrot.lane.b32.xlu0 %v2677, 8
    %v2974 = vpop.permute.xlu0 %2973
    %2975 = vrot.lane.b32.xlu0 %v2678, 8
    %v2976 = vpop.permute.xlu0 %2975
    %2977 = vrot.lane.b32.xlu0 %v2679, 8
    %v2978 = vpop.permute.xlu0 %2977
    %2979 = vrot.lane.b32.xlu0 %v2680, 8
    %v2980 = vpop.permute.xlu0 %2979
    %2981 = vrot.lane.b32.xlu0 %v2681, 8
    %v2982 = vpop.permute.xlu0 %2981
    %2983 = vrot.lane.b32.xlu0 %v2682, 8
    %v2984 = vpop.permute.xlu0 %2983
    %2985 = vrot.lane.b32.xlu0 %v2683, 8
    %v2986 = vpop.permute.xlu0 %2985
    %2987 = vrot.lane.b32.xlu0 %v2684, 8
    %v2988 = vpop.permute.xlu0 %2987
    %2989 = vrot.lane.b32.xlu0 %v2685, 8
    %v2990 = vpop.permute.xlu0 %2989
    %2991 = vrot.lane.b32.xlu0 %v2686, 8
    %v2992 = vpop.permute.xlu0 %2991
    %2993 = vrot.lane.b32.xlu0 %v2687, 8
    %v2994 = vpop.permute.xlu0 %2993
    %2995 = vrot.lane.b32.xlu0 %v2688, 8
    %v2996 = vpop.permute.xlu0 %2995
    %2997 = vrot.lane.b32.xlu0 %v2689, 8
    %v2998 = vpop.permute.xlu0 %2997
    %2999 = vrot.lane.b32.xlu0 %v2690, 8
    %v3000 = vpop.permute.xlu0 %2999
    %3001 = vrot.lane.b32.xlu0 %v2691, 8
    %v3002 = vpop.permute.xlu0 %3001
    %3003 = vrot.lane.b32.xlu0 %v2692, 8
    %v3004 = vpop.permute.xlu0 %3003
    %3005 = vrot.lane.b32.xlu0 %v2693, 8
    %v3006 = vpop.permute.xlu0 %3005
    %3007 = vrot.lane.b32.xlu0 %v2694, 8
    %v3008 = vpop.permute.xlu0 %3007
    %3009 = vrot.lane.b32.xlu0 %v2695, 8
    %v3010 = vpop.permute.xlu0 %3009
    %3011 = vrot.lane.b32.xlu0 %v2696, 8
    %v3012 = vpop.permute.xlu0 %3011
    %3013 = vrot.lane.b32.xlu0 %v2697, 8
    %v3014 = vpop.permute.xlu0 %3013
    %3015 = vrot.lane.b32.xlu0 %v2698, 8
    %v3016 = vpop.permute.xlu0 %3015
    %3017 = vrot.lane.b32.xlu0 %v2699, 8
    %v3018 = vpop.permute.xlu0 %3017
    %3019 = vrot.lane.b32.xlu0 %v2700, 8
    %v3020 = vpop.permute.xlu0 %3019
    %3021 = vrot.lane.b32.xlu0 %v2701, 8
    %v3022 = vpop.permute.xlu0 %3021
    %3023 = vrot.lane.b32.xlu0 %v2702, 8
    %v3024 = vpop.permute.xlu0 %3023
    %3025 = vrot.lane.b32.xlu0 %v2703, 8
    %v3026 = vpop.permute.xlu0 %3025
    %3027 = vrot.lane.b32.xlu0 %v2704, 8
    %v3028 = vpop.permute.xlu0 %3027
    %v3029 = vadd.f32 %v2837, %v2902
    %v3030 = vadd.f32 %v2838, %v2904
    %v3031 = vadd.f32 %v2839, %v2906
    %v3032 = vadd.f32 %v2840, %v2908
    %v3033 = vadd.f32 %v2841, %v2910
    %v3034 = vadd.f32 %v2842, %v2912
    %v3035 = vadd.f32 %v2843, %v2914
    %v3036 = vadd.f32 %v2844, %v2916
    %v3037 = vadd.f32 %v2845, %v2918
    %v3038 = vadd.f32 %v2846, %v2920
    %v3039 = vadd.f32 %v2847, %v2922
    %v3040 = vadd.f32 %v2848, %v2924
    %v3041 = vadd.f32 %v2849, %v2926
    %v3042 = vadd.f32 %v2850, %v2928
    %v3043 = vadd.f32 %v2851, %v2930
    %v3044 = vadd.f32 %v2852, %v2932
    %v3045 = vadd.f32 %v2853, %v2934
    %v3046 = vadd.f32 %v2854, %v2936
    %v3047 = vadd.f32 %v2855, %v2938
    %v3048 = vadd.f32 %v2856, %v2940
    %v3049 = vadd.f32 %v2857, %v2942
    %v3050 = vadd.f32 %v2858, %v2944
    %v3051 = vadd.f32 %v2859, %v2946
    %v3052 = vadd.f32 %v2860, %v2948
    %v3053 = vadd.f32 %v2861, %v2950
    %v3054 = vadd.f32 %v2862, %v2952
    %v3055 = vadd.f32 %v2863, %v2954
    %v3056 = vadd.f32 %v2864, %v2956
    %v3057 = vadd.f32 %v2865, %v2958
    %v3058 = vadd.f32 %v2866, %v2960
    %v3059 = vadd.f32 %v2867, %v2962
    %v3060 = vadd.f32 %v2868, %v2964
    %v3061 = vadd.f32 %v2869, %v2966
    %v3062 = vadd.f32 %v2870, %v2968
    %v3063 = vadd.f32 %v2871, %v2970
    %v3064 = vadd.f32 %v2872, %v2972
    %v3065 = vadd.f32 %v2873, %v2974
    %v3066 = vadd.f32 %v2874, %v2976
    %v3067 = vadd.f32 %v2875, %v2978
    %v3068 = vadd.f32 %v2876, %v2980
    %v3069 = vadd.f32 %v2877, %v2982
    %v3070 = vadd.f32 %v2878, %v2984
    %v3071 = vadd.f32 %v2879, %v2986
    %v3072 = vadd.f32 %v2880, %v2988
    %v3073 = vadd.f32 %v2881, %v2990
    %v3074 = vadd.f32 %v2882, %v2992
    %v3075 = vadd.f32 %v2883, %v2994
    %v3076 = vadd.f32 %v2884, %v2996
    %v3077 = vadd.f32 %v2885, %v2998
    %v3078 = vadd.f32 %v2886, %v3000
    %v3079 = vadd.f32 %v2887, %v3002
    %v3080 = vadd.f32 %v2888, %v3004
    %v3081 = vadd.f32 %v2889, %v3006
    %v3082 = vadd.f32 %v2890, %v3008
    %v3083 = vadd.f32 %v2891, %v3010
    %v3084 = vadd.f32 %v2892, %v3012
    %v3085 = vadd.f32 %v2893, %v3014
    %v3086 = vadd.f32 %v2894, %v3016
    %v3087 = vadd.f32 %v2895, %v3018
    %v3088 = vadd.f32 %v2896, %v3020
    %v3089 = vadd.f32 %v2897, %v3022
    %v3090 = vadd.f32 %v2898, %v3024
    %v3091 = vadd.f32 %v2899, %v3026
    %v3092 = vadd.f32 %v2900, %v3028
    %3093 = vrot.lane.b32.xlu0 %v2495, 12
    %v3094 = vpop.permute.xlu0 %3093
    %3095 = vrot.lane.b32.xlu0 %v2496, 12
    %v3096 = vpop.permute.xlu0 %3095
    %3097 = vrot.lane.b32.xlu0 %v2497, 12
    %v3098 = vpop.permute.xlu0 %3097
    %3099 = vrot.lane.b32.xlu0 %v2498, 12
    %v3100 = vpop.permute.xlu0 %3099
    %3101 = vrot.lane.b32.xlu0 %v2499, 12
    %v3102 = vpop.permute.xlu0 %3101
    %3103 = vrot.lane.b32.xlu0 %v2500, 12
    %v3104 = vpop.permute.xlu0 %3103
    %3105 = vrot.lane.b32.xlu0 %v2501, 12
    %v3106 = vpop.permute.xlu0 %3105
    %3107 = vrot.lane.b32.xlu0 %v2502, 12
    %v3108 = vpop.permute.xlu0 %3107
    %3109 = vrot.lane.b32.xlu0 %v2503, 12
    %v3110 = vpop.permute.xlu0 %3109
    %3111 = vrot.lane.b32.xlu0 %v2504, 12
    %v3112 = vpop.permute.xlu0 %3111
    %3113 = vrot.lane.b32.xlu0 %v2505, 12
    %v3114 = vpop.permute.xlu0 %3113
    %3115 = vrot.lane.b32.xlu0 %v2506, 12
    %v3116 = vpop.permute.xlu0 %3115
    %3117 = vrot.lane.b32.xlu0 %v2507, 12
    %v3118 = vpop.permute.xlu0 %3117
    %3119 = vrot.lane.b32.xlu0 %v2508, 12
    %v3120 = vpop.permute.xlu0 %3119
    %3121 = vrot.lane.b32.xlu0 %v2509, 12
    %v3122 = vpop.permute.xlu0 %3121
    %3123 = vrot.lane.b32.xlu0 %v2510, 12
    %v3124 = vpop.permute.xlu0 %3123
    %3125 = vrot.lane.b32.xlu0 %v2511, 12
    %v3126 = vpop.permute.xlu0 %3125
    %3127 = vrot.lane.b32.xlu0 %v2512, 12
    %v3128 = vpop.permute.xlu0 %3127
    %3129 = vrot.lane.b32.xlu0 %v2513, 12
    %v3130 = vpop.permute.xlu0 %3129
    %3131 = vrot.lane.b32.xlu0 %v2514, 12
    %v3132 = vpop.permute.xlu0 %3131
    %3133 = vrot.lane.b32.xlu0 %v2515, 12
    %v3134 = vpop.permute.xlu0 %3133
    %3135 = vrot.lane.b32.xlu0 %v2516, 12
    %v3136 = vpop.permute.xlu0 %3135
    %3137 = vrot.lane.b32.xlu0 %v2517, 12
    %v3138 = vpop.permute.xlu0 %3137
    %3139 = vrot.lane.b32.xlu0 %v2518, 12
    %v3140 = vpop.permute.xlu0 %3139
    %3141 = vrot.lane.b32.xlu0 %v2519, 12
    %v3142 = vpop.permute.xlu0 %3141
    %3143 = vrot.lane.b32.xlu0 %v2520, 12
    %v3144 = vpop.permute.xlu0 %3143
    %3145 = vrot.lane.b32.xlu0 %v2521, 12
    %v3146 = vpop.permute.xlu0 %3145
    %3147 = vrot.lane.b32.xlu0 %v2522, 12
    %v3148 = vpop.permute.xlu0 %3147
    %3149 = vrot.lane.b32.xlu0 %v2523, 12
    %v3150 = vpop.permute.xlu0 %3149
    %3151 = vrot.lane.b32.xlu0 %v2524, 12
    %v3152 = vpop.permute.xlu0 %3151
    %3153 = vrot.lane.b32.xlu0 %v2525, 12
    %v3154 = vpop.permute.xlu0 %3153
    %3155 = vrot.lane.b32.xlu0 %v2526, 12
    %v3156 = vpop.permute.xlu0 %3155
    %3157 = vrot.lane.b32.xlu0 %v2531, 12
    %v3158 = vpop.permute.xlu0 %3157
    %3159 = vrot.lane.b32.xlu0 %v2532, 12
    %v3160 = vpop.permute.xlu0 %3159
    %3161 = vrot.lane.b32.xlu0 %v2533, 12
    %v3162 = vpop.permute.xlu0 %3161
    %3163 = vrot.lane.b32.xlu0 %v2534, 12
    %v3164 = vpop.permute.xlu0 %3163
    %3165 = vrot.lane.b32.xlu0 %v2535, 12
    %v3166 = vpop.permute.xlu0 %3165
    %3167 = vrot.lane.b32.xlu0 %v2536, 12
    %v3168 = vpop.permute.xlu0 %3167
    %3169 = vrot.lane.b32.xlu0 %v2537, 12
    %v3170 = vpop.permute.xlu0 %3169
    %3171 = vrot.lane.b32.xlu0 %v2538, 12
    %v3172 = vpop.permute.xlu0 %3171
    %3173 = vrot.lane.b32.xlu0 %v2539, 12
    %v3174 = vpop.permute.xlu0 %3173
    %3175 = vrot.lane.b32.xlu0 %v2540, 12
    %v3176 = vpop.permute.xlu0 %3175
    %3177 = vrot.lane.b32.xlu0 %v2541, 12
    %v3178 = vpop.permute.xlu0 %3177
    %3179 = vrot.lane.b32.xlu0 %v2542, 12
    %v3180 = vpop.permute.xlu0 %3179
    %3181 = vrot.lane.b32.xlu0 %v2543, 12
    %v3182 = vpop.permute.xlu0 %3181
    %3183 = vrot.lane.b32.xlu0 %v2544, 12
    %v3184 = vpop.permute.xlu0 %3183
    %3185 = vrot.lane.b32.xlu0 %v2545, 12
    %v3186 = vpop.permute.xlu0 %3185
    %3187 = vrot.lane.b32.xlu0 %v2546, 12
    %v3188 = vpop.permute.xlu0 %3187
    %3189 = vrot.lane.b32.xlu0 %v2547, 12
    %v3190 = vpop.permute.xlu0 %3189
    %3191 = vrot.lane.b32.xlu0 %v2548, 12
    %v3192 = vpop.permute.xlu0 %3191
    %3193 = vrot.lane.b32.xlu0 %v2549, 12
    %v3194 = vpop.permute.xlu0 %3193
    %3195 = vrot.lane.b32.xlu0 %v2550, 12
    %v3196 = vpop.permute.xlu0 %3195
    %3197 = vrot.lane.b32.xlu0 %v2551, 12
    %v3198 = vpop.permute.xlu0 %3197
    %3199 = vrot.lane.b32.xlu0 %v2552, 12
    %v3200 = vpop.permute.xlu0 %3199
    %3201 = vrot.lane.b32.xlu0 %v2553, 12
    %v3202 = vpop.permute.xlu0 %3201
    %3203 = vrot.lane.b32.xlu0 %v2554, 12
    %v3204 = vpop.permute.xlu0 %3203
    %3205 = vrot.lane.b32.xlu0 %v2555, 12
    %v3206 = vpop.permute.xlu0 %3205
    %3207 = vrot.lane.b32.xlu0 %v2556, 12
    %v3208 = vpop.permute.xlu0 %3207
    %3209 = vrot.lane.b32.xlu0 %v2557, 12
    %v3210 = vpop.permute.xlu0 %3209
    %3211 = vrot.lane.b32.xlu0 %v2558, 12
    %v3212 = vpop.permute.xlu0 %3211
    %3213 = vrot.lane.b32.xlu0 %v2559, 12
    %v3214 = vpop.permute.xlu0 %3213
    %3215 = vrot.lane.b32.xlu0 %v2560, 12
    %v3216 = vpop.permute.xlu0 %3215
    %3217 = vrot.lane.b32.xlu0 %v2561, 12
    %v3218 = vpop.permute.xlu0 %3217
    %3219 = vrot.lane.b32.xlu0 %v2562, 12
    %v3220 = vpop.permute.xlu0 %3219
    %v3221 = vadd.f32 %v3029, %v3094
    %v3222 = vadd.f32 %v3030, %v3096
    %v3223 = vadd.f32 %v3031, %v3098
    %v3224 = vadd.f32 %v3032, %v3100
    %v3225 = vadd.f32 %v3033, %v3102
    %v3226 = vadd.f32 %v3034, %v3104
    %v3227 = vadd.f32 %v3035, %v3106
    %v3228 = vadd.f32 %v3036, %v3108
    %v3229 = vadd.f32 %v3037, %v3110
    %v3230 = vadd.f32 %v3038, %v3112
    %v3231 = vadd.f32 %v3039, %v3114
    %v3232 = vadd.f32 %v3040, %v3116
    %v3233 = vadd.f32 %v3041, %v3118
    %v3234 = vadd.f32 %v3042, %v3120
    %v3235 = vadd.f32 %v3043, %v3122
    %v3236 = vadd.f32 %v3044, %v3124
    %v3237 = vadd.f32 %v3045, %v3126
    %v3238 = vadd.f32 %v3046, %v3128
    %v3239 = vadd.f32 %v3047, %v3130
    %v3240 = vadd.f32 %v3048, %v3132
    %v3241 = vadd.f32 %v3049, %v3134
    %v3242 = vadd.f32 %v3050, %v3136
    %v3243 = vadd.f32 %v3051, %v3138
    %v3244 = vadd.f32 %v3052, %v3140
    %v3245 = vadd.f32 %v3053, %v3142
    %v3246 = vadd.f32 %v3054, %v3144
    %v3247 = vadd.f32 %v3055, %v3146
    %v3248 = vadd.f32 %v3056, %v3148
    %v3249 = vadd.f32 %v3057, %v3150
    %v3250 = vadd.f32 %v3058, %v3152
    %v3251 = vadd.f32 %v3059, %v3154
    %v3252 = vadd.f32 %v3060, %v3156
    %v3253 = vadd.f32 %v3061, %v3158
    %v3254 = vadd.f32 %v3062, %v3160
    %v3255 = vadd.f32 %v3063, %v3162
    %v3256 = vadd.f32 %v3064, %v3164
    %v3257 = vadd.f32 %v3065, %v3166
    %v3258 = vadd.f32 %v3066, %v3168
    %v3259 = vadd.f32 %v3067, %v3170
    %v3260 = vadd.f32 %v3068, %v3172
    %v3261 = vadd.f32 %v3069, %v3174
    %v3262 = vadd.f32 %v3070, %v3176
    %v3263 = vadd.f32 %v3071, %v3178
    %v3264 = vadd.f32 %v3072, %v3180
    %v3265 = vadd.f32 %v3073, %v3182
    %v3266 = vadd.f32 %v3074, %v3184
    %v3267 = vadd.f32 %v3075, %v3186
    %v3268 = vadd.f32 %v3076, %v3188
    %v3269 = vadd.f32 %v3077, %v3190
    %v3270 = vadd.f32 %v3078, %v3192
    %v3271 = vadd.f32 %v3079, %v3194
    %v3272 = vadd.f32 %v3080, %v3196
    %v3273 = vadd.f32 %v3081, %v3198
    %v3274 = vadd.f32 %v3082, %v3200
    %v3275 = vadd.f32 %v3083, %v3202
    %v3276 = vadd.f32 %v3084, %v3204
    %v3277 = vadd.f32 %v3085, %v3206
    %v3278 = vadd.f32 %v3086, %v3208
    %v3279 = vadd.f32 %v3087, %v3210
    %v3280 = vadd.f32 %v3088, %v3212
    %v3281 = vadd.f32 %v3089, %v3214
    %v3282 = vadd.f32 %v3090, %v3216
    %v3283 = vadd.f32 %v3091, %v3218
    %v3284 = vadd.f32 %v3092, %v3220
    %3285 = vrot.lane.b32.xlu0 %v2567, 16
    %v3286 = vpop.permute.xlu0 %3285
    %3287 = vrot.lane.b32.xlu0 %v2568, 16
    %v3288 = vpop.permute.xlu0 %3287
    %3289 = vrot.lane.b32.xlu0 %v2569, 16
    %v3290 = vpop.permute.xlu0 %3289
    %3291 = vrot.lane.b32.xlu0 %v2570, 16
    %v3292 = vpop.permute.xlu0 %3291
    %3293 = vrot.lane.b32.xlu0 %v2571, 16
    %v3294 = vpop.permute.xlu0 %3293
    %3295 = vrot.lane.b32.xlu0 %v2572, 16
    %v3296 = vpop.permute.xlu0 %3295
    %3297 = vrot.lane.b32.xlu0 %v2573, 16
    %v3298 = vpop.permute.xlu0 %3297
    %3299 = vrot.lane.b32.xlu0 %v2574, 16
    %v3300 = vpop.permute.xlu0 %3299
    %3301 = vrot.lane.b32.xlu0 %v2575, 16
    %v3302 = vpop.permute.xlu0 %3301
    %3303 = vrot.lane.b32.xlu0 %v2576, 16
    %v3304 = vpop.permute.xlu0 %3303
    %3305 = vrot.lane.b32.xlu0 %v2577, 16
    %v3306 = vpop.permute.xlu0 %3305
    %3307 = vrot.lane.b32.xlu0 %v2578, 16
    %v3308 = vpop.permute.xlu0 %3307
    %3309 = vrot.lane.b32.xlu0 %v2579, 16
    %v3310 = vpop.permute.xlu0 %3309
    %3311 = vrot.lane.b32.xlu0 %v2580, 16
    %v3312 = vpop.permute.xlu0 %3311
    %3313 = vrot.lane.b32.xlu0 %v2581, 16
    %v3314 = vpop.permute.xlu0 %3313
    %3315 = vrot.lane.b32.xlu0 %v2582, 16
    %v3316 = vpop.permute.xlu0 %3315
    %3317 = vrot.lane.b32.xlu0 %v2583, 16
    %v3318 = vpop.permute.xlu0 %3317
    %3319 = vrot.lane.b32.xlu0 %v2584, 16
    %v3320 = vpop.permute.xlu0 %3319
    %3321 = vrot.lane.b32.xlu0 %v2585, 16
    %v3322 = vpop.permute.xlu0 %3321
    %3323 = vrot.lane.b32.xlu0 %v2586, 16
    %v3324 = vpop.permute.xlu0 %3323
    %3325 = vrot.lane.b32.xlu0 %v2587, 16
    %v3326 = vpop.permute.xlu0 %3325
    %3327 = vrot.lane.b32.xlu0 %v2588, 16
    %v3328 = vpop.permute.xlu0 %3327
    %3329 = vrot.lane.b32.xlu0 %v2589, 16
    %v3330 = vpop.permute.xlu0 %3329
    %3331 = vrot.lane.b32.xlu0 %v2590, 16
    %v3332 = vpop.permute.xlu0 %3331
    %3333 = vrot.lane.b32.xlu0 %v2591, 16
    %v3334 = vpop.permute.xlu0 %3333
    %3335 = vrot.lane.b32.xlu0 %v2592, 16
    %v3336 = vpop.permute.xlu0 %3335
    %3337 = vrot.lane.b32.xlu0 %v2593, 16
    %v3338 = vpop.permute.xlu0 %3337
    %3339 = vrot.lane.b32.xlu0 %v2594, 16
    %v3340 = vpop.permute.xlu0 %3339
    %3341 = vrot.lane.b32.xlu0 %v2595, 16
    %v3342 = vpop.permute.xlu0 %3341
    %3343 = vrot.lane.b32.xlu0 %v2596, 16
    %v3344 = vpop.permute.xlu0 %3343
    %3345 = vrot.lane.b32.xlu0 %v2597, 16
    %v3346 = vpop.permute.xlu0 %3345
    %3347 = vrot.lane.b32.xlu0 %v2598, 16
    %v3348 = vpop.permute.xlu0 %3347
    %3349 = vrot.lane.b32.xlu0 %v2603, 16
    %v3350 = vpop.permute.xlu0 %3349
    %3351 = vrot.lane.b32.xlu0 %v2604, 16
    %v3352 = vpop.permute.xlu0 %3351
    %3353 = vrot.lane.b32.xlu0 %v2605, 16
    %v3354 = vpop.permute.xlu0 %3353
    %3355 = vrot.lane.b32.xlu0 %v2606, 16
    %v3356 = vpop.permute.xlu0 %3355
    %3357 = vrot.lane.b32.xlu0 %v2607, 16
    %v3358 = vpop.permute.xlu0 %3357
    %3359 = vrot.lane.b32.xlu0 %v2608, 16
    %v3360 = vpop.permute.xlu0 %3359
    %3361 = vrot.lane.b32.xlu0 %v2609, 16
    %v3362 = vpop.permute.xlu0 %3361
    %3363 = vrot.lane.b32.xlu0 %v2610, 16
    %v3364 = vpop.permute.xlu0 %3363
    %3365 = vrot.lane.b32.xlu0 %v2611, 16
    %v3366 = vpop.permute.xlu0 %3365
    %3367 = vrot.lane.b32.xlu0 %v2612, 16
    %v3368 = vpop.permute.xlu0 %3367
    %3369 = vrot.lane.b32.xlu0 %v2613, 16
    %v3370 = vpop.permute.xlu0 %3369
    %3371 = vrot.lane.b32.xlu0 %v2614, 16
    %v3372 = vpop.permute.xlu0 %3371
    %3373 = vrot.lane.b32.xlu0 %v2615, 16
    %v3374 = vpop.permute.xlu0 %3373
    %3375 = vrot.lane.b32.xlu0 %v2616, 16
    %v3376 = vpop.permute.xlu0 %3375
    %3377 = vrot.lane.b32.xlu0 %v2617, 16
    %v3378 = vpop.permute.xlu0 %3377
    %3379 = vrot.lane.b32.xlu0 %v2618, 16
    %v3380 = vpop.permute.xlu0 %3379
    %3381 = vrot.lane.b32.xlu0 %v2619, 16
    %v3382 = vpop.permute.xlu0 %3381
    %3383 = vrot.lane.b32.xlu0 %v2620, 16
    %v3384 = vpop.permute.xlu0 %3383
    %3385 = vrot.lane.b32.xlu0 %v2621, 16
    %v3386 = vpop.permute.xlu0 %3385
    %3387 = vrot.lane.b32.xlu0 %v2622, 16
    %v3388 = vpop.permute.xlu0 %3387
    %3389 = vrot.lane.b32.xlu0 %v2623, 16
    %v3390 = vpop.permute.xlu0 %3389
    %3391 = vrot.lane.b32.xlu0 %v2624, 16
    %v3392 = vpop.permute.xlu0 %3391
    %3393 = vrot.lane.b32.xlu0 %v2625, 16
    %v3394 = vpop.permute.xlu0 %3393
    %3395 = vrot.lane.b32.xlu0 %v2626, 16
    %v3396 = vpop.permute.xlu0 %3395
    %3397 = vrot.lane.b32.xlu0 %v2627, 16
    %v3398 = vpop.permute.xlu0 %3397
    %3399 = vrot.lane.b32.xlu0 %v2628, 16
    %v3400 = vpop.permute.xlu0 %3399
    %3401 = vrot.lane.b32.xlu0 %v2629, 16
    %v3402 = vpop.permute.xlu0 %3401
    %3403 = vrot.lane.b32.xlu0 %v2630, 16
    %v3404 = vpop.permute.xlu0 %3403
    %3405 = vrot.lane.b32.xlu0 %v2631, 16
    %v3406 = vpop.permute.xlu0 %3405
    %3407 = vrot.lane.b32.xlu0 %v2632, 16
    %v3408 = vpop.permute.xlu0 %3407
    %3409 = vrot.lane.b32.xlu0 %v2633, 16
    %v3410 = vpop.permute.xlu0 %3409
    %3411 = vrot.lane.b32.xlu0 %v2634, 16
    %v3412 = vpop.permute.xlu0 %3411
    %v3413 = vadd.f32 %v3221, %v3286
    %v3414 = vadd.f32 %v3222, %v3288
    %v3415 = vadd.f32 %v3223, %v3290
    %v3416 = vadd.f32 %v3224, %v3292
    %v3417 = vadd.f32 %v3225, %v3294
    %v3418 = vadd.f32 %v3226, %v3296
    %v3419 = vadd.f32 %v3227, %v3298
    %v3420 = vadd.f32 %v3228, %v3300
    %v3421 = vadd.f32 %v3229, %v3302
    %v3422 = vadd.f32 %v3230, %v3304
    %v3423 = vadd.f32 %v3231, %v3306
    %v3424 = vadd.f32 %v3232, %v3308
    %v3425 = vadd.f32 %v3233, %v3310
    %v3426 = vadd.f32 %v3234, %v3312
    %v3427 = vadd.f32 %v3235, %v3314
    %v3428 = vadd.f32 %v3236, %v3316
    %v3429 = vadd.f32 %v3237, %v3318
    %v3430 = vadd.f32 %v3238, %v3320
    %v3431 = vadd.f32 %v3239, %v3322
    %v3432 = vadd.f32 %v3240, %v3324
    %v3433 = vadd.f32 %v3241, %v3326
    %v3434 = vadd.f32 %v3242, %v3328
    %v3435 = vadd.f32 %v3243, %v3330
    %v3436 = vadd.f32 %v3244, %v3332
    %v3437 = vadd.f32 %v3245, %v3334
    %v3438 = vadd.f32 %v3246, %v3336
    %v3439 = vadd.f32 %v3247, %v3338
    %v3440 = vadd.f32 %v3248, %v3340
    %v3441 = vadd.f32 %v3249, %v3342
    %v3442 = vadd.f32 %v3250, %v3344
    %v3443 = vadd.f32 %v3251, %v3346
    %v3444 = vadd.f32 %v3252, %v3348
    %v3445 = vadd.f32 %v3253, %v3350
    %v3446 = vadd.f32 %v3254, %v3352
    %v3447 = vadd.f32 %v3255, %v3354
    %v3448 = vadd.f32 %v3256, %v3356
    %v3449 = vadd.f32 %v3257, %v3358
    %v3450 = vadd.f32 %v3258, %v3360
    %v3451 = vadd.f32 %v3259, %v3362
    %v3452 = vadd.f32 %v3260, %v3364
    %v3453 = vadd.f32 %v3261, %v3366
    %v3454 = vadd.f32 %v3262, %v3368
    %v3455 = vadd.f32 %v3263, %v3370
    %v3456 = vadd.f32 %v3264, %v3372
    %v3457 = vadd.f32 %v3265, %v3374
    %v3458 = vadd.f32 %v3266, %v3376
    %v3459 = vadd.f32 %v3267, %v3378
    %v3460 = vadd.f32 %v3268, %v3380
    %v3461 = vadd.f32 %v3269, %v3382
    %v3462 = vadd.f32 %v3270, %v3384
    %v3463 = vadd.f32 %v3271, %v3386
    %v3464 = vadd.f32 %v3272, %v3388
    %v3465 = vadd.f32 %v3273, %v3390
    %v3466 = vadd.f32 %v3274, %v3392
    %v3467 = vadd.f32 %v3275, %v3394
    %v3468 = vadd.f32 %v3276, %v3396
    %v3469 = vadd.f32 %v3277, %v3398
    %v3470 = vadd.f32 %v3278, %v3400
    %v3471 = vadd.f32 %v3279, %v3402
    %v3472 = vadd.f32 %v3280, %v3404
    %v3473 = vadd.f32 %v3281, %v3406
    %v3474 = vadd.f32 %v3282, %v3408
    %v3475 = vadd.f32 %v3283, %v3410
    %v3476 = vadd.f32 %v3284, %v3412
    %3477 = vrot.lane.b32.xlu0 %v2639, 20
    %v3478 = vpop.permute.xlu0 %3477
    %3479 = vrot.lane.b32.xlu0 %v2640, 20
    %v3480 = vpop.permute.xlu0 %3479
    %3481 = vrot.lane.b32.xlu0 %v2641, 20
    %v3482 = vpop.permute.xlu0 %3481
    %3483 = vrot.lane.b32.xlu0 %v2642, 20
    %v3484 = vpop.permute.xlu0 %3483
    %3485 = vrot.lane.b32.xlu0 %v2643, 20
    %v3486 = vpop.permute.xlu0 %3485
    %3487 = vrot.lane.b32.xlu0 %v2644, 20
    %v3488 = vpop.permute.xlu0 %3487
    %3489 = vrot.lane.b32.xlu0 %v2645, 20
    %v3490 = vpop.permute.xlu0 %3489
    %3491 = vrot.lane.b32.xlu0 %v2646, 20
    %v3492 = vpop.permute.xlu0 %3491
    %3493 = vrot.lane.b32.xlu0 %v2647, 20
    %v3494 = vpop.permute.xlu0 %3493
    %3495 = vrot.lane.b32.xlu0 %v2648, 20
    %v3496 = vpop.permute.xlu0 %3495
    %3497 = vrot.lane.b32.xlu0 %v2649, 20
    %v3498 = vpop.permute.xlu0 %3497
    %3499 = vrot.lane.b32.xlu0 %v2650, 20
    %v3500 = vpop.permute.xlu0 %3499
    %3501 = vrot.lane.b32.xlu0 %v2651, 20
    %v3502 = vpop.permute.xlu0 %3501
    %3503 = vrot.lane.b32.xlu0 %v2652, 20
    %v3504 = vpop.permute.xlu0 %3503
    %3505 = vrot.lane.b32.xlu0 %v2653, 20
    %v3506 = vpop.permute.xlu0 %3505
    %3507 = vrot.lane.b32.xlu0 %v2654, 20
    %v3508 = vpop.permute.xlu0 %3507
    %3509 = vrot.lane.b32.xlu0 %v2655, 20
    %v3510 = vpop.permute.xlu0 %3509
    %3511 = vrot.lane.b32.xlu0 %v2656, 20
    %v3512 = vpop.permute.xlu0 %3511
    %3513 = vrot.lane.b32.xlu0 %v2657, 20
    %v3514 = vpop.permute.xlu0 %3513
    %3515 = vrot.lane.b32.xlu0 %v2658, 20
    %v3516 = vpop.permute.xlu0 %3515
    %3517 = vrot.lane.b32.xlu0 %v2659, 20
    %v3518 = vpop.permute.xlu0 %3517
    %3519 = vrot.lane.b32.xlu0 %v2660, 20
    %v3520 = vpop.permute.xlu0 %3519
    %3521 = vrot.lane.b32.xlu0 %v2661, 20
    %v3522 = vpop.permute.xlu0 %3521
    %3523 = vrot.lane.b32.xlu0 %v2662, 20
    %v3524 = vpop.permute.xlu0 %3523
    %3525 = vrot.lane.b32.xlu0 %v2663, 20
    %v3526 = vpop.permute.xlu0 %3525
    %3527 = vrot.lane.b32.xlu0 %v2664, 20
    %v3528 = vpop.permute.xlu0 %3527
    %3529 = vrot.lane.b32.xlu0 %v2665, 20
    %v3530 = vpop.permute.xlu0 %3529
    %3531 = vrot.lane.b32.xlu0 %v2666, 20
    %v3532 = vpop.permute.xlu0 %3531
    %3533 = vrot.lane.b32.xlu0 %v2667, 20
    %v3534 = vpop.permute.xlu0 %3533
    %3535 = vrot.lane.b32.xlu0 %v2668, 20
    %v3536 = vpop.permute.xlu0 %3535
    %3537 = vrot.lane.b32.xlu0 %v2669, 20
    %v3538 = vpop.permute.xlu0 %3537
    %3539 = vrot.lane.b32.xlu0 %v2670, 20
    %v3540 = vpop.permute.xlu0 %3539
    %3541 = vrot.lane.b32.xlu0 %v2675, 20
    %v3542 = vpop.permute.xlu0 %3541
    %3543 = vrot.lane.b32.xlu0 %v2676, 20
    %v3544 = vpop.permute.xlu0 %3543
    %3545 = vrot.lane.b32.xlu0 %v2677, 20
    %v3546 = vpop.permute.xlu0 %3545
    %3547 = vrot.lane.b32.xlu0 %v2678, 20
    %v3548 = vpop.permute.xlu0 %3547
    %3549 = vrot.lane.b32.xlu0 %v2679, 20
    %v3550 = vpop.permute.xlu0 %3549
    %3551 = vrot.lane.b32.xlu0 %v2680, 20
    %v3552 = vpop.permute.xlu0 %3551
    %3553 = vrot.lane.b32.xlu0 %v2681, 20
    %v3554 = vpop.permute.xlu0 %3553
    %3555 = vrot.lane.b32.xlu0 %v2682, 20
    %v3556 = vpop.permute.xlu0 %3555
    %3557 = vrot.lane.b32.xlu0 %v2683, 20
    %v3558 = vpop.permute.xlu0 %3557
    %3559 = vrot.lane.b32.xlu0 %v2684, 20
    %v3560 = vpop.permute.xlu0 %3559
    %3561 = vrot.lane.b32.xlu0 %v2685, 20
    %v3562 = vpop.permute.xlu0 %3561
    %3563 = vrot.lane.b32.xlu0 %v2686, 20
    %v3564 = vpop.permute.xlu0 %3563
    %3565 = vrot.lane.b32.xlu0 %v2687, 20
    %v3566 = vpop.permute.xlu0 %3565
    %3567 = vrot.lane.b32.xlu0 %v2688, 20
    %v3568 = vpop.permute.xlu0 %3567
    %3569 = vrot.lane.b32.xlu0 %v2689, 20
    %v3570 = vpop.permute.xlu0 %3569
    %3571 = vrot.lane.b32.xlu0 %v2690, 20
    %v3572 = vpop.permute.xlu0 %3571
    %3573 = vrot.lane.b32.xlu0 %v2691, 20
    %v3574 = vpop.permute.xlu0 %3573
    %3575 = vrot.lane.b32.xlu0 %v2692, 20
    %v3576 = vpop.permute.xlu0 %3575
    %3577 = vrot.lane.b32.xlu0 %v2693, 20
    %v3578 = vpop.permute.xlu0 %3577
    %3579 = vrot.lane.b32.xlu0 %v2694, 20
    %v3580 = vpop.permute.xlu0 %3579
    %3581 = vrot.lane.b32.xlu0 %v2695, 20
    %v3582 = vpop.permute.xlu0 %3581
    %3583 = vrot.lane.b32.xlu0 %v2696, 20
    %v3584 = vpop.permute.xlu0 %3583
    %3585 = vrot.lane.b32.xlu0 %v2697, 20
    %v3586 = vpop.permute.xlu0 %3585
    %3587 = vrot.lane.b32.xlu0 %v2698, 20
    %v3588 = vpop.permute.xlu0 %3587
    %3589 = vrot.lane.b32.xlu0 %v2699, 20
    %v3590 = vpop.permute.xlu0 %3589
    %3591 = vrot.lane.b32.xlu0 %v2700, 20
    %v3592 = vpop.permute.xlu0 %3591
    %3593 = vrot.lane.b32.xlu0 %v2701, 20
    %v3594 = vpop.permute.xlu0 %3593
    %3595 = vrot.lane.b32.xlu0 %v2702, 20
    %v3596 = vpop.permute.xlu0 %3595
    %3597 = vrot.lane.b32.xlu0 %v2703, 20
    %v3598 = vpop.permute.xlu0 %3597
    %3599 = vrot.lane.b32.xlu0 %v2704, 20
    %v3600 = vpop.permute.xlu0 %3599
    %3601 = vrot.lane.b32.xlu0 %v2705, 20
    %v3602 = vpop.permute.xlu0 %3601
    %3603 = vrot.lane.b32.xlu0 %v2706, 20
    %v3604 = vpop.permute.xlu0 %3603
    %v3605 = vadd.f32 %v3413, %v3478
    %v3606 = vadd.f32 %v3414, %v3480
    %v3607 = vadd.f32 %v3415, %v3482
    %v3608 = vadd.f32 %v3416, %v3484
    %v3609 = vadd.f32 %v3417, %v3486
    %v3610 = vadd.f32 %v3418, %v3488
    %v3611 = vadd.f32 %v3419, %v3490
    %v3612 = vadd.f32 %v3420, %v3492
    %v3613 = vadd.f32 %v3421, %v3494
    %v3614 = vadd.f32 %v3422, %v3496
    %v3615 = vadd.f32 %v3423, %v3498
    %v3616 = vadd.f32 %v3424, %v3500
    %v3617 = vadd.f32 %v3425, %v3502
    %v3618 = vadd.f32 %v3426, %v3504
    %v3619 = vadd.f32 %v3427, %v3506
    %v3620 = vadd.f32 %v3428, %v3508
    %v3621 = vadd.f32 %v3429, %v3510
    %v3622 = vadd.f32 %v3430, %v3512
    %v3623 = vadd.f32 %v3431, %v3514
    %v3624 = vadd.f32 %v3432, %v3516
    %v3625 = vadd.f32 %v3433, %v3518
    %v3626 = vadd.f32 %v3434, %v3520
    %v3627 = vadd.f32 %v3435, %v3522
    %v3628 = vadd.f32 %v3436, %v3524
    %v3629 = vadd.f32 %v3437, %v3526
    %v3630 = vadd.f32 %v3438, %v3528
    %v3631 = vadd.f32 %v3439, %v3530
    %v3632 = vadd.f32 %v3440, %v3532
    %v3633 = vadd.f32 %v3441, %v3534
    %v3634 = vadd.f32 %v3442, %v3536
    %v3635 = vadd.f32 %v3443, %v3538
    %v3636 = vadd.f32 %v3444, %v3540
    %v3637 = vadd.f32 %v3445, %v3542
    %v3638 = vadd.f32 %v3446, %v3544
    %v3639 = vadd.f32 %v3447, %v3546
    %v3640 = vadd.f32 %v3448, %v3548
    %v3641 = vadd.f32 %v3449, %v3550
    %v3642 = vadd.f32 %v3450, %v3552
    %v3643 = vadd.f32 %v3451, %v3554
    %v3644 = vadd.f32 %v3452, %v3556
    %v3645 = vadd.f32 %v3453, %v3558
    %v3646 = vadd.f32 %v3454, %v3560
    %v3647 = vadd.f32 %v3455, %v3562
    %v3648 = vadd.f32 %v3456, %v3564
    %v3649 = vadd.f32 %v3457, %v3566
    %v3650 = vadd.f32 %v3458, %v3568
    %v3651 = vadd.f32 %v3459, %v3570
    %v3652 = vadd.f32 %v3460, %v3572
    %v3653 = vadd.f32 %v3461, %v3574
    %v3654 = vadd.f32 %v3462, %v3576
    %v3655 = vadd.f32 %v3463, %v3578
    %v3656 = vadd.f32 %v3464, %v3580
    %v3657 = vadd.f32 %v3465, %v3582
    %v3658 = vadd.f32 %v3466, %v3584
    %v3659 = vadd.f32 %v3467, %v3586
    %v3660 = vadd.f32 %v3468, %v3588
    %v3661 = vadd.f32 %v3469, %v3590
    %v3662 = vadd.f32 %v3470, %v3592
    %v3663 = vadd.f32 %v3471, %v3594
    %v3664 = vadd.f32 %v3472, %v3596
    %v3665 = vadd.f32 %v3473, %v3598
    %v3666 = vadd.f32 %v3474, %v3600
    %v3667 = vadd.f32 %v3475, %v3602
    %v3668 = vadd.f32 %v3476, %v3604
    %3669 = vrot.lane.b32.xlu0 %v2497, 24
    %v3670 = vpop.permute.xlu0 %3669
    %3671 = vrot.lane.b32.xlu0 %v2498, 24
    %v3672 = vpop.permute.xlu0 %3671
    %3673 = vrot.lane.b32.xlu0 %v2499, 24
    %v3674 = vpop.permute.xlu0 %3673
    %3675 = vrot.lane.b32.xlu0 %v2500, 24
    %v3676 = vpop.permute.xlu0 %3675
    %3677 = vrot.lane.b32.xlu0 %v2501, 24
    %v3678 = vpop.permute.xlu0 %3677
    %3679 = vrot.lane.b32.xlu0 %v2502, 24
    %v3680 = vpop.permute.xlu0 %3679
    %3681 = vrot.lane.b32.xlu0 %v2503, 24
    %v3682 = vpop.permute.xlu0 %3681
    %3683 = vrot.lane.b32.xlu0 %v2504, 24
    %v3684 = vpop.permute.xlu0 %3683
    %3685 = vrot.lane.b32.xlu0 %v2505, 24
    %v3686 = vpop.permute.xlu0 %3685
    %3687 = vrot.lane.b32.xlu0 %v2506, 24
    %v3688 = vpop.permute.xlu0 %3687
    %3689 = vrot.lane.b32.xlu0 %v2507, 24
    %v3690 = vpop.permute.xlu0 %3689
    %3691 = vrot.lane.b32.xlu0 %v2508, 24
    %v3692 = vpop.permute.xlu0 %3691
    %3693 = vrot.lane.b32.xlu0 %v2509, 24
    %v3694 = vpop.permute.xlu0 %3693
    %3695 = vrot.lane.b32.xlu0 %v2510, 24
    %v3696 = vpop.permute.xlu0 %3695
    %3697 = vrot.lane.b32.xlu0 %v2511, 24
    %v3698 = vpop.permute.xlu0 %3697
    %3699 = vrot.lane.b32.xlu0 %v2512, 24
    %v3700 = vpop.permute.xlu0 %3699
    %3701 = vrot.lane.b32.xlu0 %v2513, 24
    %v3702 = vpop.permute.xlu0 %3701
    %3703 = vrot.lane.b32.xlu0 %v2514, 24
    %v3704 = vpop.permute.xlu0 %3703
    %3705 = vrot.lane.b32.xlu0 %v2515, 24
    %v3706 = vpop.permute.xlu0 %3705
    %3707 = vrot.lane.b32.xlu0 %v2516, 24
    %v3708 = vpop.permute.xlu0 %3707
    %3709 = vrot.lane.b32.xlu0 %v2517, 24
    %v3710 = vpop.permute.xlu0 %3709
    %3711 = vrot.lane.b32.xlu0 %v2518, 24
    %v3712 = vpop.permute.xlu0 %3711
    %3713 = vrot.lane.b32.xlu0 %v2519, 24
    %v3714 = vpop.permute.xlu0 %3713
    %3715 = vrot.lane.b32.xlu0 %v2520, 24
    %v3716 = vpop.permute.xlu0 %3715
    %3717 = vrot.lane.b32.xlu0 %v2521, 24
    %v3718 = vpop.permute.xlu0 %3717
    %3719 = vrot.lane.b32.xlu0 %v2522, 24
    %v3720 = vpop.permute.xlu0 %3719
    %3721 = vrot.lane.b32.xlu0 %v2523, 24
    %v3722 = vpop.permute.xlu0 %3721
    %3723 = vrot.lane.b32.xlu0 %v2524, 24
    %v3724 = vpop.permute.xlu0 %3723
    %3725 = vrot.lane.b32.xlu0 %v2525, 24
    %v3726 = vpop.permute.xlu0 %3725
    %3727 = vrot.lane.b32.xlu0 %v2526, 24
    %v3728 = vpop.permute.xlu0 %3727
    %3729 = vrot.lane.b32.xlu0 %v2527, 24
    %v3730 = vpop.permute.xlu0 %3729
    %3731 = vrot.lane.b32.xlu0 %v2528, 24
    %v3732 = vpop.permute.xlu0 %3731
    %3733 = vrot.lane.b32.xlu0 %v2533, 24
    %v3734 = vpop.permute.xlu0 %3733
    %3735 = vrot.lane.b32.xlu0 %v2534, 24
    %v3736 = vpop.permute.xlu0 %3735
    %3737 = vrot.lane.b32.xlu0 %v2535, 24
    %v3738 = vpop.permute.xlu0 %3737
    %3739 = vrot.lane.b32.xlu0 %v2536, 24
    %v3740 = vpop.permute.xlu0 %3739
    %3741 = vrot.lane.b32.xlu0 %v2537, 24
    %v3742 = vpop.permute.xlu0 %3741
    %3743 = vrot.lane.b32.xlu0 %v2538, 24
    %v3744 = vpop.permute.xlu0 %3743
    %3745 = vrot.lane.b32.xlu0 %v2539, 24
    %v3746 = vpop.permute.xlu0 %3745
    %3747 = vrot.lane.b32.xlu0 %v2540, 24
    %v3748 = vpop.permute.xlu0 %3747
    %3749 = vrot.lane.b32.xlu0 %v2541, 24
    %v3750 = vpop.permute.xlu0 %3749
    %3751 = vrot.lane.b32.xlu0 %v2542, 24
    %v3752 = vpop.permute.xlu0 %3751
    %3753 = vrot.lane.b32.xlu0 %v2543, 24
    %v3754 = vpop.permute.xlu0 %3753
    %3755 = vrot.lane.b32.xlu0 %v2544, 24
    %v3756 = vpop.permute.xlu0 %3755
    %3757 = vrot.lane.b32.xlu0 %v2545, 24
    %v3758 = vpop.permute.xlu0 %3757
    %3759 = vrot.lane.b32.xlu0 %v2546, 24
    %v3760 = vpop.permute.xlu0 %3759
    %3761 = vrot.lane.b32.xlu0 %v2547, 24
    %v3762 = vpop.permute.xlu0 %3761
    %3763 = vrot.lane.b32.xlu0 %v2548, 24
    %v3764 = vpop.permute.xlu0 %3763
    %3765 = vrot.lane.b32.xlu0 %v2549, 24
    %v3766 = vpop.permute.xlu0 %3765
    %3767 = vrot.lane.b32.xlu0 %v2550, 24
    %v3768 = vpop.permute.xlu0 %3767
    %3769 = vrot.lane.b32.xlu0 %v2551, 24
    %v3770 = vpop.permute.xlu0 %3769
    %3771 = vrot.lane.b32.xlu0 %v2552, 24
    %v3772 = vpop.permute.xlu0 %3771
    %3773 = vrot.lane.b32.xlu0 %v2553, 24
    %v3774 = vpop.permute.xlu0 %3773
    %3775 = vrot.lane.b32.xlu0 %v2554, 24
    %v3776 = vpop.permute.xlu0 %3775
    %3777 = vrot.lane.b32.xlu0 %v2555, 24
    %v3778 = vpop.permute.xlu0 %3777
    %3779 = vrot.lane.b32.xlu0 %v2556, 24
    %v3780 = vpop.permute.xlu0 %3779
    %3781 = vrot.lane.b32.xlu0 %v2557, 24
    %v3782 = vpop.permute.xlu0 %3781
    %3783 = vrot.lane.b32.xlu0 %v2558, 24
    %v3784 = vpop.permute.xlu0 %3783
    %3785 = vrot.lane.b32.xlu0 %v2559, 24
    %v3786 = vpop.permute.xlu0 %3785
    %3787 = vrot.lane.b32.xlu0 %v2560, 24
    %v3788 = vpop.permute.xlu0 %3787
    %3789 = vrot.lane.b32.xlu0 %v2561, 24
    %v3790 = vpop.permute.xlu0 %3789
    %3791 = vrot.lane.b32.xlu0 %v2562, 24
    %v3792 = vpop.permute.xlu0 %3791
    %3793 = vrot.lane.b32.xlu0 %v2563, 24
    %v3794 = vpop.permute.xlu0 %3793
    %3795 = vrot.lane.b32.xlu0 %v2564, 24
    %v3796 = vpop.permute.xlu0 %3795
    %v3797 = vadd.f32 %v3605, %v3670
    %v3798 = vadd.f32 %v3606, %v3672
    %v3799 = vadd.f32 %v3607, %v3674
    %v3800 = vadd.f32 %v3608, %v3676
    %v3801 = vadd.f32 %v3609, %v3678
    %v3802 = vadd.f32 %v3610, %v3680
    %v3803 = vadd.f32 %v3611, %v3682
    %v3804 = vadd.f32 %v3612, %v3684
    %v3805 = vadd.f32 %v3613, %v3686
    %v3806 = vadd.f32 %v3614, %v3688
    %v3807 = vadd.f32 %v3615, %v3690
    %v3808 = vadd.f32 %v3616, %v3692
    %v3809 = vadd.f32 %v3617, %v3694
    %v3810 = vadd.f32 %v3618, %v3696
    %v3811 = vadd.f32 %v3619, %v3698
    %v3812 = vadd.f32 %v3620, %v3700
    %v3813 = vadd.f32 %v3621, %v3702
    %v3814 = vadd.f32 %v3622, %v3704
    %v3815 = vadd.f32 %v3623, %v3706
    %v3816 = vadd.f32 %v3624, %v3708
    %v3817 = vadd.f32 %v3625, %v3710
    %v3818 = vadd.f32 %v3626, %v3712
    %v3819 = vadd.f32 %v3627, %v3714
    %v3820 = vadd.f32 %v3628, %v3716
    %v3821 = vadd.f32 %v3629, %v3718
    %v3822 = vadd.f32 %v3630, %v3720
    %v3823 = vadd.f32 %v3631, %v3722
    %v3824 = vadd.f32 %v3632, %v3724
    %v3825 = vadd.f32 %v3633, %v3726
    %v3826 = vadd.f32 %v3634, %v3728
    %v3827 = vadd.f32 %v3635, %v3730
    %v3828 = vadd.f32 %v3636, %v3732
    %v3829 = vadd.f32 %v3637, %v3734
    %v3830 = vadd.f32 %v3638, %v3736
    %v3831 = vadd.f32 %v3639, %v3738
    %v3832 = vadd.f32 %v3640, %v3740
    %v3833 = vadd.f32 %v3641, %v3742
    %v3834 = vadd.f32 %v3642, %v3744
    %v3835 = vadd.f32 %v3643, %v3746
    %v3836 = vadd.f32 %v3644, %v3748
    %v3837 = vadd.f32 %v3645, %v3750
    %v3838 = vadd.f32 %v3646, %v3752
    %v3839 = vadd.f32 %v3647, %v3754
    %v3840 = vadd.f32 %v3648, %v3756
    %v3841 = vadd.f32 %v3649, %v3758
    %v3842 = vadd.f32 %v3650, %v3760
    %v3843 = vadd.f32 %v3651, %v3762
    %v3844 = vadd.f32 %v3652, %v3764
    %v3845 = vadd.f32 %v3653, %v3766
    %v3846 = vadd.f32 %v3654, %v3768
    %v3847 = vadd.f32 %v3655, %v3770
    %v3848 = vadd.f32 %v3656, %v3772
    %v3849 = vadd.f32 %v3657, %v3774
    %v3850 = vadd.f32 %v3658, %v3776
    %v3851 = vadd.f32 %v3659, %v3778
    %v3852 = vadd.f32 %v3660, %v3780
    %v3853 = vadd.f32 %v3661, %v3782
    %v3854 = vadd.f32 %v3662, %v3784
    %v3855 = vadd.f32 %v3663, %v3786
    %v3856 = vadd.f32 %v3664, %v3788
    %v3857 = vadd.f32 %v3665, %v3790
    %v3858 = vadd.f32 %v3666, %v3792
    %v3859 = vadd.f32 %v3667, %v3794
    %v3860 = vadd.f32 %v3668, %v3796
    %3861 = vrot.lane.b32.xlu0 %v2569, 28
    %v3862 = vpop.permute.xlu0 %3861
    %3863 = vrot.lane.b32.xlu0 %v2570, 28
    %v3864 = vpop.permute.xlu0 %3863
    %3865 = vrot.lane.b32.xlu0 %v2571, 28
    %v3866 = vpop.permute.xlu0 %3865
    %3867 = vrot.lane.b32.xlu0 %v2572, 28
    %v3868 = vpop.permute.xlu0 %3867
    %3869 = vrot.lane.b32.xlu0 %v2573, 28
    %v3870 = vpop.permute.xlu0 %3869
    %3871 = vrot.lane.b32.xlu0 %v2574, 28
    %v3872 = vpop.permute.xlu0 %3871
    %3873 = vrot.lane.b32.xlu0 %v2575, 28
    %v3874 = vpop.permute.xlu0 %3873
    %3875 = vrot.lane.b32.xlu0 %v2576, 28
    %v3876 = vpop.permute.xlu0 %3875
    %3877 = vrot.lane.b32.xlu0 %v2577, 28
    %v3878 = vpop.permute.xlu0 %3877
    %3879 = vrot.lane.b32.xlu0 %v2578, 28
    %v3880 = vpop.permute.xlu0 %3879
    %3881 = vrot.lane.b32.xlu0 %v2579, 28
    %v3882 = vpop.permute.xlu0 %3881
    %3883 = vrot.lane.b32.xlu0 %v2580, 28
    %v3884 = vpop.permute.xlu0 %3883
    %3885 = vrot.lane.b32.xlu0 %v2581, 28
    %v3886 = vpop.permute.xlu0 %3885
    %3887 = vrot.lane.b32.xlu0 %v2582, 28
    %v3888 = vpop.permute.xlu0 %3887
    %3889 = vrot.lane.b32.xlu0 %v2583, 28
    %v3890 = vpop.permute.xlu0 %3889
    %3891 = vrot.lane.b32.xlu0 %v2584, 28
    %v3892 = vpop.permute.xlu0 %3891
    %3893 = vrot.lane.b32.xlu0 %v2585, 28
    %v3894 = vpop.permute.xlu0 %3893
    %3895 = vrot.lane.b32.xlu0 %v2586, 28
    %v3896 = vpop.permute.xlu0 %3895
    %3897 = vrot.lane.b32.xlu0 %v2587, 28
    %v3898 = vpop.permute.xlu0 %3897
    %3899 = vrot.lane.b32.xlu0 %v2588, 28
    %v3900 = vpop.permute.xlu0 %3899
    %3901 = vrot.lane.b32.xlu0 %v2589, 28
    %v3902 = vpop.permute.xlu0 %3901
    %3903 = vrot.lane.b32.xlu0 %v2590, 28
    %v3904 = vpop.permute.xlu0 %3903
    %3905 = vrot.lane.b32.xlu0 %v2591, 28
    %v3906 = vpop.permute.xlu0 %3905
    %3907 = vrot.lane.b32.xlu0 %v2592, 28
    %v3908 = vpop.permute.xlu0 %3907
    %3909 = vrot.lane.b32.xlu0 %v2593, 28
    %v3910 = vpop.permute.xlu0 %3909
    %3911 = vrot.lane.b32.xlu0 %v2594, 28
    %v3912 = vpop.permute.xlu0 %3911
    %3913 = vrot.lane.b32.xlu0 %v2595, 28
    %v3914 = vpop.permute.xlu0 %3913
    %3915 = vrot.lane.b32.xlu0 %v2596, 28
    %v3916 = vpop.permute.xlu0 %3915
    %3917 = vrot.lane.b32.xlu0 %v2597, 28
    %v3918 = vpop.permute.xlu0 %3917
    %3919 = vrot.lane.b32.xlu0 %v2598, 28
    %v3920 = vpop.permute.xlu0 %3919
    %3921 = vrot.lane.b32.xlu0 %v2599, 28
    %v3922 = vpop.permute.xlu0 %3921
    %3923 = vrot.lane.b32.xlu0 %v2600, 28
    %v3924 = vpop.permute.xlu0 %3923
    %3925 = vrot.lane.b32.xlu0 %v2605, 28
    %v3926 = vpop.permute.xlu0 %3925
    %3927 = vrot.lane.b32.xlu0 %v2606, 28
    %v3928 = vpop.permute.xlu0 %3927
    %3929 = vrot.lane.b32.xlu0 %v2607, 28
    %v3930 = vpop.permute.xlu0 %3929
    %3931 = vrot.lane.b32.xlu0 %v2608, 28
    %v3932 = vpop.permute.xlu0 %3931
    %3933 = vrot.lane.b32.xlu0 %v2609, 28
    %v3934 = vpop.permute.xlu0 %3933
    %3935 = vrot.lane.b32.xlu0 %v2610, 28
    %v3936 = vpop.permute.xlu0 %3935
    %3937 = vrot.lane.b32.xlu0 %v2611, 28
    %v3938 = vpop.permute.xlu0 %3937
    %3939 = vrot.lane.b32.xlu0 %v2612, 28
    %v3940 = vpop.permute.xlu0 %3939
    %3941 = vrot.lane.b32.xlu0 %v2613, 28
    %v3942 = vpop.permute.xlu0 %3941
    %3943 = vrot.lane.b32.xlu0 %v2614, 28
    %v3944 = vpop.permute.xlu0 %3943
    %3945 = vrot.lane.b32.xlu0 %v2615, 28
    %v3946 = vpop.permute.xlu0 %3945
    %3947 = vrot.lane.b32.xlu0 %v2616, 28
    %v3948 = vpop.permute.xlu0 %3947
    %3949 = vrot.lane.b32.xlu0 %v2617, 28
    %v3950 = vpop.permute.xlu0 %3949
    %3951 = vrot.lane.b32.xlu0 %v2618, 28
    %v3952 = vpop.permute.xlu0 %3951
    %3953 = vrot.lane.b32.xlu0 %v2619, 28
    %v3954 = vpop.permute.xlu0 %3953
    %3955 = vrot.lane.b32.xlu0 %v2620, 28
    %v3956 = vpop.permute.xlu0 %3955
    %3957 = vrot.lane.b32.xlu0 %v2621, 28
    %v3958 = vpop.permute.xlu0 %3957
    %3959 = vrot.lane.b32.xlu0 %v2622, 28
    %v3960 = vpop.permute.xlu0 %3959
    %3961 = vrot.lane.b32.xlu0 %v2623, 28
    %v3962 = vpop.permute.xlu0 %3961
    %3963 = vrot.lane.b32.xlu0 %v2624, 28
    %v3964 = vpop.permute.xlu0 %3963
    %3965 = vrot.lane.b32.xlu0 %v2625, 28
    %v3966 = vpop.permute.xlu0 %3965
    %3967 = vrot.lane.b32.xlu0 %v2626, 28
    %v3968 = vpop.permute.xlu0 %3967
    %3969 = vrot.lane.b32.xlu0 %v2627, 28
    %v3970 = vpop.permute.xlu0 %3969
    %3971 = vrot.lane.b32.xlu0 %v2628, 28
    %v3972 = vpop.permute.xlu0 %3971
    %3973 = vrot.lane.b32.xlu0 %v2629, 28
    %v3974 = vpop.permute.xlu0 %3973
    %3975 = vrot.lane.b32.xlu0 %v2630, 28
    %v3976 = vpop.permute.xlu0 %3975
    %3977 = vrot.lane.b32.xlu0 %v2631, 28
    %v3978 = vpop.permute.xlu0 %3977
    %3979 = vrot.lane.b32.xlu0 %v2632, 28
    %v3980 = vpop.permute.xlu0 %3979
    %3981 = vrot.lane.b32.xlu0 %v2633, 28
    %v3982 = vpop.permute.xlu0 %3981
    %3983 = vrot.lane.b32.xlu0 %v2634, 28
    %v3984 = vpop.permute.xlu0 %3983
    %3985 = vrot.lane.b32.xlu0 %v2635, 28
    %v3986 = vpop.permute.xlu0 %3985
    %3987 = vrot.lane.b32.xlu0 %v2636, 28
    %v3988 = vpop.permute.xlu0 %3987
    %v3989 = vadd.f32 %v3797, %v3862
    %v3990 = vadd.f32 %v3798, %v3864
    %v3991 = vadd.f32 %v3799, %v3866
    %v3992 = vadd.f32 %v3800, %v3868
    %v3993 = vadd.f32 %v3801, %v3870
    %v3994 = vadd.f32 %v3802, %v3872
    %v3995 = vadd.f32 %v3803, %v3874
    %v3996 = vadd.f32 %v3804, %v3876
    %v3997 = vadd.f32 %v3805, %v3878
    %v3998 = vadd.f32 %v3806, %v3880
    %v3999 = vadd.f32 %v3807, %v3882
    %v4000 = vadd.f32 %v3808, %v3884
    %v4001 = vadd.f32 %v3809, %v3886
    %v4002 = vadd.f32 %v3810, %v3888
    %v4003 = vadd.f32 %v3811, %v3890
    %v4004 = vadd.f32 %v3812, %v3892
    %v4005 = vadd.f32 %v3813, %v3894
    %v4006 = vadd.f32 %v3814, %v3896
    %v4007 = vadd.f32 %v3815, %v3898
    %v4008 = vadd.f32 %v3816, %v3900
    %v4009 = vadd.f32 %v3817, %v3902
    %v4010 = vadd.f32 %v3818, %v3904
    %v4011 = vadd.f32 %v3819, %v3906
    %v4012 = vadd.f32 %v3820, %v3908
    %v4013 = vadd.f32 %v3821, %v3910
    %v4014 = vadd.f32 %v3822, %v3912
    %v4015 = vadd.f32 %v3823, %v3914
    %v4016 = vadd.f32 %v3824, %v3916
    %v4017 = vadd.f32 %v3825, %v3918
    %v4018 = vadd.f32 %v3826, %v3920
    %v4019 = vadd.f32 %v3827, %v3922
    %v4020 = vadd.f32 %v3828, %v3924
    %v4021 = vadd.f32 %v3829, %v3926
    %v4022 = vadd.f32 %v3830, %v3928
    %v4023 = vadd.f32 %v3831, %v3930
    %v4024 = vadd.f32 %v3832, %v3932
    %v4025 = vadd.f32 %v3833, %v3934
    %v4026 = vadd.f32 %v3834, %v3936
    %v4027 = vadd.f32 %v3835, %v3938
    %v4028 = vadd.f32 %v3836, %v3940
    %v4029 = vadd.f32 %v3837, %v3942
    %v4030 = vadd.f32 %v3838, %v3944
    %v4031 = vadd.f32 %v3839, %v3946
    %v4032 = vadd.f32 %v3840, %v3948
    %v4033 = vadd.f32 %v3841, %v3950
    %v4034 = vadd.f32 %v3842, %v3952
    %v4035 = vadd.f32 %v3843, %v3954
    %v4036 = vadd.f32 %v3844, %v3956
    %v4037 = vadd.f32 %v3845, %v3958
    %v4038 = vadd.f32 %v3846, %v3960
    %v4039 = vadd.f32 %v3847, %v3962
    %v4040 = vadd.f32 %v3848, %v3964
    %v4041 = vadd.f32 %v3849, %v3966
    %v4042 = vadd.f32 %v3850, %v3968
    %v4043 = vadd.f32 %v3851, %v3970
    %v4044 = vadd.f32 %v3852, %v3972
    %v4045 = vadd.f32 %v3853, %v3974
    %v4046 = vadd.f32 %v3854, %v3976
    %v4047 = vadd.f32 %v3855, %v3978
    %v4048 = vadd.f32 %v3856, %v3980
    %v4049 = vadd.f32 %v3857, %v3982
    %v4050 = vadd.f32 %v3858, %v3984
    %v4051 = vadd.f32 %v3859, %v3986
    %v4052 = vadd.f32 %v3860, %v3988
    %4053 = vrot.lane.b32.xlu0 %v2641, 32
    %v4054 = vpop.permute.xlu0 %4053
    %4055 = vrot.lane.b32.xlu0 %v2642, 32
    %v4056 = vpop.permute.xlu0 %4055
    %4057 = vrot.lane.b32.xlu0 %v2643, 32
    %v4058 = vpop.permute.xlu0 %4057
    %4059 = vrot.lane.b32.xlu0 %v2644, 32
    %v4060 = vpop.permute.xlu0 %4059
    %4061 = vrot.lane.b32.xlu0 %v2645, 32
    %v4062 = vpop.permute.xlu0 %4061
    %4063 = vrot.lane.b32.xlu0 %v2646, 32
    %v4064 = vpop.permute.xlu0 %4063
    %4065 = vrot.lane.b32.xlu0 %v2647, 32
    %v4066 = vpop.permute.xlu0 %4065
    %4067 = vrot.lane.b32.xlu0 %v2648, 32
    %v4068 = vpop.permute.xlu0 %4067
    %4069 = vrot.lane.b32.xlu0 %v2649, 32
    %v4070 = vpop.permute.xlu0 %4069
    %4071 = vrot.lane.b32.xlu0 %v2650, 32
    %v4072 = vpop.permute.xlu0 %4071
    %4073 = vrot.lane.b32.xlu0 %v2651, 32
    %v4074 = vpop.permute.xlu0 %4073
    %4075 = vrot.lane.b32.xlu0 %v2652, 32
    %v4076 = vpop.permute.xlu0 %4075
    %4077 = vrot.lane.b32.xlu0 %v2653, 32
    %v4078 = vpop.permute.xlu0 %4077
    %4079 = vrot.lane.b32.xlu0 %v2654, 32
    %v4080 = vpop.permute.xlu0 %4079
    %4081 = vrot.lane.b32.xlu0 %v2655, 32
    %v4082 = vpop.permute.xlu0 %4081
    %4083 = vrot.lane.b32.xlu0 %v2656, 32
    %v4084 = vpop.permute.xlu0 %4083
    %4085 = vrot.lane.b32.xlu0 %v2657, 32
    %v4086 = vpop.permute.xlu0 %4085
    %4087 = vrot.lane.b32.xlu0 %v2658, 32
    %v4088 = vpop.permute.xlu0 %4087
    %4089 = vrot.lane.b32.xlu0 %v2659, 32
    %v4090 = vpop.permute.xlu0 %4089
    %4091 = vrot.lane.b32.xlu0 %v2660, 32
    %v4092 = vpop.permute.xlu0 %4091
    %4093 = vrot.lane.b32.xlu0 %v2661, 32
    %v4094 = vpop.permute.xlu0 %4093
    %4095 = vrot.lane.b32.xlu0 %v2662, 32
    %v4096 = vpop.permute.xlu0 %4095
    %4097 = vrot.lane.b32.xlu0 %v2663, 32
    %v4098 = vpop.permute.xlu0 %4097
    %4099 = vrot.lane.b32.xlu0 %v2664, 32
    %v4100 = vpop.permute.xlu0 %4099
    %4101 = vrot.lane.b32.xlu0 %v2665, 32
    %v4102 = vpop.permute.xlu0 %4101
    %4103 = vrot.lane.b32.xlu0 %v2666, 32
    %v4104 = vpop.permute.xlu0 %4103
    %4105 = vrot.lane.b32.xlu0 %v2667, 32
    %v4106 = vpop.permute.xlu0 %4105
    %4107 = vrot.lane.b32.xlu0 %v2668, 32
    %v4108 = vpop.permute.xlu0 %4107
    %4109 = vrot.lane.b32.xlu0 %v2669, 32
    %v4110 = vpop.permute.xlu0 %4109
    %4111 = vrot.lane.b32.xlu0 %v2670, 32
    %v4112 = vpop.permute.xlu0 %4111
    %4113 = vrot.lane.b32.xlu0 %v2671, 32
    %v4114 = vpop.permute.xlu0 %4113
    %4115 = vrot.lane.b32.xlu0 %v2672, 32
    %v4116 = vpop.permute.xlu0 %4115
    %4117 = vrot.lane.b32.xlu0 %v2677, 32
    %v4118 = vpop.permute.xlu0 %4117
    %4119 = vrot.lane.b32.xlu0 %v2678, 32
    %v4120 = vpop.permute.xlu0 %4119
    %4121 = vrot.lane.b32.xlu0 %v2679, 32
    %v4122 = vpop.permute.xlu0 %4121
    %4123 = vrot.lane.b32.xlu0 %v2680, 32
    %v4124 = vpop.permute.xlu0 %4123
    %4125 = vrot.lane.b32.xlu0 %v2681, 32
    %v4126 = vpop.permute.xlu0 %4125
    %4127 = vrot.lane.b32.xlu0 %v2682, 32
    %v4128 = vpop.permute.xlu0 %4127
    %4129 = vrot.lane.b32.xlu0 %v2683, 32
    %v4130 = vpop.permute.xlu0 %4129
    %4131 = vrot.lane.b32.xlu0 %v2684, 32
    %v4132 = vpop.permute.xlu0 %4131
    %4133 = vrot.lane.b32.xlu0 %v2685, 32
    %v4134 = vpop.permute.xlu0 %4133
    %4135 = vrot.lane.b32.xlu0 %v2686, 32
    %v4136 = vpop.permute.xlu0 %4135
    %4137 = vrot.lane.b32.xlu0 %v2687, 32
    %v4138 = vpop.permute.xlu0 %4137
    %4139 = vrot.lane.b32.xlu0 %v2688, 32
    %v4140 = vpop.permute.xlu0 %4139
    %4141 = vrot.lane.b32.xlu0 %v2689, 32
    %v4142 = vpop.permute.xlu0 %4141
    %4143 = vrot.lane.b32.xlu0 %v2690, 32
    %v4144 = vpop.permute.xlu0 %4143
    %4145 = vrot.lane.b32.xlu0 %v2691, 32
    %v4146 = vpop.permute.xlu0 %4145
    %4147 = vrot.lane.b32.xlu0 %v2692, 32
    %v4148 = vpop.permute.xlu0 %4147
    %4149 = vrot.lane.b32.xlu0 %v2693, 32
    %v4150 = vpop.permute.xlu0 %4149
    %4151 = vrot.lane.b32.xlu0 %v2694, 32
    %v4152 = vpop.permute.xlu0 %4151
    %4153 = vrot.lane.b32.xlu0 %v2695, 32
    %v4154 = vpop.permute.xlu0 %4153
    %4155 = vrot.lane.b32.xlu0 %v2696, 32
    %v4156 = vpop.permute.xlu0 %4155
    %4157 = vrot.lane.b32.xlu0 %v2697, 32
    %v4158 = vpop.permute.xlu0 %4157
    %4159 = vrot.lane.b32.xlu0 %v2698, 32
    %v4160 = vpop.permute.xlu0 %4159
    %4161 = vrot.lane.b32.xlu0 %v2699, 32
    %v4162 = vpop.permute.xlu0 %4161
    %4163 = vrot.lane.b32.xlu0 %v2700, 32
    %v4164 = vpop.permute.xlu0 %4163
    %4165 = vrot.lane.b32.xlu0 %v2701, 32
    %v4166 = vpop.permute.xlu0 %4165
    %4167 = vrot.lane.b32.xlu0 %v2702, 32
    %v4168 = vpop.permute.xlu0 %4167
    %4169 = vrot.lane.b32.xlu0 %v2703, 32
    %v4170 = vpop.permute.xlu0 %4169
    %4171 = vrot.lane.b32.xlu0 %v2704, 32
    %v4172 = vpop.permute.xlu0 %4171
    %4173 = vrot.lane.b32.xlu0 %v2705, 32
    %v4174 = vpop.permute.xlu0 %4173
    %4175 = vrot.lane.b32.xlu0 %v2706, 32
    %v4176 = vpop.permute.xlu0 %4175
    %4177 = vrot.lane.b32.xlu0 %v2707, 32
    %v4178 = vpop.permute.xlu0 %4177
    %4179 = vrot.lane.b32.xlu0 %v2708, 32
    %v4180 = vpop.permute.xlu0 %4179
    %v4181 = vadd.f32 %v3989, %v4054
    %v4182 = vadd.f32 %v3990, %v4056
    %v4183 = vadd.f32 %v3991, %v4058
    %v4184 = vadd.f32 %v3992, %v4060
    %v4185 = vadd.f32 %v3993, %v4062
    %v4186 = vadd.f32 %v3994, %v4064
    %v4187 = vadd.f32 %v3995, %v4066
    %v4188 = vadd.f32 %v3996, %v4068
    %v4189 = vadd.f32 %v3997, %v4070
    %v4190 = vadd.f32 %v3998, %v4072
    %v4191 = vadd.f32 %v3999, %v4074
    %v4192 = vadd.f32 %v4000, %v4076
    %v4193 = vadd.f32 %v4001, %v4078
    %v4194 = vadd.f32 %v4002, %v4080
    %v4195 = vadd.f32 %v4003, %v4082
    %v4196 = vadd.f32 %v4004, %v4084
    %v4197 = vadd.f32 %v4005, %v4086
    %v4198 = vadd.f32 %v4006, %v4088
    %v4199 = vadd.f32 %v4007, %v4090
    %v4200 = vadd.f32 %v4008, %v4092
    %v4201 = vadd.f32 %v4009, %v4094
    %v4202 = vadd.f32 %v4010, %v4096
    %v4203 = vadd.f32 %v4011, %v4098
    %v4204 = vadd.f32 %v4012, %v4100
    %v4205 = vadd.f32 %v4013, %v4102
    %v4206 = vadd.f32 %v4014, %v4104
    %v4207 = vadd.f32 %v4015, %v4106
    %v4208 = vadd.f32 %v4016, %v4108
    %v4209 = vadd.f32 %v4017, %v4110
    %v4210 = vadd.f32 %v4018, %v4112
    %v4211 = vadd.f32 %v4019, %v4114
    %v4212 = vadd.f32 %v4020, %v4116
    %v4213 = vadd.f32 %v4021, %v4118
    %v4214 = vadd.f32 %v4022, %v4120
    %v4215 = vadd.f32 %v4023, %v4122
    %v4216 = vadd.f32 %v4024, %v4124
    %v4217 = vadd.f32 %v4025, %v4126
    %v4218 = vadd.f32 %v4026, %v4128
    %v4219 = vadd.f32 %v4027, %v4130
    %v4220 = vadd.f32 %v4028, %v4132
    %v4221 = vadd.f32 %v4029, %v4134
    %v4222 = vadd.f32 %v4030, %v4136
    %v4223 = vadd.f32 %v4031, %v4138
    %v4224 = vadd.f32 %v4032, %v4140
    %v4225 = vadd.f32 %v4033, %v4142
    %v4226 = vadd.f32 %v4034, %v4144
    %v4227 = vadd.f32 %v4035, %v4146
    %v4228 = vadd.f32 %v4036, %v4148
    %v4229 = vadd.f32 %v4037, %v4150
    %v4230 = vadd.f32 %v4038, %v4152
    %v4231 = vadd.f32 %v4039, %v4154
    %v4232 = vadd.f32 %v4040, %v4156
    %v4233 = vadd.f32 %v4041, %v4158
    %v4234 = vadd.f32 %v4042, %v4160
    %v4235 = vadd.f32 %v4043, %v4162
    %v4236 = vadd.f32 %v4044, %v4164
    %v4237 = vadd.f32 %v4045, %v4166
    %v4238 = vadd.f32 %v4046, %v4168
    %v4239 = vadd.f32 %v4047, %v4170
    %v4240 = vadd.f32 %v4048, %v4172
    %v4241 = vadd.f32 %v4049, %v4174
    %v4242 = vadd.f32 %v4050, %v4176
    %v4243 = vadd.f32 %v4051, %v4178
    %v4244 = vadd.f32 %v4052, %v4180
    %v4245 = vld [vmem:[#allocation8] sm:$0xff]
    %v4246 = vld [vmem:[#allocation8 + $0x8] sm:$0xff]
    %v4247 = vld [vmem:[#allocation8 + $0x10] sm:$0xff]
    %v4248 = vld [vmem:[#allocation8 + $0x18] sm:$0xff]
    %v4249 = vld [vmem:[#allocation8 + $0x20] sm:$0xff]
    %v4250 = vld [vmem:[#allocation8 + $0x28] sm:$0xff]
    %v4251 = vld [vmem:[#allocation8 + $0x30] sm:$0xff]
    %v4252 = vld [vmem:[#allocation8 + $0x38] sm:$0xff]
    %v4253 = vld [vmem:[#allocation8 + $0x40] sm:$0xff]
    %v4254 = vld [vmem:[#allocation8 + $0x48] sm:$0xff]
    %v4255 = vld [vmem:[#allocation8 + $0x50] sm:$0xff]
    %v4256 = vld [vmem:[#allocation8 + $0x58] sm:$0xff]
    %v4257 = vld [vmem:[#allocation8 + $0x60] sm:$0xff]
    %v4258 = vld [vmem:[#allocation8 + $0x68] sm:$0xff]
    %v4259 = vld [vmem:[#allocation8 + $0x70] sm:$0xff]
    %v4260 = vld [vmem:[#allocation8 + $0x78] sm:$0xff]
    %v4261 = vld [vmem:[%s4] sm:$0x1]
    %v4263 = vlaneseq
    %v4264 = vshrl.u32 %v4263, 7
    %v4265 = vsub.s32 0, %v4264
    %v4266 = vrot.slane %v4261, %v4265
    %4268 = vmatprep.subr.mxu0 0.0
    %4269 = vmatpush1.msra.mxu0 %v4260
    %4270 = vmatprep.subr.mxu0 0.0
    %4271 = vmatpush1.msra.mxu0 %v4259
    %4272 = vmatprep.subr.mxu0 0.0
    %4273 = vmatpush1.msra.mxu0 %v4258
    %4274 = vmatprep.subr.mxu0 0.0
    %4275 = vmatpush1.msra.mxu0 %v4257
    %4276 = vmatprep.subr.mxu0 0.0
    %4277 = vmatpush1.msra.mxu0 %v4256
    %4278 = vmatprep.subr.mxu0 0.0
    %4279 = vmatpush1.msra.mxu0 %v4255
    %4280 = vmatprep.subr.mxu0 0.0
    %4281 = vmatpush1.msra.mxu0 %v4254
    %4282 = vmatprep.subr.mxu0 0.0
    %4283 = vmatpush1.msra.mxu0 %v4253
    %4284 = vmatprep.subr.mxu0 0.0
    %4285 = vmatpush1.msra.mxu0 %v4252
    %4286 = vmatprep.subr.mxu0 0.0
    %4287 = vmatpush1.msra.mxu0 %v4251
    %4288 = vmatprep.subr.mxu0 0.0
    %4289 = vmatpush1.msra.mxu0 %v4250
    %4290 = vmatprep.subr.mxu0 0.0
    %4291 = vmatpush1.msra.mxu0 %v4249
    %4292 = vmatprep.subr.mxu0 0.0
    %4293 = vmatpush1.msra.mxu0 %v4248
    %4294 = vmatprep.subr.mxu0 0.0
    %4295 = vmatpush1.msra.mxu0 %v4247
    %4296 = vmatprep.subr.mxu0 0.0
    %4297 = vmatpush1.msra.mxu0 %v4246
    %4298 = vmatprep.subr.mxu0 0.0
    %4299 = vmatpush1.msra.mxu0 %v4245
    %4300 = vmatprep.subr.mxu0 0.0
    %4301 = vmatpush2.msra.mxu0 0.0
    %4302 = vmatprep.subr.mxu0 0.0
    %4303 = vmatpush2.msra.mxu0 0.0
    %4304 = vmatprep.subr.mxu0 0.0
    %4305 = vmatpush2.msra.mxu0 0.0
    %4306 = vmatprep.subr.mxu0 0.0
    %4307 = vmatpush2.msra.mxu0 0.0
    %4308 = vmatprep.subr.mxu0 0.0
    %4309 = vmatpush2.msra.mxu0 0.0
    %4310 = vmatprep.subr.mxu0 0.0
    %4311 = vmatpush2.msra.mxu0 0.0
    %4312 = vmatprep.subr.mxu0 0.0
    %4313 = vmatpush2.msra.mxu0 0.0
    %4314 = vmatprep.subr.mxu0 0.0
    %4315 = vmatpush2.msra.mxu0 0.0
    %4316 = vmatprep.subr.mxu0 0.0
    %4317 = vmatpush2.msra.mxu0 0.0
    %4318 = vmatprep.subr.mxu0 0.0
    %4319 = vmatpush2.msra.mxu0 0.0
    %4320 = vmatprep.subr.mxu0 0.0
    %4321 = vmatpush2.msra.mxu0 0.0
    %4322 = vmatprep.subr.mxu0 0.0
    %4323 = vmatpush2.msra.mxu0 0.0
    %4324 = vmatprep.subr.mxu0 0.0
    %4325 = vmatpush2.msra.mxu0 0.0
    %4326 = vmatprep.subr.mxu0 0.0
    %4327 = vmatpush2.msra.mxu0 0.0
    %4328 = vmatprep.subr.mxu0 0.0
    %4329 = vmatpush2.msra.mxu0 0.0
    %4330 = vmatprep.subr.mxu0 0.0
    %4331 = vmatpush2.msra.mxu0 0.0
    %4332 = vmatprep.mubr.f32.mxu0 0.0
    %4333 = vmatmul.mubr.f32.gmra.mxu0 %v4181
    %v4334 = vpop.f32.mrf.mxu0
    %v4335 = vadd.f32 %v4266, %v4334
    %v4336 = vpop.f32.mrf.mxu0
    %4337 = vmatprep.mubr.f32.mxu0 0.0
    %4338 = vmatmul.mubr.f32.gmra.mxu0 %v4182
    %v4339 = vpop.f32.mrf.mxu0
    %v4340 = vadd.f32 %v4266, %v4339
    %v4341 = vpop.f32.mrf.mxu0
    %4342 = vmatprep.mubr.f32.mxu0 0.0
    %4343 = vmatmul.mubr.f32.gmra.mxu0 %v4183
    %v4344 = vpop.f32.mrf.mxu0
    %v4345 = vadd.f32 %v4266, %v4344
    %v4346 = vpop.f32.mrf.mxu0
    %4347 = vmatprep.mubr.f32.mxu0 0.0
    %4348 = vmatmul.mubr.f32.gmra.mxu0 %v4184
    %v4349 = vpop.f32.mrf.mxu0
    %v4350 = vadd.f32 %v4266, %v4349
    %v4351 = vpop.f32.mrf.mxu0
    %4352 = vmatprep.mubr.f32.mxu0 0.0
    %4353 = vmatmul.mubr.f32.gmra.mxu0 %v4185
    %v4354 = vpop.f32.mrf.mxu0
    %v4355 = vadd.f32 %v4266, %v4354
    %v4356 = vpop.f32.mrf.mxu0
    %4357 = vmatprep.mubr.f32.mxu0 0.0
    %4358 = vmatmul.mubr.f32.gmra.mxu0 %v4186
    %v4359 = vpop.f32.mrf.mxu0
    %v4360 = vadd.f32 %v4266, %v4359
    %v4361 = vpop.f32.mrf.mxu0
    %4362 = vmatprep.mubr.f32.mxu0 0.0
    %4363 = vmatmul.mubr.f32.gmra.mxu0 %v4187
    %v4364 = vpop.f32.mrf.mxu0
    %v4365 = vadd.f32 %v4266, %v4364
    %v4366 = vpop.f32.mrf.mxu0
    %4367 = vmatprep.mubr.f32.mxu0 0.0
    %4368 = vmatmul.mubr.f32.gmra.mxu0 %v4188
    %v4369 = vpop.f32.mrf.mxu0
    %v4370 = vadd.f32 %v4266, %v4369
    %v4371 = vpop.f32.mrf.mxu0
    %4372 = vmatprep.mubr.f32.mxu0 0.0
    %4373 = vmatmul.mubr.f32.gmra.mxu0 %v4189
    %v4374 = vpop.f32.mrf.mxu0
    %v4375 = vadd.f32 %v4266, %v4374
    %v4376 = vpop.f32.mrf.mxu0
    %4377 = vmatprep.mubr.f32.mxu0 0.0
    %4378 = vmatmul.mubr.f32.gmra.mxu0 %v4190
    %v4379 = vpop.f32.mrf.mxu0
    %v4380 = vadd.f32 %v4266, %v4379
    %v4381 = vpop.f32.mrf.mxu0
    %4382 = vmatprep.mubr.f32.mxu0 0.0
    %4383 = vmatmul.mubr.f32.gmra.mxu0 %v4191
    %v4384 = vpop.f32.mrf.mxu0
    %v4385 = vadd.f32 %v4266, %v4384
    %v4386 = vpop.f32.mrf.mxu0
    %4387 = vmatprep.mubr.f32.mxu0 0.0
    %4388 = vmatmul.mubr.f32.gmra.mxu0 %v4192
    %v4389 = vpop.f32.mrf.mxu0
    %v4390 = vadd.f32 %v4266, %v4389
    %v4391 = vpop.f32.mrf.mxu0
    %4392 = vmatprep.mubr.f32.mxu0 0.0
    %4393 = vmatmul.mubr.f32.gmra.mxu0 %v4193
    %v4394 = vpop.f32.mrf.mxu0
    %v4395 = vadd.f32 %v4266, %v4394
    %v4396 = vpop.f32.mrf.mxu0
    %4397 = vmatprep.mubr.f32.mxu0 0.0
    %4398 = vmatmul.mubr.f32.gmra.mxu0 %v4194
    %v4399 = vpop.f32.mrf.mxu0
    %v4400 = vadd.f32 %v4266, %v4399
    %v4401 = vpop.f32.mrf.mxu0
    %4402 = vmatprep.mubr.f32.mxu0 0.0
    %4403 = vmatmul.mubr.f32.gmra.mxu0 %v4195
    %v4404 = vpop.f32.mrf.mxu0
    %v4405 = vadd.f32 %v4266, %v4404
    %v4406 = vpop.f32.mrf.mxu0
    %4407 = vmatprep.mubr.f32.mxu0 0.0
    %4408 = vmatmul.mubr.f32.gmra.mxu0 %v4196
    %v4409 = vpop.f32.mrf.mxu0
    %v4410 = vadd.f32 %v4266, %v4409
    %v4411 = vpop.f32.mrf.mxu0
    %4412 = vmatprep.mubr.f32.mxu0 0.0
    %4413 = vmatmul.mubr.f32.gmra.mxu0 %v4197
    %v4414 = vpop.f32.mrf.mxu0
    %v4415 = vadd.f32 %v4266, %v4414
    %v4416 = vpop.f32.mrf.mxu0
    %4417 = vmatprep.mubr.f32.mxu0 0.0
    %4418 = vmatmul.mubr.f32.gmra.mxu0 %v4198
    %v4419 = vpop.f32.mrf.mxu0
    %v4420 = vadd.f32 %v4266, %v4419
    %v4421 = vpop.f32.mrf.mxu0
    %4422 = vmatprep.mubr.f32.mxu0 0.0
    %4423 = vmatmul.mubr.f32.gmra.mxu0 %v4199
    %v4424 = vpop.f32.mrf.mxu0
    %v4425 = vadd.f32 %v4266, %v4424
    %v4426 = vpop.f32.mrf.mxu0
    %4427 = vmatprep.mubr.f32.mxu0 0.0
    %4428 = vmatmul.mubr.f32.gmra.mxu0 %v4200
    %v4429 = vpop.f32.mrf.mxu0
    %v4430 = vadd.f32 %v4266, %v4429
    %v4431 = vpop.f32.mrf.mxu0
    %4432 = vmatprep.mubr.f32.mxu0 0.0
    %4433 = vmatmul.mubr.f32.gmra.mxu0 %v4201
    %v4434 = vpop.f32.mrf.mxu0
    %v4435 = vadd.f32 %v4266, %v4434
    %v4436 = vpop.f32.mrf.mxu0
    %4437 = vmatprep.mubr.f32.mxu0 0.0
    %4438 = vmatmul.mubr.f32.gmra.mxu0 %v4202
    %v4439 = vpop.f32.mrf.mxu0
    %v4440 = vadd.f32 %v4266, %v4439
    %v4441 = vpop.f32.mrf.mxu0
    %4442 = vmatprep.mubr.f32.mxu0 0.0
    %4443 = vmatmul.mubr.f32.gmra.mxu0 %v4203
    %v4444 = vpop.f32.mrf.mxu0
    %v4445 = vadd.f32 %v4266, %v4444
    %v4446 = vpop.f32.mrf.mxu0
    %4447 = vmatprep.mubr.f32.mxu0 0.0
    %4448 = vmatmul.mubr.f32.gmra.mxu0 %v4204
    %v4449 = vpop.f32.mrf.mxu0
    %v4450 = vadd.f32 %v4266, %v4449
    %v4451 = vpop.f32.mrf.mxu0
    %4452 = vmatprep.mubr.f32.mxu0 0.0
    %4453 = vmatmul.mubr.f32.gmra.mxu0 %v4205
    %v4454 = vpop.f32.mrf.mxu0
    %v4455 = vadd.f32 %v4266, %v4454
    %v4456 = vpop.f32.mrf.mxu0
    %4457 = vmatprep.mubr.f32.mxu0 0.0
    %4458 = vmatmul.mubr.f32.gmra.mxu0 %v4206
    %v4459 = vpop.f32.mrf.mxu0
    %v4460 = vadd.f32 %v4266, %v4459
    %v4461 = vpop.f32.mrf.mxu0
    %4462 = vmatprep.mubr.f32.mxu0 0.0
    %4463 = vmatmul.mubr.f32.gmra.mxu0 %v4207
    %v4464 = vpop.f32.mrf.mxu0
    %v4465 = vadd.f32 %v4266, %v4464
    %v4466 = vpop.f32.mrf.mxu0
    %4467 = vmatprep.mubr.f32.mxu0 0.0
    %4468 = vmatmul.mubr.f32.gmra.mxu0 %v4208
    %v4469 = vpop.f32.mrf.mxu0
    %v4470 = vadd.f32 %v4266, %v4469
    %v4471 = vpop.f32.mrf.mxu0
    %4472 = vmatprep.mubr.f32.mxu0 0.0
    %4473 = vmatmul.mubr.f32.gmra.mxu0 %v4209
    %v4474 = vpop.f32.mrf.mxu0
    %v4475 = vadd.f32 %v4266, %v4474
    %v4476 = vpop.f32.mrf.mxu0
    %4477 = vmatprep.mubr.f32.mxu0 0.0
    %4478 = vmatmul.mubr.f32.gmra.mxu0 %v4210
    %v4479 = vpop.f32.mrf.mxu0
    %v4480 = vadd.f32 %v4266, %v4479
    %v4481 = vpop.f32.mrf.mxu0
    %4482 = vmatprep.mubr.f32.mxu0 0.0
    %4483 = vmatmul.mubr.f32.gmra.mxu0 %v4211
    %v4484 = vpop.f32.mrf.mxu0
    %v4485 = vadd.f32 %v4266, %v4484
    %v4486 = vpop.f32.mrf.mxu0
    %4487 = vmatprep.mubr.f32.mxu0 0.0
    %4488 = vmatmul.mubr.f32.gmra.mxu0 %v4212
    %v4489 = vpop.f32.mrf.mxu0
    %v4490 = vadd.f32 %v4266, %v4489
    %v4491 = vpop.f32.mrf.mxu0
    %4492 = vmatprep.mubr.f32.mxu0 0.0
    %4493 = vmatmul.mubr.f32.gmra.mxu0 %v4213
    %v4494 = vpop.f32.mrf.mxu0
    %v4495 = vadd.f32 %v4266, %v4494
    %v4496 = vpop.f32.mrf.mxu0
    %4497 = vmatprep.mubr.f32.mxu0 0.0
    %4498 = vmatmul.mubr.f32.gmra.mxu0 %v4214
    %v4499 = vpop.f32.mrf.mxu0
    %v4500 = vadd.f32 %v4266, %v4499
    %v4501 = vpop.f32.mrf.mxu0
    %4502 = vmatprep.mubr.f32.mxu0 0.0
    %4503 = vmatmul.mubr.f32.gmra.mxu0 %v4215
    %v4504 = vpop.f32.mrf.mxu0
    %v4505 = vadd.f32 %v4266, %v4504
    %v4506 = vpop.f32.mrf.mxu0
    %4507 = vmatprep.mubr.f32.mxu0 0.0
    %4508 = vmatmul.mubr.f32.gmra.mxu0 %v4216
    %v4509 = vpop.f32.mrf.mxu0
    %v4510 = vadd.f32 %v4266, %v4509
    %v4511 = vpop.f32.mrf.mxu0
    %4512 = vmatprep.mubr.f32.mxu0 0.0
    %4513 = vmatmul.mubr.f32.gmra.mxu0 %v4217
    %v4514 = vpop.f32.mrf.mxu0
    %v4515 = vadd.f32 %v4266, %v4514
    %v4516 = vpop.f32.mrf.mxu0
    %4517 = vmatprep.mubr.f32.mxu0 0.0
    %4518 = vmatmul.mubr.f32.gmra.mxu0 %v4218
    %v4519 = vpop.f32.mrf.mxu0
    %v4520 = vadd.f32 %v4266, %v4519
    %v4521 = vpop.f32.mrf.mxu0
    %4522 = vmatprep.mubr.f32.mxu0 0.0
    %4523 = vmatmul.mubr.f32.gmra.mxu0 %v4219
    %v4524 = vpop.f32.mrf.mxu0
    %v4525 = vadd.f32 %v4266, %v4524
    %v4526 = vpop.f32.mrf.mxu0
    %4527 = vmatprep.mubr.f32.mxu0 0.0
    %4528 = vmatmul.mubr.f32.gmra.mxu0 %v4220
    %v4529 = vpop.f32.mrf.mxu0
    %v4530 = vadd.f32 %v4266, %v4529
    %v4531 = vpop.f32.mrf.mxu0
    %4532 = vmatprep.mubr.f32.mxu0 0.0
    %4533 = vmatmul.mubr.f32.gmra.mxu0 %v4221
    %v4534 = vpop.f32.mrf.mxu0
    %v4535 = vadd.f32 %v4266, %v4534
    %v4536 = vpop.f32.mrf.mxu0
    %4537 = vmatprep.mubr.f32.mxu0 0.0
    %4538 = vmatmul.mubr.f32.gmra.mxu0 %v4222
    %v4539 = vpop.f32.mrf.mxu0
    %v4540 = vadd.f32 %v4266, %v4539
    %v4541 = vpop.f32.mrf.mxu0
    %4542 = vmatprep.mubr.f32.mxu0 0.0
    %4543 = vmatmul.mubr.f32.gmra.mxu0 %v4223
    %v4544 = vpop.f32.mrf.mxu0
    %v4545 = vadd.f32 %v4266, %v4544
    %v4546 = vpop.f32.mrf.mxu0
    %4547 = vmatprep.mubr.f32.mxu0 0.0
    %4548 = vmatmul.mubr.f32.gmra.mxu0 %v4224
    %v4549 = vpop.f32.mrf.mxu0
    %v4550 = vadd.f32 %v4266, %v4549
    %v4551 = vpop.f32.mrf.mxu0
    %4552 = vmatprep.mubr.f32.mxu0 0.0
    %4553 = vmatmul.mubr.f32.gmra.mxu0 %v4225
    %v4554 = vpop.f32.mrf.mxu0
    %v4555 = vadd.f32 %v4266, %v4554
    %v4556 = vpop.f32.mrf.mxu0
    %4557 = vmatprep.mubr.f32.mxu0 0.0
    %4558 = vmatmul.mubr.f32.gmra.mxu0 %v4226
    %v4559 = vpop.f32.mrf.mxu0
    %v4560 = vadd.f32 %v4266, %v4559
    %v4561 = vpop.f32.mrf.mxu0
    %4562 = vmatprep.mubr.f32.mxu0 0.0
    %4563 = vmatmul.mubr.f32.gmra.mxu0 %v4227
    %v4564 = vpop.f32.mrf.mxu0
    %v4565 = vadd.f32 %v4266, %v4564
    %v4566 = vpop.f32.mrf.mxu0
    %4567 = vmatprep.mubr.f32.mxu0 0.0
    %4568 = vmatmul.mubr.f32.gmra.mxu0 %v4228
    %v4569 = vpop.f32.mrf.mxu0
    %v4570 = vadd.f32 %v4266, %v4569
    %v4571 = vpop.f32.mrf.mxu0
    %4572 = vmatprep.mubr.f32.mxu0 0.0
    %4573 = vmatmul.mubr.f32.gmra.mxu0 %v4229
    %v4574 = vpop.f32.mrf.mxu0
    %v4575 = vadd.f32 %v4266, %v4574
    %v4576 = vpop.f32.mrf.mxu0
    %4577 = vmatprep.mubr.f32.mxu0 0.0
    %4578 = vmatmul.mubr.f32.gmra.mxu0 %v4230
    %v4579 = vpop.f32.mrf.mxu0
    %v4580 = vadd.f32 %v4266, %v4579
    %v4581 = vpop.f32.mrf.mxu0
    %4582 = vmatprep.mubr.f32.mxu0 0.0
    %4583 = vmatmul.mubr.f32.gmra.mxu0 %v4231
    %v4584 = vpop.f32.mrf.mxu0
    %v4585 = vadd.f32 %v4266, %v4584
    %v4586 = vpop.f32.mrf.mxu0
    %4587 = vmatprep.mubr.f32.mxu0 0.0
    %4588 = vmatmul.mubr.f32.gmra.mxu0 %v4232
    %v4589 = vpop.f32.mrf.mxu0
    %v4590 = vadd.f32 %v4266, %v4589
    %v4591 = vpop.f32.mrf.mxu0
    %4592 = vmatprep.mubr.f32.mxu0 0.0
    %4593 = vmatmul.mubr.f32.gmra.mxu0 %v4233
    %v4594 = vpop.f32.mrf.mxu0
    %v4595 = vadd.f32 %v4266, %v4594
    %v4596 = vpop.f32.mrf.mxu0
    %4597 = vmatprep.mubr.f32.mxu0 0.0
    %4598 = vmatmul.mubr.f32.gmra.mxu0 %v4234
    %v4599 = vpop.f32.mrf.mxu0
    %v4600 = vadd.f32 %v4266, %v4599
    %v4601 = vpop.f32.mrf.mxu0
    %4602 = vmatprep.mubr.f32.mxu0 0.0
    %4603 = vmatmul.mubr.f32.gmra.mxu0 %v4235
    %v4604 = vpop.f32.mrf.mxu0
    %v4605 = vadd.f32 %v4266, %v4604
    %v4606 = vpop.f32.mrf.mxu0
    %4607 = vmatprep.mubr.f32.mxu0 0.0
    %4608 = vmatmul.mubr.f32.gmra.mxu0 %v4236
    %v4609 = vpop.f32.mrf.mxu0
    %v4610 = vadd.f32 %v4266, %v4609
    %v4611 = vpop.f32.mrf.mxu0
    %4612 = vmatprep.mubr.f32.mxu0 0.0
    %4613 = vmatmul.mubr.f32.gmra.mxu0 %v4237
    %v4614 = vpop.f32.mrf.mxu0
    %v4615 = vadd.f32 %v4266, %v4614
    %v4616 = vpop.f32.mrf.mxu0
    %4617 = vmatprep.mubr.f32.mxu0 0.0
    %4618 = vmatmul.mubr.f32.gmra.mxu0 %v4238
    %v4619 = vpop.f32.mrf.mxu0
    %v4620 = vadd.f32 %v4266, %v4619
    %v4621 = vpop.f32.mrf.mxu0
    %4622 = vmatprep.mubr.f32.mxu0 0.0
    %4623 = vmatmul.mubr.f32.gmra.mxu0 %v4239
    %v4624 = vpop.f32.mrf.mxu0
    %v4625 = vadd.f32 %v4266, %v4624
    %v4626 = vpop.f32.mrf.mxu0
    %4627 = vmatprep.mubr.f32.mxu0 0.0
    %4628 = vmatmul.mubr.f32.gmra.mxu0 %v4240
    %v4629 = vpop.f32.mrf.mxu0
    %v4630 = vadd.f32 %v4266, %v4629
    %v4631 = vpop.f32.mrf.mxu0
    %4632 = vmatprep.mubr.f32.mxu0 0.0
    %4633 = vmatmul.mubr.f32.gmra.mxu0 %v4241
    %v4634 = vpop.f32.mrf.mxu0
    %v4635 = vadd.f32 %v4266, %v4634
    %v4636 = vpop.f32.mrf.mxu0
    %4637 = vmatprep.mubr.f32.mxu0 0.0
    %4638 = vmatmul.mubr.f32.gmra.mxu0 %v4242
    %v4639 = vpop.f32.mrf.mxu0
    %v4640 = vadd.f32 %v4266, %v4639
    %v4641 = vpop.f32.mrf.mxu0
    %4642 = vmatprep.mubr.f32.mxu0 0.0
    %4643 = vmatmul.mubr.f32.gmra.mxu0 %v4243
    %v4644 = vpop.f32.mrf.mxu0
    %v4645 = vadd.f32 %v4266, %v4644
    %v4646 = vpop.f32.mrf.mxu0
    %4647 = vmatprep.mubr.f32.mxu0 0.0
    %4648 = vmatmul.mubr.f32.gmra.mxu0 %v4244
    %v4649 = vpop.f32.mrf.mxu0
    %v4650 = vadd.f32 %v4266, %v4649
    %v4651 = vpop.f32.mrf.mxu0
    %4652 = vdwg.mxu0
    %v4653 = vadd.f32 %v4335, %v2429
    %v4654 = vadd.f32 %v4340, %v2430
    %v4655 = vadd.f32 %v4345, %v2431
    %v4656 = vadd.f32 %v4350, %v2432
    %v4657 = vadd.f32 %v4355, %v2433
    %v4658 = vadd.f32 %v4360, %v2434
    %v4659 = vadd.f32 %v4365, %v2435
    %v4660 = vadd.f32 %v4370, %v2436
    %v4661 = vadd.f32 %v4375, %v2437
    %v4662 = vadd.f32 %v4380, %v2438
    %v4663 = vadd.f32 %v4385, %v2439
    %v4664 = vadd.f32 %v4390, %v2440
    %v4665 = vadd.f32 %v4395, %v2441
    %v4666 = vadd.f32 %v4400, %v2442
    %v4667 = vadd.f32 %v4405, %v2443
    %v4668 = vadd.f32 %v4410, %v2444
    %v4669 = vadd.f32 %v4415, %v2445
    %v4670 = vadd.f32 %v4420, %v2446
    %v4671 = vadd.f32 %v4425, %v2447
    %v4672 = vadd.f32 %v4430, %v2448
    %v4673 = vadd.f32 %v4435, %v2449
    %v4674 = vadd.f32 %v4440, %v2450
    %v4675 = vadd.f32 %v4445, %v2451
    %v4676 = vadd.f32 %v4450, %v2452
    %v4677 = vadd.f32 %v4455, %v2453
    %v4678 = vadd.f32 %v4460, %v2454
    %v4679 = vadd.f32 %v4465, %v2455
    %v4680 = vadd.f32 %v4470, %v2456
    %v4681 = vadd.f32 %v4475, %v2457
    %v4682 = vadd.f32 %v4480, %v2458
    %v4683 = vadd.f32 %v4485, %v2459
    %v4684 = vadd.f32 %v4490, %v2460
    %v4685 = vadd.f32 %v4495, %v2461
    %v4686 = vadd.f32 %v4500, %v2462
    %v4687 = vadd.f32 %v4505, %v2463
    %v4688 = vadd.f32 %v4510, %v2464
    %v4689 = vadd.f32 %v4515, %v2465
    %v4690 = vadd.f32 %v4520, %v2466
    %v4691 = vadd.f32 %v4525, %v2467
    %v4692 = vadd.f32 %v4530, %v2468
    %v4693 = vadd.f32 %v4535, %v2469
    %v4694 = vadd.f32 %v4540, %v2470
    %v4695 = vadd.f32 %v4545, %v2471
    %v4696 = vadd.f32 %v4550, %v2472
    %v4697 = vadd.f32 %v4555, %v2473
    %v4698 = vadd.f32 %v4560, %v2474
    %v4699 = vadd.f32 %v4565, %v2475
    %v4700 = vadd.f32 %v4570, %v2476
    %v4701 = vadd.f32 %v4575, %v2477
    %v4702 = vadd.f32 %v4580, %v2478
    %v4703 = vadd.f32 %v4585, %v2479
    %v4704 = vadd.f32 %v4590, %v2480
    %v4705 = vadd.f32 %v4595, %v2481
    %v4706 = vadd.f32 %v4600, %v2482
    %v4707 = vadd.f32 %v4605, %v2483
    %v4708 = vadd.f32 %v4610, %v2484
    %v4709 = vadd.f32 %v4615, %v2485
    %v4710 = vadd.f32 %v4620, %v2486
    %v4711 = vadd.f32 %v4625, %v2487
    %v4712 = vadd.f32 %v4630, %v2488
    %v4713 = vadd.f32 %v4635, %v2489
    %v4714 = vadd.f32 %v4640, %v2490
    %v4715 = vadd.f32 %v4645, %v2491
    %v4716 = vadd.f32 %v4650, %v2492
    %v4717 = vmax.f32 %v4653, 0.0
    %v4718 = vmax.f32 %v4654, 0.0
    %v4719 = vmax.f32 %v4655, 0.0
    %v4720 = vmax.f32 %v4656, 0.0
    %v4721 = vmax.f32 %v4657, 0.0
    %v4722 = vmax.f32 %v4658, 0.0
    %v4723 = vmax.f32 %v4659, 0.0
    %v4724 = vmax.f32 %v4660, 0.0
    %v4725 = vmax.f32 %v4661, 0.0
    %v4726 = vmax.f32 %v4662, 0.0
    %v4727 = vmax.f32 %v4663, 0.0
    %v4728 = vmax.f32 %v4664, 0.0
    %v4729 = vmax.f32 %v4665, 0.0
    %v4730 = vmax.f32 %v4666, 0.0
    %v4731 = vmax.f32 %v4667, 0.0
    %v4732 = vmax.f32 %v4668, 0.0
    %v4733 = vmax.f32 %v4669, 0.0
    %v4734 = vmax.f32 %v4670, 0.0
    %v4735 = vmax.f32 %v4671, 0.0
    %v4736 = vmax.f32 %v4672, 0.0
    %v4737 = vmax.f32 %v4673, 0.0
    %v4738 = vmax.f32 %v4674, 0.0
    %v4739 = vmax.f32 %v4675, 0.0
    %v4740 = vmax.f32 %v4676, 0.0
    %v4741 = vmax.f32 %v4677, 0.0
    %v4742 = vmax.f32 %v4678, 0.0
    %v4743 = vmax.f32 %v4679, 0.0
    %v4744 = vmax.f32 %v4680, 0.0
    %v4745 = vmax.f32 %v4681, 0.0
    %v4746 = vmax.f32 %v4682, 0.0
    %v4747 = vmax.f32 %v4683, 0.0
    %v4748 = vmax.f32 %v4684, 0.0
    %v4749 = vmax.f32 %v4685, 0.0
    %v4750 = vmax.f32 %v4686, 0.0
    %v4751 = vmax.f32 %v4687, 0.0
    %v4752 = vmax.f32 %v4688, 0.0
    %v4753 = vmax.f32 %v4689, 0.0
    %v4754 = vmax.f32 %v4690, 0.0
    %v4755 = vmax.f32 %v4691, 0.0
    %v4756 = vmax.f32 %v4692, 0.0
    %v4757 = vmax.f32 %v4693, 0.0
    %v4758 = vmax.f32 %v4694, 0.0
    %v4759 = vmax.f32 %v4695, 0.0
    %v4760 = vmax.f32 %v4696, 0.0
    %v4761 = vmax.f32 %v4697, 0.0
    %v4762 = vmax.f32 %v4698, 0.0
    %v4763 = vmax.f32 %v4699, 0.0
    %v4764 = vmax.f32 %v4700, 0.0
    %v4765 = vmax.f32 %v4701, 0.0
    %v4766 = vmax.f32 %v4702, 0.0
    %v4767 = vmax.f32 %v4703, 0.0
    %v4768 = vmax.f32 %v4704, 0.0
    %v4769 = vmax.f32 %v4705, 0.0
    %v4770 = vmax.f32 %v4706, 0.0
    %v4771 = vmax.f32 %v4707, 0.0
    %v4772 = vmax.f32 %v4708, 0.0
    %v4773 = vmax.f32 %v4709, 0.0
    %v4774 = vmax.f32 %v4710, 0.0
    %v4775 = vmax.f32 %v4711, 0.0
    %v4776 = vmax.f32 %v4712, 0.0
    %v4777 = vmax.f32 %v4713, 0.0
    %v4778 = vmax.f32 %v4714, 0.0
    %v4779 = vmax.f32 %v4715, 0.0
    %v4780 = vmax.f32 %v4716, 0.0
    %4781 = vst [vmem:[#allocation9] sm:$0xff] %v4717
    %4782 = vst [vmem:[#allocation9 + $0x8] sm:$0xff] %v4718
    %4783 = vst [vmem:[#allocation9 + $0x10] sm:$0xff] %v4719
    %4784 = vst [vmem:[#allocation9 + $0x18] sm:$0xff] %v4720
    %4785 = vst [vmem:[#allocation9 + $0x20] sm:$0xff] %v4721
    %4786 = vst [vmem:[#allocation9 + $0x28] sm:$0xff] %v4722
    %4787 = vst [vmem:[#allocation9 + $0x30] sm:$0xff] %v4723
    %4788 = vst [vmem:[#allocation9 + $0x38] sm:$0xff] %v4724
    %4789 = vst [vmem:[#allocation9 + $0x40] sm:$0xff] %v4725
    %4790 = vst [vmem:[#allocation9 + $0x48] sm:$0xff] %v4726
    %4791 = vst [vmem:[#allocation9 + $0x50] sm:$0xff] %v4727
    %4792 = vst [vmem:[#allocation9 + $0x58] sm:$0xff] %v4728
    %4793 = vst [vmem:[#allocation9 + $0x60] sm:$0xff] %v4729
    %4794 = vst [vmem:[#allocation9 + $0x68] sm:$0xff] %v4730
    %4795 = vst [vmem:[#allocation9 + $0x70] sm:$0xff] %v4731
    %4796 = vst [vmem:[#allocation9 + $0x78] sm:$0xff] %v4732
    %4797 = vst [vmem:[#allocation9 + $0x80] sm:$0xff] %v4733
    %4798 = vst [vmem:[#allocation9 + $0x88] sm:$0xff] %v4734
    %4799 = vst [vmem:[#allocation9 + $0x90] sm:$0xff] %v4735
    %4800 = vst [vmem:[#allocation9 + $0x98] sm:$0xff] %v4736
    %4801 = vst [vmem:[#allocation9 + $0xa0] sm:$0xff] %v4737
    %4802 = vst [vmem:[#allocation9 + $0xa8] sm:$0xff] %v4738
    %4803 = vst [vmem:[#allocation9 + $0xb0] sm:$0xff] %v4739
    %4804 = vst [vmem:[#allocation9 + $0xb8] sm:$0xff] %v4740
    %4805 = vst [vmem:[#allocation9 + $0xc0] sm:$0xff] %v4741
    %4806 = vst [vmem:[#allocation9 + $0xc8] sm:$0xff] %v4742
    %4807 = vst [vmem:[#allocation9 + $0xd0] sm:$0xff] %v4743
    %4808 = vst [vmem:[#allocation9 + $0xd8] sm:$0xff] %v4744
    %4809 = vst [vmem:[#allocation9 + $0xe0] sm:$0xff] %v4745
    %4810 = vst [vmem:[#allocation9 + $0xe8] sm:$0xff] %v4746
    %4811 = vst [vmem:[#allocation9 + $0xf0] sm:$0xff] %v4747
    %4812 = vst [vmem:[#allocation9 + $0xf8] sm:$0xff] %v4748
    %4813 = vst [vmem:[#allocation9 + $0x100] sm:$0xff] %v4749
    %4814 = vst [vmem:[#allocation9 + $0x108] sm:$0xff] %v4750
    %4815 = vst [vmem:[#allocation9 + $0x110] sm:$0xff] %v4751
    %4816 = vst [vmem:[#allocation9 + $0x118] sm:$0xff] %v4752
    %4817 = vst [vmem:[#allocation9 + $0x120] sm:$0xff] %v4753
    %4818 = vst [vmem:[#allocation9 + $0x128] sm:$0xff] %v4754
    %4819 = vst [vmem:[#allocation9 + $0x130] sm:$0xff] %v4755
    %4820 = vst [vmem:[#allocation9 + $0x138] sm:$0xff] %v4756
    %4821 = vst [vmem:[#allocation9 + $0x140] sm:$0xff] %v4757
    %4822 = vst [vmem:[#allocation9 + $0x148] sm:$0xff] %v4758
    %4823 = vst [vmem:[#allocation9 + $0x150] sm:$0xff] %v4759
    %4824 = vst [vmem:[#allocation9 + $0x158] sm:$0xff] %v4760
    %4825 = vst [vmem:[#allocation9 + $0x160] sm:$0xff] %v4761
    %4826 = vst [vmem:[#allocation9 + $0x168] sm:$0xff] %v4762
    %4827 = vst [vmem:[#allocation9 + $0x170] sm:$0xff] %v4763
    %4828 = vst [vmem:[#allocation9 + $0x178] sm:$0xff] %v4764
    %4829 = vst [vmem:[#allocation9 + $0x180] sm:$0xff] %v4765
    %4830 = vst [vmem:[#allocation9 + $0x188] sm:$0xff] %v4766
    %4831 = vst [vmem:[#allocation9 + $0x190] sm:$0xff] %v4767
    %4832 = vst [vmem:[#allocation9 + $0x198] sm:$0xff] %v4768
    %4833 = vst [vmem:[#allocation9 + $0x1a0] sm:$0xff] %v4769
    %4834 = vst [vmem:[#allocation9 + $0x1a8] sm:$0xff] %v4770
    %4835 = vst [vmem:[#allocation9 + $0x1b0] sm:$0xff] %v4771
    %4836 = vst [vmem:[#allocation9 + $0x1b8] sm:$0xff] %v4772
    %4837 = vst [vmem:[#allocation9 + $0x1c0] sm:$0xff] %v4773
    %4838 = vst [vmem:[#allocation9 + $0x1c8] sm:$0xff] %v4774
    %4839 = vst [vmem:[#allocation9 + $0x1d0] sm:$0xff] %v4775
    %4840 = vst [vmem:[#allocation9 + $0x1d8] sm:$0xff] %v4776
    %4841 = vst [vmem:[#allocation9 + $0x1e0] sm:$0xff] %v4777
    %4842 = vst [vmem:[#allocation9 + $0x1e8] sm:$0xff] %v4778
    %4843 = vst [vmem:[#allocation9 + $0x1f0] sm:$0xff] %v4779
    %4844 = vst [vmem:[#allocation9 + $0x1f8] sm:$0xff] %v4780
    // Predicated region
    $region34: #{tpu_custom_call.1} parent=1 // pred_check
      _
    $region35: #{tpu_custom_call.1} parent=1 // pred_check_branch
      %4846 = sbr.rel (0) target = $region37
    $region36: #{tpu_custom_call.1} parent=1 // pred_region
      %s4848 = ssub.s32 8192, 8192
      %4849 = vsyncadd [#allocation5], %s4848
      %s4850 = sshll.u32 [#allocation9], 4
      %s4851 = int_to_ptr.vmem [resolvable:$true] %s4850
      %4856 = dma.vmem_to_hbm [thread:$0]  %s4851, 8192, %s5, [#allocation5], 128, 128, 8
    $region37: #{tpu_custom_call.1} parent=1 // pred_fallthru
      _
    // Predicated region
    $region38: #{tpu_custom_call.1} parent=1 // pred_check
      _
    $region39: #{tpu_custom_call.1} parent=1 // pred_check_branch
      %4858 = sbr.rel (0) target = $region41
    $region40: #{tpu_custom_call.1} parent=1 // pred_region
      %4859 = dma.done [#allocation5], 8192
    $region41: #{tpu_custom_call.1} parent=1 // pred_fallthru
      _
    %4860 = vsyncpa [#allocation4], 1
    %4861 = vsyncpa [#allocation7], 1
    %4862 = vsyncpa [#allocation5], 1

</llo_original>
